<compile_context>
chip_gen: v5e
topology: v5e:2x2
jax: 0.10.0
libtpu: 0.0.40
codegen_flags: <defaults>
</compile_context>

<pallas_src>
from functools import partial

import jax
import jax.numpy as jnp
from jax import lax
from jax.experimental import pallas as pl
from jax.experimental.pallas import tpu as pltpu


# Sublane-aligned interior column offset inside the halo scratch.
# bf16 native tile is (16, 128) so 16 keeps the interior store fully aligned.
_OFF = 16


def _bottleneck_kernel(H, W, x_ref, w1_ref, w2_ref, w3_ref,
                       b1_ref, b2_ref, b3_ref, o_ref, hp_ref, acc_ref):
    # x_ref:   (1, H*W, Cin_p)    bf16
    # w1_ref:  (Cin_p, P_p)       bf16  (BN1 scale folded in)
    # w2_ref:  (3, 3*P_p, P_p)    bf16  (BN2 scale folded in; [dy] -> (dx,cin)-major rows)
    # w3_ref:  (P_p, Cout_p)      bf16  (BN3 scale folded in)
    # b*_ref:  (1, C)             f32
    # o_ref:   (1, H*W, Cout_p)   bf16
    # hp_ref:  (H+2, W_pad, P_p)  bf16 scratch: zero-halo conv2 input, interior at col _OFF
    # acc_ref: (H*W, P_p)         f32 scratch: conv2 accumulator
    P_p = w1_ref.shape[1]
    OFF = _OFF

    # ---- conv1 (1x1) + bias + relu ---------------------------------------
    h = jnp.dot(x_ref[0], w1_ref[...], preferred_element_type=jnp.float32)
    h = jnp.maximum(h + b1_ref[...], 0.0)                        # (HW, P_p) f32

    # ---- stage conv2 input into zero-haloed, sublane-aligned scratch -----
    # Re-zero the 4 thin halo strips every step (scratch is not guaranteed
    # zero-init; cost is negligible; robust when the batch axis is split
    # across TensorCores).
    zrow = jnp.zeros((1, W + 2, P_p), hp_ref.dtype)
    zcol = jnp.zeros((H + 2, 1, P_p), hp_ref.dtype)
    hp_ref[0:1, OFF - 1:OFF + W + 1, :] = zrow
    hp_ref[H + 1:H + 2, OFF - 1:OFF + W + 1, :] = zrow
    hp_ref[:, OFF - 1:OFF, :] = zcol
    hp_ref[:, OFF + W:OFF + W + 1, :] = zcol
    # Interior store starts at a sublane-aligned column -> unmasked vst.
    hp_ref[1:H + 1, OFF:OFF + W, :] = h.reshape(H, W, P_p).astype(hp_ref.dtype)

    # ---- conv2 (3x3, stride=1, pad=1): 3 dy-band matmuls, K = 3*P_p --------
    for dy in range(3):
        band = hp_ref[dy:dy + H, OFF - 1:OFF + W + 1, :]          # (H, W+2, P_p) bf16
        patches = jnp.concatenate(
            [band[:, dx:dx + W, :] for dx in range(3)], axis=-1
        ).reshape(H * W, 3 * P_p)                                  # (HW, 3*P_p) bf16
        contrib = jnp.dot(patches, w2_ref[dy],
                          preferred_element_type=jnp.float32)      # (HW, P_p) f32
        if dy == 0:
            acc_ref[...] = contrib
        else:
            acc_ref[...] += contrib

    h2 = jnp.maximum(acc_ref[...] + b2_ref[...], 0.0)              # (HW, P_p) f32

    # ---- conv3 (1x1) + bias ------------------------------------------------
    h3 = jnp.dot(h2.astype(jnp.bfloat16), w3_ref[...],
                 preferred_element_type=jnp.float32)
    h3 = h3 + b3_ref[...]                                          # (HW, Cout_p) f32

    # ---- identity residual + relu (f32 math), bf16 lane-dense store ---------
    o_ref[0] = jnp.maximum(h3 + x_ref[0].astype(jnp.float32), 0.0).astype(o_ref.dtype)


def _round_up(n, m):
    return ((n + m - 1) // m) * m


def _pad_to(a, shape):
    widths = [(0, t - s) for s, t in zip(a.shape, shape)]
    if all(w == (0, 0) for w in widths):
        return a
    return jnp.pad(a, widths)


def _vmem_limit_bytes(H, W, W_pad, Cin_p, P_p, Cout_p):
    """Per-generation VMEM limit: per-step estimate with headroom, clamped to
    3/4 of the physical per-core VMEM (falls back to 64 MiB = v7x)."""
    hw = H * W
    est = (2 * hw * Cin_p * 2                                     # x block, double-buffered, bf16
           + 2 * hw * Cout_p * 2                                  # out block, double-buffered, bf16
           + 2 * (Cin_p * P_p + 9 * P_p * P_p + P_p * Cout_p) * 2  # weights (buffered)
           + (H + 2) * W_pad * P_p * 2                            # halo scratch (bf16)
           + hw * P_p * 4                                         # conv2 accumulator (f32)
           + hw * 3 * P_p * 2                                     # one dy-band patches slab
           + hw * P_p * 4                                         # h / h2 intermediates
           + hw * Cout_p * 4)                                     # h3 intermediate
    cap = 64 * 1024 * 1024
    try:
        cap = int(pltpu.get_tpu_info().vmem_capacity_bytes)
    except Exception:
        pass
    want = max(32 * 1024 * 1024, int(1.5 * est))
    return int(min(want, (3 * cap) // 4))


def bottleneck_pallas_nhwc(x_nhwc, w1, w2, w3, s1, b1, s2, b2, s3, b3, *, lane=128):
    """NHWC entry point (preferred: keep the model NHWC / bf16 end-to-end).

    x_nhwc: (N, H, W, Cin); w1:(Cin,P) w2:(3,3,P,P) HWIO w3:(P,Cout);
    s*/b* folded BN scale/bias, shape (1,C) or (C,). Returns (N,H,W,Cout) bf16.
    """
    N, H, W, Cin = x_nhwc.shape
    P = w1.shape[1]
    Cout = w3.shape[1]
    assert Cin == Cout, (
        "identity residual requires inplanes == 4*planes (downsample=None); "
        "got Cin=%d Cout=%d" % (Cin, Cout))

    Cin_p = _round_up(Cin, lane)
    P_p = _round_up(P, lane)
    Cout_p = _round_up(Cout, lane)
    W_pad = _round_up(_OFF + W + 1, 16)

    f32 = jnp.float32
    bf16 = jnp.bfloat16

    # Fold BN scale into conv weights (one-time, wrapper side), pad channel
    # dims to lane-dense multiples of 128, cast to bf16 for the MXU.
    w1f = _pad_to(w1.astype(f32) * s1.reshape(1, P), (Cin_p, P_p)).astype(bf16)
    w2f = _pad_to(w2.astype(f32) * s2.reshape(1, 1, 1, P), (3, 3, P_p, P_p))
    w2f = w2f.reshape(3, 3 * P_p, P_p).astype(bf16)   # [dy] -> (dx, cin)-major rows
    w3f = _pad_to(w3.astype(f32) * s3.reshape(1, Cout), (P_p, Cout_p)).astype(bf16)
    b1p = _pad_to(b1.reshape(1, P).astype(f32), (1, P_p))
    b2p = _pad_to(b2.reshape(1, P).astype(f32), (1, P_p))
    b3p = _pad_to(b3.reshape(1, Cout).astype(f32), (1, Cout_p))

    # Cast to bf16 BEFORE padding: halves the XLA-side padded-copy HBM traffic.
    x2d = _pad_to(x_nhwc.astype(bf16), (N, H, W, Cin_p)).reshape(N, H * W, Cin_p)

    def full(a):
        nd = a.ndim
        return pl.BlockSpec(a.shape, lambda n, _nd=nd: (0,) * _nd)

    out2d = pl.pallas_call(
        partial(_bottleneck_kernel, H, W),
        out_shape=jax.ShapeDtypeStruct((N, H * W, Cout_p), bf16),
        grid_spec=pltpu.PrefetchScalarGridSpec(
            num_scalar_prefetch=0,
            grid=(N,),
            in_specs=[
                pl.BlockSpec((1, H * W, Cin_p), lambda n: (n, 0, 0)),
                full(w1f), full(w2f), full(w3f),
                full(b1p), full(b2p), full(b3p),
            ],
            out_specs=pl.BlockSpec((1, H * W, Cout_p), lambda n: (n, 0, 0)),
            scratch_shapes=[
                pltpu.VMEM((H + 2, W_pad, P_p), bf16),        # zero-halo conv2 input
                pltpu.VMEM((H * W, P_p), jnp.float32),        # conv2 f32 accumulator
            ],
        ),
        compiler_params=pltpu.CompilerParams(
            dimension_semantics=("parallel",),
            vmem_limit_bytes=_vmem_limit_bytes(H, W, W_pad, Cin_p, P_p, Cout_p)),
    )(x2d, w1f, w2f, w3f, b1p, b2p, b3p)

    return out2d[:, :, :Cout].reshape(N, H, W, Cout)


def bottleneck_pallas(x_nchw, w1, w2, w3, s1, b1, s2, b2, s3, b3):
    """PyTorch-style NCHW adapter (returns bf16). In a real model keep
    activations NHWC/bf16 end-to-end and call bottleneck_pallas_nhwc directly
    (avoids two full HBM transposes per block)."""
    x_nhwc = jnp.transpose(x_nchw, (0, 2, 3, 1))
    out = bottleneck_pallas_nhwc(x_nhwc, w1, w2, w3, s1, b1, s2, b2, s3, b3)
    return jnp.transpose(out, (0, 3, 1, 2))


def bottleneck_ref(x_nchw, w1, w2, w3, s1, b1, s2, b2, s3, b3):
    """Pure-JAX f32 reference (lax.conv) matching the PyTorch module in eval mode."""
    x = jnp.transpose(x_nchw, (0, 2, 3, 1)).astype(jnp.float32)
    dn = ('NHWC', 'HWIO', 'NHWC')
    Cin, P = w1.shape
    Cout = w3.shape[1]
    h = lax.conv_general_dilated(x, w1.reshape(1, 1, Cin, P), (1, 1), 'VALID',
                                 dimension_numbers=dn)
    h = jnp.maximum(h * s1 + b1, 0.0)
    h = lax.conv_general_dilated(h, w2, (1, 1), 'SAME', dimension_numbers=dn)
    h = jnp.maximum(h * s2 + b2, 0.0)
    h = lax.conv_general_dilated(h, w3.reshape(1, 1, P, Cout), (1, 1), 'VALID',
                                 dimension_numbers=dn)
    h = h * s3 + b3
    out = jnp.maximum(h + x, 0.0)
    return jnp.transpose(out, (0, 3, 1, 2))


def fold_bn(gamma, beta, mean, var, eps=1e-5):
    scale = gamma / jnp.sqrt(var + eps)
    bias = beta - mean * scale
    return scale.reshape(1, -1), bias.reshape(1, -1)


if __name__ == "__main__":
    # Small, module-consistent shapes: identity residual requires inplanes == 4*planes.
    N, H, W = 2, 16, 16
    planes = 4
    inplanes = planes * 4          # 16
    Cout = planes * 4              # 16

    key = jax.random.PRNGKey(0)
    ks = jax.random.split(key, 8)

    x = jax.random.normal(ks[0], (N, inplanes, H, W), jnp.float32)

    # Conv weights (stored directly in matmul / HWIO layouts).
    w1 = 0.1 * jax.random.normal(ks[1], (inplanes, planes), jnp.float32)
    w2 = 0.1 * jax.random.normal(ks[2], (3, 3, planes, planes), jnp.float32)
    w3 = 0.1 * jax.random.normal(ks[3], (planes, Cout), jnp.float32)

    # BatchNorm params (eval mode): gamma, beta, running_mean, running_var.
    def bn_params(k, c):
        k1, k2, k3, k4 = jax.random.split(k, 4)
        gamma = 1.0 + 0.1 * jax.random.normal(k1, (c,), jnp.float32)
        beta = 0.1 * jax.random.normal(k2, (c,), jnp.float32)
        mean = 0.1 * jax.random.normal(k3, (c,), jnp.float32)
        var = jnp.abs(1.0 + 0.1 * jax.random.normal(k4, (c,), jnp.float32))
        return fold_bn(gamma, beta, mean, var)

    s1, b1 = bn_params(ks[4], planes)
    s2, b2 = bn_params(ks[5], planes)
    s3, b3 = bn_params(ks[6], Cout)

    out = bottleneck_pallas(x, w1, w2, w3, s1, b1, s2, b2, s3, b3)
    out = jax.block_until_ready(out)

    ref = bottleneck_ref(x, w1, w2, w3, s1, b1, s2, b2, s3, b3)
    assert out.shape == (N, Cout, H, W), out.shape
    outf = out.astype(jnp.float32)
    max_diff = float(jnp.max(jnp.abs(outf - ref)))
    # bf16 matmuls + bf16 output/residual slab (f32 accumulation) vs f32 reference.
    assert jnp.allclose(outf, ref, atol=5e-2, rtol=5e-2), max_diff

    print("KERNEL_OK")
</pallas_src>

<mosaic_0001>
module attributes {stable_mosaic.version = 11 : i64} {
  func.func @_bottleneck_kernel(%arg0: i32, %arg1: memref<1x256x128xbf16, #tpu.memory_space<vmem>>, %arg2: memref<128x128xbf16, #tpu.memory_space<vmem>>, %arg3: memref<3x384x128xbf16, #tpu.memory_space<vmem>>, %arg4: memref<128x128xbf16, #tpu.memory_space<vmem>>, %arg5: memref<1x128xf32, #tpu.memory_space<vmem>>, %arg6: memref<1x128xf32, #tpu.memory_space<vmem>>, %arg7: memref<1x128xf32, #tpu.memory_space<vmem>>, %arg8: memref<1x256x128xbf16, #tpu.memory_space<vmem>>, %arg9: memref<18x48x128xbf16, #tpu.memory_space<vmem>>, %arg10: memref<256x128xf32, #tpu.memory_space<vmem>>) attributes {dimension_semantics = [#tpu.dimension_semantics<parallel>], iteration_bounds = array<i64: 2>, scalar_prefetch = 0 : i64, scratch_operands = 2 : i64, tpu.core_type = #tpu.core_type<tc>, window_params = [{transform_indices = @transform_0, window_bounds = array<i64: 1, 256, 128>}, {pipeline_mode = #tpu.pipeline_mode<synchronous>, transform_indices = @transform_1, window_bounds = array<i64: 128, 128>}, {pipeline_mode = #tpu.pipeline_mode<synchronous>, transform_indices = @transform_2, window_bounds = array<i64: 3, 384, 128>}, {pipeline_mode = #tpu.pipeline_mode<synchronous>, transform_indices = @transform_3, window_bounds = array<i64: 128, 128>}, {pipeline_mode = #tpu.pipeline_mode<synchronous>, transform_indices = @transform_4, window_bounds = array<i64: 1, 128>}, {pipeline_mode = #tpu.pipeline_mode<synchronous>, transform_indices = @transform_5, window_bounds = array<i64: 1, 128>}, {pipeline_mode = #tpu.pipeline_mode<synchronous>, transform_indices = @transform_6, window_bounds = array<i64: 1, 128>}, {transform_indices = @transform_7, window_bounds = array<i64: 1, 256, 128>}]} {
    %c0 = arith.constant 0 : index
    %c0_0 = arith.constant 0 : index
    %c0_1 = arith.constant 0 : index
    %0 = vector.load %arg1[%c0, %c0_0, %c0_1] : memref<1x256x128xbf16, #tpu.memory_space<vmem>>, vector<1x256x128xbf16>
    %1 = vector.shape_cast %0 : vector<1x256x128xbf16> to vector<256x128xbf16>
    %c0_2 = arith.constant 0 : index
    %c0_3 = arith.constant 0 : index
    %2 = vector.load %arg2[%c0_2, %c0_3] : memref<128x128xbf16, #tpu.memory_space<vmem>>, vector<128x128xbf16>
    %cst = arith.constant dense<0.000000e+00> : vector<256x128xf32>
    %3 = tpu.matmul %1, %2, %cst {dimension_numbers = #tpu.dot_dimension_numbers<[1], [0], [0], [1], [0, 0, 1, 1], [], []>} : vector<256x128xbf16>, vector<128x128xbf16>, vector<256x128xf32> -> vector<256x128xf32>
    %c0_4 = arith.constant 0 : index
    %c0_5 = arith.constant 0 : index
    %4 = vector.load %arg5[%c0_4, %c0_5] : memref<1x128xf32, #tpu.memory_space<vmem>>, vector<1x128xf32>
    %5 = vector.broadcast %4 : vector<1x128xf32> to vector<256x128xf32>
    %6 = arith.addf %3, %5 : vector<256x128xf32>
    %cst_6 = arith.constant 0.000000e+00 : f32
    %7 = vector.broadcast %cst_6 : f32 to vector<256x128xf32>
    %8 = arith.maximumf %6, %7 : vector<256x128xf32>
    %cst_7 = arith.constant 0.000000e+00 : bf16
    %9 = vector.broadcast %cst_7 : bf16 to vector<1x18x128xbf16>
    %cst_8 = arith.constant 0.000000e+00 : bf16
    %10 = vector.broadcast %cst_8 : bf16 to vector<18x1x128xbf16>
    %c0_9 = arith.constant 0 : index
    %c15 = arith.constant 15 : index
    %c0_10 = arith.constant 0 : index
    %11 = vector.load %arg9[%c0_9, %c15, %c0_10] : memref<18x48x128xbf16, #tpu.memory_space<vmem>>, vector<1x18x128xbf16>
    tpu.vector_store %arg9[%c0_9, %c15, %c0_10], %9 {strides = array<i32>} : memref<18x48x128xbf16, #tpu.memory_space<vmem>>, vector<1x18x128xbf16>,
    %c17 = arith.constant 17 : index
    %c15_11 = arith.constant 15 : index
    %c0_12 = arith.constant 0 : index
    %12 = vector.load %arg9[%c17, %c15_11, %c0_12] : memref<18x48x128xbf16, #tpu.memory_space<vmem>>, vector<1x18x128xbf16>
    tpu.vector_store %arg9[%c17, %c15_11, %c0_12], %9 {strides = array<i32>} : memref<18x48x128xbf16, #tpu.memory_space<vmem>>, vector<1x18x128xbf16>,
    %c0_13 = arith.constant 0 : index
    %c15_14 = arith.constant 15 : index
    %c0_15 = arith.constant 0 : index
    %13 = vector.load %arg9[%c0_13, %c15_14, %c0_15] : memref<18x48x128xbf16, #tpu.memory_space<vmem>>, vector<18x1x128xbf16>
    tpu.vector_store %arg9[%c0_13, %c15_14, %c0_15], %10 {strides = array<i32>} : memref<18x48x128xbf16, #tpu.memory_space<vmem>>, vector<18x1x128xbf16>,
    %c0_16 = arith.constant 0 : index
    %c32 = arith.constant 32 : index
    %c0_17 = arith.constant 0 : index
    %14 = vector.load %arg9[%c0_16, %c32, %c0_17] : memref<18x48x128xbf16, #tpu.memory_space<vmem>>, vector<18x1x128xbf16>
    tpu.vector_store %arg9[%c0_16, %c32, %c0_17], %10 {strides = array<i32>} : memref<18x48x128xbf16, #tpu.memory_space<vmem>>, vector<18x1x128xbf16>,
    %15 = vector.shape_cast %8 : vector<256x128xf32> to vector<16x16x128xf32>
    %16 = arith.truncf %15 : vector<16x16x128xf32> to vector<16x16x128xbf16>
    %c1 = arith.constant 1 : index
    %c16 = arith.constant 16 : index
    %c0_18 = arith.constant 0 : index
    %17 = vector.load %arg9[%c1, %c16, %c0_18] : memref<18x48x128xbf16, #tpu.memory_space<vmem>>, vector<16x16x128xbf16>
    tpu.vector_store %arg9[%c1, %c16, %c0_18], %16 {strides = array<i32>} : memref<18x48x128xbf16, #tpu.memory_space<vmem>>, vector<16x16x128xbf16>,
    %c0_19 = arith.constant 0 : index
    %c15_20 = arith.constant 15 : index
    %c0_21 = arith.constant 0 : index
    %18 = vector.load %arg9[%c0_19, %c15_20, %c0_21] : memref<18x48x128xbf16, #tpu.memory_space<vmem>>, vector<16x18x128xbf16>
    %19 = vector.extract_strided_slice %18 {offsets = [0, 0, 0], sizes = [16, 16, 128], strides = [1, 1, 1]} : vector<16x18x128xbf16> to vector<16x16x128xbf16>
    %20 = vector.extract_strided_slice %18 {offsets = [0, 1, 0], sizes = [16, 16, 128], strides = [1, 1, 1]} : vector<16x18x128xbf16> to vector<16x16x128xbf16>
    %21 = vector.extract_strided_slice %18 {offsets = [0, 2, 0], sizes = [16, 16, 128], strides = [1, 1, 1]} : vector<16x18x128xbf16> to vector<16x16x128xbf16>
    %22 = tpu.concatenate %19, %20, %21 in 2 : vector<16x16x128xbf16>, vector<16x16x128xbf16>, vector<16x16x128xbf16> -> vector<16x16x384xbf16>
    %23 = vector.shape_cast %22 : vector<16x16x384xbf16> to vector<256x384xbf16>
    %c0_22 = arith.constant 0 : index
    %c0_23 = arith.constant 0 : index
    %c0_24 = arith.constant 0 : index
    %24 = vector.load %arg3[%c0_22, %c0_23, %c0_24] : memref<3x384x128xbf16, #tpu.memory_space<vmem>>, vector<1x384x128xbf16>
    %25 = vector.shape_cast %24 : vector<1x384x128xbf16> to vector<384x128xbf16>
    %cst_25 = arith.constant dense<0.000000e+00> : vector<256x128xf32>
    %26 = tpu.matmul %23, %25, %cst_25 {dimension_numbers = #tpu.dot_dimension_numbers<[1], [0], [0], [1], [0, 0, 1, 1], [], []>} : vector<256x384xbf16>, vector<384x128xbf16>, vector<256x128xf32> -> vector<256x128xf32>
    %c0_26 = arith.constant 0 : index
    %c0_27 = arith.constant 0 : index
    %27 = vector.load %arg10[%c0_26, %c0_27] : memref<256x128xf32, #tpu.memory_space<vmem>>, vector<256x128xf32>
    tpu.vector_store %arg10[%c0_26, %c0_27], %26 {strides = array<i32>} : memref<256x128xf32, #tpu.memory_space<vmem>>, vector<256x128xf32>,
    %c1_28 = arith.constant 1 : index
    %c15_29 = arith.constant 15 : index
    %c0_30 = arith.constant 0 : index
    %28 = vector.load %arg9[%c1_28, %c15_29, %c0_30] : memref<18x48x128xbf16, #tpu.memory_space<vmem>>, vector<16x18x128xbf16>
    %29 = vector.extract_strided_slice %28 {offsets = [0, 0, 0], sizes = [16, 16, 128], strides = [1, 1, 1]} : vector<16x18x128xbf16> to vector<16x16x128xbf16>
    %30 = vector.extract_strided_slice %28 {offsets = [0, 1, 0], sizes = [16, 16, 128], strides = [1, 1, 1]} : vector<16x18x128xbf16> to vector<16x16x128xbf16>
    %31 = vector.extract_strided_slice %28 {offsets = [0, 2, 0], sizes = [16, 16, 128], strides = [1, 1, 1]} : vector<16x18x128xbf16> to vector<16x16x128xbf16>
    %32 = tpu.concatenate %29, %30, %31 in 2 : vector<16x16x128xbf16>, vector<16x16x128xbf16>, vector<16x16x128xbf16> -> vector<16x16x384xbf16>
    %33 = vector.shape_cast %32 : vector<16x16x384xbf16> to vector<256x384xbf16>
    %c1_31 = arith.constant 1 : index
    %c0_32 = arith.constant 0 : index
    %c0_33 = arith.constant 0 : index
    %34 = vector.load %arg3[%c1_31, %c0_32, %c0_33] : memref<3x384x128xbf16, #tpu.memory_space<vmem>>, vector<1x384x128xbf16>
    %35 = vector.shape_cast %34 : vector<1x384x128xbf16> to vector<384x128xbf16>
    %cst_34 = arith.constant dense<0.000000e+00> : vector<256x128xf32>
    %36 = tpu.matmul %33, %35, %cst_34 {dimension_numbers = #tpu.dot_dimension_numbers<[1], [0], [0], [1], [0, 0, 1, 1], [], []>} : vector<256x384xbf16>, vector<384x128xbf16>, vector<256x128xf32> -> vector<256x128xf32>
    %c0_35 = arith.constant 0 : index
    %c0_36 = arith.constant 0 : index
    %37 = vector.load %arg10[%c0_35, %c0_36] : memref<256x128xf32, #tpu.memory_space<vmem>>, vector<256x128xf32>
    %38 = arith.addf %37, %36 : vector<256x128xf32>
    %c0_37 = arith.constant 0 : index
    %c0_38 = arith.constant 0 : index
    %39 = vector.load %arg10[%c0_37, %c0_38] : memref<256x128xf32, #tpu.memory_space<vmem>>, vector<256x128xf32>
    tpu.vector_store %arg10[%c0_37, %c0_38], %38 {strides = array<i32>} : memref<256x128xf32, #tpu.memory_space<vmem>>, vector<256x128xf32>,
    %c2 = arith.constant 2 : index
    %c15_39 = arith.constant 15 : index
    %c0_40 = arith.constant 0 : index
    %40 = vector.load %arg9[%c2, %c15_39, %c0_40] : memref<18x48x128xbf16, #tpu.memory_space<vmem>>, vector<16x18x128xbf16>
    %41 = vector.extract_strided_slice %40 {offsets = [0, 0, 0], sizes = [16, 16, 128], strides = [1, 1, 1]} : vector<16x18x128xbf16> to vector<16x16x128xbf16>
    %42 = vector.extract_strided_slice %40 {offsets = [0, 1, 0], sizes = [16, 16, 128], strides = [1, 1, 1]} : vector<16x18x128xbf16> to vector<16x16x128xbf16>
    %43 = vector.extract_strided_slice %40 {offsets = [0, 2, 0], sizes = [16, 16, 128], strides = [1, 1, 1]} : vector<16x18x128xbf16> to vector<16x16x128xbf16>
    %44 = tpu.concatenate %41, %42, %43 in 2 : vector<16x16x128xbf16>, vector<16x16x128xbf16>, vector<16x16x128xbf16> -> vector<16x16x384xbf16>
    %45 = vector.shape_cast %44 : vector<16x16x384xbf16> to vector<256x384xbf16>
    %c2_41 = arith.constant 2 : index
    %c0_42 = arith.constant 0 : index
    %c0_43 = arith.constant 0 : index
    %46 = vector.load %arg3[%c2_41, %c0_42, %c0_43] : memref<3x384x128xbf16, #tpu.memory_space<vmem>>, vector<1x384x128xbf16>
    %47 = vector.shape_cast %46 : vector<1x384x128xbf16> to vector<384x128xbf16>
    %cst_44 = arith.constant dense<0.000000e+00> : vector<256x128xf32>
    %48 = tpu.matmul %45, %47, %cst_44 {dimension_numbers = #tpu.dot_dimension_numbers<[1], [0], [0], [1], [0, 0, 1, 1], [], []>} : vector<256x384xbf16>, vector<384x128xbf16>, vector<256x128xf32> -> vector<256x128xf32>
    %c0_45 = arith.constant 0 : index
    %c0_46 = arith.constant 0 : index
    %49 = vector.load %arg10[%c0_45, %c0_46] : memref<256x128xf32, #tpu.memory_space<vmem>>, vector<256x128xf32>
    %50 = arith.addf %49, %48 : vector<256x128xf32>
    %c0_47 = arith.constant 0 : index
    %c0_48 = arith.constant 0 : index
    %51 = vector.load %arg10[%c0_47, %c0_48] : memref<256x128xf32, #tpu.memory_space<vmem>>, vector<256x128xf32>
    tpu.vector_store %arg10[%c0_47, %c0_48], %50 {strides = array<i32>} : memref<256x128xf32, #tpu.memory_space<vmem>>, vector<256x128xf32>,
    %c0_49 = arith.constant 0 : index
    %c0_50 = arith.constant 0 : index
    %52 = vector.load %arg10[%c0_49, %c0_50] : memref<256x128xf32, #tpu.memory_space<vmem>>, vector<256x128xf32>
    %c0_51 = arith.constant 0 : index
    %c0_52 = arith.constant 0 : index
    %53 = vector.load %arg6[%c0_51, %c0_52] : memref<1x128xf32, #tpu.memory_space<vmem>>, vector<1x128xf32>
    %54 = vector.broadcast %53 : vector<1x128xf32> to vector<256x128xf32>
    %55 = arith.addf %52, %54 : vector<256x128xf32>
    %cst_53 = arith.constant 0.000000e+00 : f32
    %56 = vector.broadcast %cst_53 : f32 to vector<256x128xf32>
    %57 = arith.maximumf %55, %56 : vector<256x128xf32>
    %58 = arith.truncf %57 : vector<256x128xf32> to vector<256x128xbf16>
    %c0_54 = arith.constant 0 : index
    %c0_55 = arith.constant 0 : index
    %59 = vector.load %arg4[%c0_54, %c0_55] : memref<128x128xbf16, #tpu.memory_space<vmem>>, vector<128x128xbf16>
    %cst_56 = arith.constant dense<0.000000e+00> : vector<256x128xf32>
    %60 = tpu.matmul %58, %59, %cst_56 {dimension_numbers = #tpu.dot_dimension_numbers<[1], [0], [0], [1], [0, 0, 1, 1], [], []>} : vector<256x128xbf16>, vector<128x128xbf16>, vector<256x128xf32> -> vector<256x128xf32>
    %c0_57 = arith.constant 0 : index
    %c0_58 = arith.constant 0 : index
    %61 = vector.load %arg7[%c0_57, %c0_58] : memref<1x128xf32, #tpu.memory_space<vmem>>, vector<1x128xf32>
    %62 = vector.broadcast %61 : vector<1x128xf32> to vector<256x128xf32>
    %63 = arith.addf %60, %62 : vector<256x128xf32>
    %c0_59 = arith.constant 0 : index
    %c0_60 = arith.constant 0 : index
    %c0_61 = arith.constant 0 : index
    %64 = vector.load %arg1[%c0_59, %c0_60, %c0_61] : memref<1x256x128xbf16, #tpu.memory_space<vmem>>, vector<1x256x128xbf16>
    %65 = vector.shape_cast %64 : vector<1x256x128xbf16> to vector<256x128xbf16>
    %66 = arith.extf %65 : vector<256x128xbf16> to vector<256x128xf32>
    %67 = arith.addf %63, %66 : vector<256x128xf32>
    %cst_62 = arith.constant 0.000000e+00 : f32
    %68 = vector.broadcast %cst_62 : f32 to vector<256x128xf32>
    %69 = arith.maximumf %67, %68 : vector<256x128xf32>
    %70 = arith.truncf %69 : vector<256x128xf32> to vector<256x128xbf16>
    %c0_63 = arith.constant 0 : index
    %c0_64 = arith.constant 0 : index
    %c0_65 = arith.constant 0 : index
    %71 = vector.load %arg8[%c0_63, %c0_64, %c0_65] : memref<1x256x128xbf16, #tpu.memory_space<vmem>>, vector<1x256x128xbf16>
    %72 = vector.shape_cast %71 : vector<1x256x128xbf16> to vector<256x128xbf16>
    %73 = vector.shape_cast %70 : vector<256x128xbf16> to vector<1x256x128xbf16>
    tpu.vector_store %arg8[%c0_63, %c0_64, %c0_65], %73 {strides = array<i32>} : memref<1x256x128xbf16, #tpu.memory_space<vmem>>, vector<1x256x128xbf16>,
    return
  }
  func.func @transform_0(%arg0: i32) -> (i32, i32, i32) {
    %c0_i32 = arith.constant 0 : i32
    %c0_i32_0 = arith.constant 0 : i32
    %c0_i32_1 = arith.constant 0 : i32
    return %arg0, %c0_i32, %c0_i32_0 : i32, i32, i32
  }
  func.func @transform_1(%arg0: i32) -> (i32, i32) {
    %c0_i32 = arith.constant 0 : i32
    %c0_i32_0 = arith.constant 0 : i32
    %c0_i32_1 = arith.constant 0 : i32
    return %c0_i32, %c0_i32_0 : i32, i32
  }
  func.func @transform_2(%arg0: i32) -> (i32, i32, i32) {
    %c0_i32 = arith.constant 0 : i32
    %c0_i32_0 = arith.constant 0 : i32
    %c0_i32_1 = arith.constant 0 : i32
    %c0_i32_2 = arith.constant 0 : i32
    return %c0_i32, %c0_i32_0, %c0_i32_1 : i32, i32, i32
  }
  func.func @transform_3(%arg0: i32) -> (i32, i32) {
    %c0_i32 = arith.constant 0 : i32
    %c0_i32_0 = arith.constant 0 : i32
    %c0_i32_1 = arith.constant 0 : i32
    return %c0_i32, %c0_i32_0 : i32, i32
  }
  func.func @transform_4(%arg0: i32) -> (i32, i32) {
    %c0_i32 = arith.constant 0 : i32
    %c0_i32_0 = arith.constant 0 : i32
    %c0_i32_1 = arith.constant 0 : i32
    return %c0_i32, %c0_i32_0 : i32, i32
  }
  func.func @transform_5(%arg0: i32) -> (i32, i32) {
    %c0_i32 = arith.constant 0 : i32
    %c0_i32_0 = arith.constant 0 : i32
    %c0_i32_1 = arith.constant 0 : i32
    return %c0_i32, %c0_i32_0 : i32, i32
  }
  func.func @transform_6(%arg0: i32) -> (i32, i32) {
    %c0_i32 = arith.constant 0 : i32
    %c0_i32_0 = arith.constant 0 : i32
    %c0_i32_1 = arith.constant 0 : i32
    return %c0_i32, %c0_i32_0 : i32, i32
  }
  func.func @transform_7(%arg0: i32) -> (i32, i32, i32) {
    %c0_i32 = arith.constant 0 : i32
    %c0_i32_0 = arith.constant 0 : i32
    %c0_i32_1 = arith.constant 0 : i32
    return %arg0, %c0_i32, %c0_i32_0 : i32, i32, i32
  }
}

</mosaic_0001>

<llo_original>
// kernel: tpu_custom_call.1
$region0: #{tpu_custom_call.1}
  #allocation0 [shape = 'u32[]', space=smem, size = 0x4, offset = 0x4, fixed_abs, tag = 'smem constant byte address 0x4 - core index']
  #allocation1 [shape = 'u32[72,128]{1,0:T(1,128)}', space=vmem, size = 0x9000, scoped, tag = 'internal scratch']
  #allocation2 [shape = 'bf16[18,48,128]{2,1,0:T(8,128)(2,1)}', space=vmem, size = 0x36000, scoped, tag = 'scratch operand']
  #allocation3 [shape = 'f32[256,128]{1,0:T(8,128)}', space=vmem, size = 0x20000, scoped, tag = 'scratch operand']
  %s0 = inlined_call_operand.hbm [shape: bf16[2,256,128], index: 0, kind: input, shape index: {}]
  %s1 = inlined_call_operand.hbm [shape: bf16[128,128], index: 1, kind: input, shape index: {}]
  %s2 = inlined_call_operand.hbm [shape: bf16[3,384,128], index: 2, kind: input, shape index: {}]
  %s3 = inlined_call_operand.hbm [shape: bf16[128,128], index: 3, kind: input, shape index: {}]
  %s4 = inlined_call_operand.vmem [shape: f32[1,128], index: 4, kind: input, shape index: {}]
  %s5 = inlined_call_operand.vmem [shape: f32[1,128], index: 5, kind: input, shape index: {}]
  %s6 = inlined_call_operand.vmem [shape: f32[1,128], index: 6, kind: input, shape index: {}]
  %s7 = inlined_call_operand.hbm [shape: bf16[2,256,128], index: 7, kind: output, shape index: {}]
  %s8 = sld [smem:[#allocation0]]
  $region77: #{tpu_custom_call.1} parent=0
    _
  %s10 = ssub.s32 1, %s8
  %s11 = scalar_select 0, %s10, %s8
  $region1: #{tpu_custom_call.1} parent=0
    #allocation4 [shape = 'u8[131072]{0}', space=vmem, size = 0x20000, scoped, tag = 'input window, operand 0']
    #allocation5 [shape = 's32[2]{0}', space=sflag, size = 0x8, scoped, tag = 'scoped memory for tpu_custom_call.1']
    #allocation6 [shape = 's32[2]{0}', space=sflag, size = 0x8, scoped, tag = 'scoped memory for tpu_custom_call.1']
    #allocation7 [shape = 'u8[32768]{0}', space=vmem, size = 0x8000, scoped, tag = 'input window, operand 1, single buffered']
    #allocation8 [shape = 's32[1]{0}', space=sflag, size = 0x4, scoped, tag = 'scoped memory for tpu_custom_call.1']
    #allocation9 [shape = 'u8[294912]{0}', space=vmem, size = 0x48000, scoped, tag = 'input window, operand 2, single buffered']
    #allocation10 [shape = 'u8[32768]{0}', space=vmem, size = 0x8000, scoped, tag = 'input window, operand 3, single buffered']
    #allocation11 [shape = 's32[1]{0}', space=sflag, size = 0x4, scoped, tag = 'scoped memory for tpu_custom_call.1']
    #allocation12 [shape = 'u8[131072]{0}', space=vmem, size = 0x20000, scoped, tag = 'output window, operand 0']
    %12 = vsyncpa [#allocation5], 0
    %s13 = scalar_lea.sflag [#allocation5], 1
    %14 = vsyncpa %s13, 0
    %15 = vsyncpa [#allocation8], 0
    %16 = vsyncpa [#allocation11], 0
    %17 = vsyncpa [#allocation6], 0
    %s18 = scalar_lea.sflag [#allocation6], 1
    %19 = vsyncpa %s18, 0
    loop: start=0, step=1, limit=4
    $region2: #{tpu_custom_call.1} parent=1 // loop_pre_header
      _
    $region3: #{tpu_custom_call.1} parent=1 // loop_header
      %s21 = sphi 0, %s25
      %p22 = scmp.ge.s32.totalorder %s21, 4
      %s31 = sphi 0, %s33
      %s34 = sphi 0, %s31
      %s35 = sphi 0, %s34
      %s51 = sphi 0, %s35
      %s55 = sphi 0, %s55
      %s57 = sphi 0, %s55
      %s58 = sphi 0, %s57
      %s72 = sphi 0, %s58
      %s76 = sphi 0, %s76
      %s78 = sphi 0, %s76
      %s79 = sphi 0, %s78
      %s93 = sphi 0, %s79
      %s97 = sphi 0, %s97
      %s99 = sphi 0, %s97
      %s100 = sphi 0, %s99
      %s114 = sphi 0, %s100
      %s118 = sphi 0, %s118
      %s120 = sphi 0, %s118
      %s121 = sphi 0, %s120
      %s135 = sphi 0, %s121
      %s139 = sphi 0, %s139
      %s141 = sphi 0, %s139
      %s142 = sphi 0, %s141
      %s156 = sphi 0, %s142
      %s160 = sphi 0, %s160
      %s162 = sphi 0, %s160
      %s163 = sphi 0, %s162
      %s177 = sphi 0, %s163
      %s183 = sphi 0, %s185
      %s186 = sphi 0, %s183
      %s187 = sphi 0, %s186
      %s203 = sphi 0, %s187
    $region4: #{tpu_custom_call.1} parent=1 // loop_header_branch
      %24 = sbr.rel (%p22) target = $region8
    $region5: #{tpu_custom_call.1} parent=1 // loop_body
      %s26 = ssub.s32 %s21, 1
      %s27 = ssub.s32 %s21, 2
      %s28 = sadd.s32 %s21, 1
      %s29 = ssub.s32 %s21, %s28
      %p30 = scmp.eq.s32.totalorder %s29, 0
      %s32 = sadd.s32 %s31, 1
      %s33 = scalar_select %p30, %s31, %s32
      %p36 = pneg %p30
      %p37 = scmp.eq.s32.totalorder %s21, 1
      %p38 = por %p36, %p37
      %p39 = scmp.ne.s32.totalorder %s31, %s34
      %p40 = scmp.eq.s32.totalorder %s21, 0
      %p41 = por %p39, %p40
      %p42 = scmp.ne.s32.totalorder %s31, %s34
      %p43 = scmp.eq.s32.totalorder %s26, 1
      %p44 = por %p42, %p43
      %p45 = scmp.ne.s32.totalorder %s34, %s35
      %p46 = scmp.eq.s32.totalorder %s26, 0
      %p47 = por %p45, %p46
      %p48 = scmp.ne.s32.totalorder %s34, %s35
      %p49 = scmp.eq.s32.totalorder %s27, 1
      %p50 = por %p48, %p49
      %p52 = scmp.ne.s32.totalorder %s35, %s51
      %p53 = scmp.eq.s32.totalorder %s27, 0
      %p54 = por %p52, %p53
      %s56 = sadd.s32 %s55, 1
      %p59 = scmp.eq.s32.totalorder %s21, 1
      %p60 = scmp.ne.s32.totalorder %s55, %s57
      %p61 = scmp.eq.s32.totalorder %s21, 0
      %p62 = por %p60, %p61
      %p63 = scmp.ne.s32.totalorder %s55, %s57
      %p64 = scmp.eq.s32.totalorder %s26, 1
      %p65 = por %p63, %p64
      %p66 = scmp.ne.s32.totalorder %s57, %s58
      %p67 = scmp.eq.s32.totalorder %s26, 0
      %p68 = por %p66, %p67
      %p69 = scmp.ne.s32.totalorder %s57, %s58
      %p70 = scmp.eq.s32.totalorder %s27, 1
      %p71 = por %p69, %p70
      %p73 = scmp.ne.s32.totalorder %s58, %s72
      %p74 = scmp.eq.s32.totalorder %s27, 0
      %p75 = por %p73, %p74
      %s77 = sadd.s32 %s76, 1
      %p80 = scmp.eq.s32.totalorder %s21, 1
      %p81 = scmp.ne.s32.totalorder %s76, %s78
      %p82 = scmp.eq.s32.totalorder %s21, 0
      %p83 = por %p81, %p82
      %p84 = scmp.ne.s32.totalorder %s76, %s78
      %p85 = scmp.eq.s32.totalorder %s26, 1
      %p86 = por %p84, %p85
      %p87 = scmp.ne.s32.totalorder %s78, %s79
      %p88 = scmp.eq.s32.totalorder %s26, 0
      %p89 = por %p87, %p88
      %p90 = scmp.ne.s32.totalorder %s78, %s79
      %p91 = scmp.eq.s32.totalorder %s27, 1
      %p92 = por %p90, %p91
      %p94 = scmp.ne.s32.totalorder %s79, %s93
      %p95 = scmp.eq.s32.totalorder %s27, 0
      %p96 = por %p94, %p95
      %s98 = sadd.s32 %s97, 1
      %p101 = scmp.eq.s32.totalorder %s21, 1
      %p102 = scmp.ne.s32.totalorder %s97, %s99
      %p103 = scmp.eq.s32.totalorder %s21, 0
      %p104 = por %p102, %p103
      %p105 = scmp.ne.s32.totalorder %s97, %s99
      %p106 = scmp.eq.s32.totalorder %s26, 1
      %p107 = por %p105, %p106
      %p108 = scmp.ne.s32.totalorder %s99, %s100
      %p109 = scmp.eq.s32.totalorder %s26, 0
      %p110 = por %p108, %p109
      %p111 = scmp.ne.s32.totalorder %s99, %s100
      %p112 = scmp.eq.s32.totalorder %s27, 1
      %p113 = por %p111, %p112
      %p115 = scmp.ne.s32.totalorder %s100, %s114
      %p116 = scmp.eq.s32.totalorder %s27, 0
      %p117 = por %p115, %p116
      %s119 = sadd.s32 %s118, 1
      %p122 = scmp.eq.s32.totalorder %s21, 1
      %p123 = scmp.ne.s32.totalorder %s118, %s120
      %p124 = scmp.eq.s32.totalorder %s21, 0
      %p125 = por %p123, %p124
      %p126 = scmp.ne.s32.totalorder %s118, %s120
      %p127 = scmp.eq.s32.totalorder %s26, 1
      %p128 = por %p126, %p127
      %p129 = scmp.ne.s32.totalorder %s120, %s121
      %p130 = scmp.eq.s32.totalorder %s26, 0
      %p131 = por %p129, %p130
      %p132 = scmp.ne.s32.totalorder %s120, %s121
      %p133 = scmp.eq.s32.totalorder %s27, 1
      %p134 = por %p132, %p133
      %p136 = scmp.ne.s32.totalorder %s121, %s135
      %p137 = scmp.eq.s32.totalorder %s27, 0
      %p138 = por %p136, %p137
      %s140 = sadd.s32 %s139, 1
      %p143 = scmp.eq.s32.totalorder %s21, 1
      %p144 = scmp.ne.s32.totalorder %s139, %s141
      %p145 = scmp.eq.s32.totalorder %s21, 0
      %p146 = por %p144, %p145
      %p147 = scmp.ne.s32.totalorder %s139, %s141
      %p148 = scmp.eq.s32.totalorder %s26, 1
      %p149 = por %p147, %p148
      %p150 = scmp.ne.s32.totalorder %s141, %s142
      %p151 = scmp.eq.s32.totalorder %s26, 0
      %p152 = por %p150, %p151
      %p153 = scmp.ne.s32.totalorder %s141, %s142
      %p154 = scmp.eq.s32.totalorder %s27, 1
      %p155 = por %p153, %p154
      %p157 = scmp.ne.s32.totalorder %s142, %s156
      %p158 = scmp.eq.s32.totalorder %s27, 0
      %p159 = por %p157, %p158
      %s161 = sadd.s32 %s160, 1
      %p164 = scmp.eq.s32.totalorder %s21, 1
      %p165 = scmp.ne.s32.totalorder %s160, %s162
      %p166 = scmp.eq.s32.totalorder %s21, 0
      %p167 = por %p165, %p166
      %p168 = scmp.ne.s32.totalorder %s160, %s162
      %p169 = scmp.eq.s32.totalorder %s26, 1
      %p170 = por %p168, %p169
      %p171 = scmp.ne.s32.totalorder %s162, %s163
      %p172 = scmp.eq.s32.totalorder %s26, 0
      %p173 = por %p171, %p172
      %p174 = scmp.ne.s32.totalorder %s162, %s163
      %p175 = scmp.eq.s32.totalorder %s27, 1
      %p176 = por %p174, %p175
      %p178 = scmp.ne.s32.totalorder %s163, %s177
      %p179 = scmp.eq.s32.totalorder %s27, 0
      %p180 = por %p178, %p179
      %s181 = ssub.s32 %s21, %s28
      %p182 = scmp.eq.s32.totalorder %s181, 0
      %s184 = sadd.s32 %s183, 1
      %s185 = scalar_select %p182, %s183, %s184
      %p188 = pneg %p182
      %p189 = scmp.eq.s32.totalorder %s21, 1
      %p190 = por %p188, %p189
      %p191 = scmp.ne.s32.totalorder %s183, %s186
      %p192 = scmp.eq.s32.totalorder %s21, 0
      %p193 = por %p191, %p192
      %p194 = scmp.ne.s32.totalorder %s183, %s186
      %p195 = scmp.eq.s32.totalorder %s26, 1
      %p196 = por %p194, %p195
      %p197 = scmp.ne.s32.totalorder %s186, %s187
      %p198 = scmp.eq.s32.totalorder %s26, 0
      %p199 = por %p197, %p198
      %p200 = scmp.ne.s32.totalorder %s186, %s187
      %p201 = scmp.eq.s32.totalorder %s27, 1
      %p202 = por %p200, %p201
      %p204 = scmp.ne.s32.totalorder %s187, %s203
      %p205 = scmp.eq.s32.totalorder %s27, 0
      %p206 = por %p204, %p205
      %p207 = scmp.le.s32.totalorder 1, %s21
      %p208 = scmp.lt.s32.totalorder %s21, 3
      %p209 = pnand %p207, %p208
      %p210 = pneg %p209
      // Predicated region
      $region9: #{tpu_custom_call.1} parent=5 // pred_check
        _
      $region10: #{tpu_custom_call.1} parent=5 // pred_check_branch
        %212 = sbr.rel (%p209) target = $region12
      $region11: #{tpu_custom_call.1} parent=5 // pred_region
        %s213 = ssub.s32 %s21, 1
        // Predicated region
        $region13: #{tpu_custom_call.1} parent=11 // pred_check
          %p214 = pneg %p68
        $region14: #{tpu_custom_call.1} parent=11 // pred_check_branch
          %216 = sbr.rel (%p214) target = $region16
        $region15: #{tpu_custom_call.1} parent=11 // pred_region
          %218 = vsyncadd [#allocation8], 0
          %s219 = sshll.u32 %s1, 4
          %s220 = int_to_ptr.hbm [resolvable:$true] %s219
          %s221 = sshll.u32 [#allocation7], 4
          %s222 = int_to_ptr.vmem [resolvable:$true] %s221
          %227 = dma.hbm_to_vmem [thread:$0]  %s220, 1024, %s222, [#allocation8], 64, 64, 4
        $region16: #{tpu_custom_call.1} parent=11 // pred_fallthru
          _
        // Predicated region
        $region17: #{tpu_custom_call.1} parent=11 // pred_check
          %p228 = pneg %p89
        $region18: #{tpu_custom_call.1} parent=11 // pred_check_branch
          %230 = sbr.rel (%p228) target = $region20
        $region19: #{tpu_custom_call.1} parent=11 // pred_region
          %232 = vsyncadd [#allocation8], 0
          %s233 = sshll.u32 %s2, 4
          %s234 = int_to_ptr.hbm [resolvable:$true] %s233
          %s235 = sshll.u32 [#allocation9], 4
          %s236 = int_to_ptr.vmem [resolvable:$true] %s235
          %241 = dma.hbm_to_vmem [thread:$0]  %s234, 9216, %s236, [#allocation8], 64, 64, 4
        $region20: #{tpu_custom_call.1} parent=11 // pred_fallthru
          _
        // Predicated region
        $region21: #{tpu_custom_call.1} parent=11 // pred_check
          %p242 = pneg %p110
        $region22: #{tpu_custom_call.1} parent=11 // pred_check_branch
          %244 = sbr.rel (%p242) target = $region24
        $region23: #{tpu_custom_call.1} parent=11 // pred_region
          %246 = vsyncadd [#allocation11], 0
          %s247 = sshll.u32 %s3, 4
          %s248 = int_to_ptr.hbm [resolvable:$true] %s247
          %s249 = sshll.u32 [#allocation10], 4
          %s250 = int_to_ptr.vmem [resolvable:$true] %s249
          %255 = dma.hbm_to_vmem [thread:$0]  %s248, 1024, %s250, [#allocation11], 64, 64, 4
        $region24: #{tpu_custom_call.1} parent=11 // pred_fallthru
          _
        // Predicated region
        $region25: #{tpu_custom_call.1} parent=11 // pred_check
          %p256 = pneg %p131
        $region26: #{tpu_custom_call.1} parent=11 // pred_check_branch
          %258 = sbr.rel (%p256) target = $region28
        $region27: #{tpu_custom_call.1} parent=11 // pred_region
          _
        $region28: #{tpu_custom_call.1} parent=11 // pred_fallthru
          _
        // Predicated region
        $region29: #{tpu_custom_call.1} parent=11 // pred_check
          %p259 = pneg %p152
        $region30: #{tpu_custom_call.1} parent=11 // pred_check_branch
          %261 = sbr.rel (%p259) target = $region32
        $region31: #{tpu_custom_call.1} parent=11 // pred_region
          _
        $region32: #{tpu_custom_call.1} parent=11 // pred_fallthru
          _
        // Predicated region
        $region33: #{tpu_custom_call.1} parent=11 // pred_check
          %p262 = pneg %p173
        $region34: #{tpu_custom_call.1} parent=11 // pred_check_branch
          %264 = sbr.rel (%p262) target = $region36
        $region35: #{tpu_custom_call.1} parent=11 // pred_region
          _
        $region36: #{tpu_custom_call.1} parent=11 // pred_fallthru
          _
      $region12: #{tpu_custom_call.1} parent=5 // pred_fallthru
        _
      %p265 = scmp.lt.s32.totalorder %s21, 2
      // Predicated region
      $region37: #{tpu_custom_call.1} parent=5 // pred_check
        %p266 = pneg %p265
      $region38: #{tpu_custom_call.1} parent=5 // pred_check_branch
        %268 = sbr.rel (%p266) target = $region40
      $region39: #{tpu_custom_call.1} parent=5 // pred_region
        // Predicated region
        $region41: #{tpu_custom_call.1} parent=39 // pred_check
          %p269 = pneg %p41
        $region42: #{tpu_custom_call.1} parent=39 // pred_check_branch
          %271 = sbr.rel (%p269) target = $region44
        $region43: #{tpu_custom_call.1} parent=39 // pred_region
          %s272 = sand.u32 %s31, 1
          %s273 = scalar_lea.sflag [#allocation5], %s272
          %s274 = sand.u32 %s31, 1
          %s275 = smul.addr %s274, 128
          %s276 = scalar_lea.vmem [#allocation4], %s275
          %278 = vsyncadd %s273, 0
          %s279 = smul.addr %s21, 32
          %s280 = smul.addr %s279, 4
          %s281 = scalar_lea.hbm %s0, %s280
          %s282 = sshll.u32 %s281, 4
          %s283 = int_to_ptr.hbm [resolvable:$true] %s282
          %s284 = sshll.u32 %s276, 4
          %s285 = int_to_ptr.vmem [resolvable:$true] %s284
          %290 = dma.hbm_to_vmem [thread:$0]  %s283, 2048, %s285, %s273, 64, 64, 4
        $region44: #{tpu_custom_call.1} parent=39 // pred_fallthru
          _
      $region40: #{tpu_custom_call.1} parent=5 // pred_fallthru
        _
      %p291 = scmp.le.s32.totalorder 1, %s21
      %p292 = scmp.lt.s32.totalorder %s21, 3
      %p293 = pnand %p291, %p292
      %p294 = pneg %p293
      // Predicated region
      $region45: #{tpu_custom_call.1} parent=5 // pred_check
        _
      $region46: #{tpu_custom_call.1} parent=5 // pred_check_branch
        %296 = sbr.rel (%p293) target = $region48
      $region47: #{tpu_custom_call.1} parent=5 // pred_region
        %s297 = ssub.s32 %s21, 1
        %s298 = sand.u32 %s34, 1
        %s299 = scalar_lea.sflag [#allocation5], %s298
        %s300 = sand.u32 %s34, 1
        %s301 = smul.addr %s300, 128
        %s302 = scalar_lea.vmem [#allocation4], %s301
        // Predicated region
        $region49: #{tpu_custom_call.1} parent=47 // pred_check
          %p303 = pneg %p47
        $region50: #{tpu_custom_call.1} parent=47 // pred_check_branch
          %305 = sbr.rel (%p303) target = $region52
        $region51: #{tpu_custom_call.1} parent=47 // pred_region
          %307 = dma.done %s299, 2048
        $region52: #{tpu_custom_call.1} parent=47 // pred_fallthru
          _
        // Predicated region
        $region53: #{tpu_custom_call.1} parent=47 // pred_check
          %p308 = pneg %p68
        $region54: #{tpu_custom_call.1} parent=47 // pred_check_branch
          %310 = sbr.rel (%p308) target = $region56
        $region55: #{tpu_custom_call.1} parent=47 // pred_region
          %312 = dma.done [#allocation8], 1024
        $region56: #{tpu_custom_call.1} parent=47 // pred_fallthru
          _
        // Predicated region
        $region57: #{tpu_custom_call.1} parent=47 // pred_check
          %p313 = pneg %p89
        $region58: #{tpu_custom_call.1} parent=47 // pred_check_branch
          %315 = sbr.rel (%p313) target = $region60
        $region59: #{tpu_custom_call.1} parent=47 // pred_region
          %317 = dma.done [#allocation8], 9216
        $region60: #{tpu_custom_call.1} parent=47 // pred_fallthru
          _
        // Predicated region
        $region61: #{tpu_custom_call.1} parent=47 // pred_check
          %p318 = pneg %p110
        $region62: #{tpu_custom_call.1} parent=47 // pred_check_branch
          %320 = sbr.rel (%p318) target = $region64
        $region63: #{tpu_custom_call.1} parent=47 // pred_region
          %322 = dma.done [#allocation11], 1024
        $region64: #{tpu_custom_call.1} parent=47 // pred_fallthru
          _
        %s323 = sand.u32 %s34, 1
        %s324 = scalar_lea.sflag [#allocation5], %s323
        %s325 = sand.u32 %s34, 1
        %s326 = smul.addr %s325, 128
        %s327 = scalar_lea.vmem [#allocation4], %s326
        %p328 = pneg %p47
        %p329 = pneg %p44
        %p330 = pneg %p68
        %p331 = pneg %p65
        %p332 = pneg %p89
        %p333 = pneg %p86
        %p334 = pneg %p110
        %p335 = pneg %p107
        %p336 = pneg %p131
        %p337 = pneg %p128
        %p338 = pneg %p152
        %p339 = pneg %p149
        %p340 = pneg %p173
        %p341 = pneg %p170
        %p342 = pneg %p199
        %p343 = pneg %p196
        %s344 = sand.u32 %s186, 1
        %s345 = scalar_lea.sflag [#allocation6], %s344
        %s346 = sand.u32 %s186, 1
        %s347 = smul.addr %s346, 128
        %s348 = scalar_lea.vmem [#allocation12], %s347
        %v350 = vld [vmem:[%s302] sm:$0xf]
        %v351 = vld [vmem:[%s302 + $0x4] sm:$0xf]
        %v352 = vld [vmem:[%s302 + $0x8] sm:$0xf]
        %v353 = vld [vmem:[%s302 + $0xc] sm:$0xf]
        %v354 = vld [vmem:[%s302 + $0x10] sm:$0xf]
        %v355 = vld [vmem:[%s302 + $0x14] sm:$0xf]
        %v356 = vld [vmem:[%s302 + $0x18] sm:$0xf]
        %v357 = vld [vmem:[%s302 + $0x1c] sm:$0xf]
        %v358 = vld [vmem:[%s302 + $0x20] sm:$0xf]
        %v359 = vld [vmem:[%s302 + $0x24] sm:$0xf]
        %v360 = vld [vmem:[%s302 + $0x28] sm:$0xf]
        %v361 = vld [vmem:[%s302 + $0x2c] sm:$0xf]
        %v362 = vld [vmem:[%s302 + $0x30] sm:$0xf]
        %v363 = vld [vmem:[%s302 + $0x34] sm:$0xf]
        %v364 = vld [vmem:[%s302 + $0x38] sm:$0xf]
        %v365 = vld [vmem:[%s302 + $0x3c] sm:$0xf]
        %v366 = vld [vmem:[%s302 + $0x40] sm:$0xf]
        %v367 = vld [vmem:[%s302 + $0x44] sm:$0xf]
        %v368 = vld [vmem:[%s302 + $0x48] sm:$0xf]
        %v369 = vld [vmem:[%s302 + $0x4c] sm:$0xf]
        %v370 = vld [vmem:[%s302 + $0x50] sm:$0xf]
        %v371 = vld [vmem:[%s302 + $0x54] sm:$0xf]
        %v372 = vld [vmem:[%s302 + $0x58] sm:$0xf]
        %v373 = vld [vmem:[%s302 + $0x5c] sm:$0xf]
        %v374 = vld [vmem:[%s302 + $0x60] sm:$0xf]
        %v375 = vld [vmem:[%s302 + $0x64] sm:$0xf]
        %v376 = vld [vmem:[%s302 + $0x68] sm:$0xf]
        %v377 = vld [vmem:[%s302 + $0x6c] sm:$0xf]
        %v378 = vld [vmem:[%s302 + $0x70] sm:$0xf]
        %v379 = vld [vmem:[%s302 + $0x74] sm:$0xf]
        %v380 = vld [vmem:[%s302 + $0x78] sm:$0xf]
        %v381 = vld [vmem:[%s302 + $0x7c] sm:$0xf]
        %v382 = vld [vmem:[#allocation7] sm:$0xf]
        %v383 = vld [vmem:[#allocation7 + $0x4] sm:$0xf]
        %v384 = vld [vmem:[#allocation7 + $0x8] sm:$0xf]
        %v385 = vld [vmem:[#allocation7 + $0xc] sm:$0xf]
        %v386 = vld [vmem:[#allocation7 + $0x10] sm:$0xf]
        %v387 = vld [vmem:[#allocation7 + $0x14] sm:$0xf]
        %v388 = vld [vmem:[#allocation7 + $0x18] sm:$0xf]
        %v389 = vld [vmem:[#allocation7 + $0x1c] sm:$0xf]
        %v390 = vld [vmem:[#allocation7 + $0x20] sm:$0xf]
        %v391 = vld [vmem:[#allocation7 + $0x24] sm:$0xf]
        %v392 = vld [vmem:[#allocation7 + $0x28] sm:$0xf]
        %v393 = vld [vmem:[#allocation7 + $0x2c] sm:$0xf]
        %v394 = vld [vmem:[#allocation7 + $0x30] sm:$0xf]
        %v395 = vld [vmem:[#allocation7 + $0x34] sm:$0xf]
        %v396 = vld [vmem:[#allocation7 + $0x38] sm:$0xf]
        %v397 = vld [vmem:[#allocation7 + $0x3c] sm:$0xf]
        %v398 = vld [vmem:[%s4] sm:$0x1]
        %v400 = vperm.slane %v398, 0
        %v434 = vunpack.c.l.b16 %v350
        %v435 = vunpack.c.l.b16 %v351
        %v436 = vunpack.c.l.b16 %v352
        %v437 = vunpack.c.l.b16 %v353
        %v438 = vunpack.c.l.b16 %v354
        %v439 = vunpack.c.l.b16 %v355
        %v440 = vunpack.c.l.b16 %v356
        %v441 = vunpack.c.l.b16 %v357
        %v442 = vunpack.c.l.b16 %v358
        %v443 = vunpack.c.l.b16 %v359
        %v444 = vunpack.c.l.b16 %v360
        %v445 = vunpack.c.l.b16 %v361
        %v446 = vunpack.c.l.b16 %v362
        %v447 = vunpack.c.l.b16 %v363
        %v448 = vunpack.c.l.b16 %v364
        %v449 = vunpack.c.l.b16 %v365
        %v450 = vunpack.c.l.b16 %v366
        %v451 = vunpack.c.l.b16 %v367
        %v452 = vunpack.c.l.b16 %v368
        %v453 = vunpack.c.l.b16 %v369
        %v454 = vunpack.c.l.b16 %v370
        %v455 = vunpack.c.l.b16 %v371
        %v456 = vunpack.c.l.b16 %v372
        %v457 = vunpack.c.l.b16 %v373
        %v458 = vunpack.c.l.b16 %v374
        %v459 = vunpack.c.l.b16 %v375
        %v460 = vunpack.c.l.b16 %v376
        %v461 = vunpack.c.l.b16 %v377
        %v462 = vunpack.c.l.b16 %v378
        %v463 = vunpack.c.l.b16 %v379
        %v464 = vunpack.c.l.b16 %v380
        %v465 = vunpack.c.l.b16 %v381
        %v466 = vpack.c.b16 %v435, %v434
        %v467 = vpack.c.b16 %v437, %v436
        %v468 = vpack.c.b16 %v439, %v438
        %v469 = vpack.c.b16 %v441, %v440
        %v470 = vpack.c.b16 %v443, %v442
        %v471 = vpack.c.b16 %v445, %v444
        %v472 = vpack.c.b16 %v447, %v446
        %v473 = vpack.c.b16 %v449, %v448
        %v474 = vpack.c.b16 %v451, %v450
        %v475 = vpack.c.b16 %v453, %v452
        %v476 = vpack.c.b16 %v455, %v454
        %v477 = vpack.c.b16 %v457, %v456
        %v478 = vpack.c.b16 %v459, %v458
        %v479 = vpack.c.b16 %v461, %v460
        %v480 = vpack.c.b16 %v463, %v462
        %v481 = vpack.c.b16 %v465, %v464
        %v514 = vunpack.c.l.b16 %v382
        %v515 = vunpack.c.l.b16 %v383
        %v516 = vunpack.c.l.b16 %v384
        %v517 = vunpack.c.l.b16 %v385
        %v518 = vunpack.c.l.b16 %v386
        %v519 = vunpack.c.l.b16 %v387
        %v520 = vunpack.c.l.b16 %v388
        %v521 = vunpack.c.l.b16 %v389
        %v522 = vunpack.c.l.b16 %v390
        %v523 = vunpack.c.l.b16 %v391
        %v524 = vunpack.c.l.b16 %v392
        %v525 = vunpack.c.l.b16 %v393
        %v526 = vunpack.c.l.b16 %v394
        %v527 = vunpack.c.l.b16 %v395
        %v528 = vunpack.c.l.b16 %v396
        %v529 = vunpack.c.l.b16 %v397
        %v530 = vpack.c.b16 %v515, %v514
        %v531 = vpack.c.b16 %v517, %v516
        %v532 = vpack.c.b16 %v519, %v518
        %v533 = vpack.c.b16 %v521, %v520
        %v534 = vpack.c.b16 %v523, %v522
        %v535 = vpack.c.b16 %v525, %v524
        %v536 = vpack.c.b16 %v527, %v526
        %v537 = vpack.c.b16 %v529, %v528
        %546 = vmatpush.bf16.msra.mxu0 %v537
        %547 = vmatpush.bf16.msra.mxu0 %v536
        %548 = vmatpush.bf16.msra.mxu0 %v535
        %549 = vmatpush.bf16.msra.mxu0 %v534
        %550 = vmatpush.bf16.msra.mxu0 %v533
        %551 = vmatpush.bf16.msra.mxu0 %v532
        %552 = vmatpush.bf16.msra.mxu0 %v531
        %553 = vmatpush.bf16.msra.mxu0 %v530
        %554 = vmatmul.bf16.gmra.mxu0 %v466
        %v555 = vpop.f32.mrf.mxu0
        %v556 = vadd.f32 %v400, %v555
        %v557 = vpop.f32.mrf.mxu0
        %v558 = vadd.f32 %v400, %v557
        %559 = vmatmul.bf16.gmra.mxu0 %v467
        %v560 = vpop.f32.mrf.mxu0
        %v561 = vadd.f32 %v400, %v560
        %v562 = vpop.f32.mrf.mxu0
        %v563 = vadd.f32 %v400, %v562
        %564 = vmatmul.bf16.gmra.mxu0 %v468
        %v565 = vpop.f32.mrf.mxu0
        %v566 = vadd.f32 %v400, %v565
        %v567 = vpop.f32.mrf.mxu0
        %v568 = vadd.f32 %v400, %v567
        %569 = vmatmul.bf16.gmra.mxu0 %v469
        %v570 = vpop.f32.mrf.mxu0
        %v571 = vadd.f32 %v400, %v570
        %v572 = vpop.f32.mrf.mxu0
        %v573 = vadd.f32 %v400, %v572
        %574 = vmatmul.bf16.gmra.mxu0 %v470
        %v575 = vpop.f32.mrf.mxu0
        %v576 = vadd.f32 %v400, %v575
        %v577 = vpop.f32.mrf.mxu0
        %v578 = vadd.f32 %v400, %v577
        %579 = vmatmul.bf16.gmra.mxu0 %v471
        %v580 = vpop.f32.mrf.mxu0
        %v581 = vadd.f32 %v400, %v580
        %v582 = vpop.f32.mrf.mxu0
        %v583 = vadd.f32 %v400, %v582
        %584 = vmatmul.bf16.gmra.mxu0 %v472
        %v585 = vpop.f32.mrf.mxu0
        %v586 = vadd.f32 %v400, %v585
        %v587 = vpop.f32.mrf.mxu0
        %v588 = vadd.f32 %v400, %v587
        %589 = vmatmul.bf16.gmra.mxu0 %v473
        %v590 = vpop.f32.mrf.mxu0
        %v591 = vadd.f32 %v400, %v590
        %v592 = vpop.f32.mrf.mxu0
        %v593 = vadd.f32 %v400, %v592
        %594 = vmatmul.bf16.gmra.mxu0 %v474
        %v595 = vpop.f32.mrf.mxu0
        %v596 = vadd.f32 %v400, %v595
        %v597 = vpop.f32.mrf.mxu0
        %v598 = vadd.f32 %v400, %v597
        %599 = vmatmul.bf16.gmra.mxu0 %v475
        %v600 = vpop.f32.mrf.mxu0
        %v601 = vadd.f32 %v400, %v600
        %v602 = vpop.f32.mrf.mxu0
        %v603 = vadd.f32 %v400, %v602
        %604 = vmatmul.bf16.gmra.mxu0 %v476
        %v605 = vpop.f32.mrf.mxu0
        %v606 = vadd.f32 %v400, %v605
        %v607 = vpop.f32.mrf.mxu0
        %v608 = vadd.f32 %v400, %v607
        %609 = vmatmul.bf16.gmra.mxu0 %v477
        %v610 = vpop.f32.mrf.mxu0
        %v611 = vadd.f32 %v400, %v610
        %v612 = vpop.f32.mrf.mxu0
        %v613 = vadd.f32 %v400, %v612
        %614 = vmatmul.bf16.gmra.mxu0 %v478
        %v615 = vpop.f32.mrf.mxu0
        %v616 = vadd.f32 %v400, %v615
        %v617 = vpop.f32.mrf.mxu0
        %v618 = vadd.f32 %v400, %v617
        %619 = vmatmul.bf16.gmra.mxu0 %v479
        %v620 = vpop.f32.mrf.mxu0
        %v621 = vadd.f32 %v400, %v620
        %v622 = vpop.f32.mrf.mxu0
        %v623 = vadd.f32 %v400, %v622
        %624 = vmatmul.bf16.gmra.mxu0 %v480
        %v625 = vpop.f32.mrf.mxu0
        %v626 = vadd.f32 %v400, %v625
        %v627 = vpop.f32.mrf.mxu0
        %v628 = vadd.f32 %v400, %v627
        %629 = vmatmul.bf16.gmra.mxu0 %v481
        %v630 = vpop.f32.mrf.mxu0
        %v631 = vadd.f32 %v400, %v630
        %v632 = vpop.f32.mrf.mxu0
        %v633 = vadd.f32 %v400, %v632
        %634 = vdwg.mxu0
        %v635 = vmax.f32 %v556, 0.0
        %v636 = vmax.f32 %v558, 0.0
        %v637 = vmax.f32 %v561, 0.0
        %v638 = vmax.f32 %v563, 0.0
        %v639 = vmax.f32 %v566, 0.0
        %v640 = vmax.f32 %v568, 0.0
        %v641 = vmax.f32 %v571, 0.0
        %v642 = vmax.f32 %v573, 0.0
        %v643 = vmax.f32 %v576, 0.0
        %v644 = vmax.f32 %v578, 0.0
        %v645 = vmax.f32 %v581, 0.0
        %v646 = vmax.f32 %v583, 0.0
        %v647 = vmax.f32 %v586, 0.0
        %v648 = vmax.f32 %v588, 0.0
        %v649 = vmax.f32 %v591, 0.0
        %v650 = vmax.f32 %v593, 0.0
        %v651 = vmax.f32 %v596, 0.0
        %v652 = vmax.f32 %v598, 0.0
        %v653 = vmax.f32 %v601, 0.0
        %v654 = vmax.f32 %v603, 0.0
        %v655 = vmax.f32 %v606, 0.0
        %v656 = vmax.f32 %v608, 0.0
        %v657 = vmax.f32 %v611, 0.0
        %v658 = vmax.f32 %v613, 0.0
        %v659 = vmax.f32 %v616, 0.0
        %v660 = vmax.f32 %v618, 0.0
        %v661 = vmax.f32 %v621, 0.0
        %v662 = vmax.f32 %v623, 0.0
        %v663 = vmax.f32 %v626, 0.0
        %v664 = vmax.f32 %v628, 0.0
        %v665 = vmax.f32 %v631, 0.0
        %v666 = vmax.f32 %v633, 0.0
        %vm667 = vcmask 1043459
        %vm668 = vsmask.f32 7950
        %vm669 = vmand %vm667, %vm668
        %v670 = vld [vmem:[#allocation2 + $0x4] sm:$0x8]
        %v671 = vsel %vm669, 0, %v670
        %672 = vst [vmem:[#allocation2 + $0x4] sm:$0x8] %v671
        %673 = vst [vmem:[#allocation2 + $0x8] sm:$0xf] 0
        %674 = vst [vmem:[#allocation2 + $0xc] sm:$0xf] 0
        %vm675 = vcmask 1040384
        %vm676 = vsmask.f32 256
        %vm677 = vmand %vm675, %vm676
        %v678 = vld [vmem:[#allocation2 + $0x10] sm:$0x1]
        %v679 = vsel %vm677, 0, %v678
        %680 = vst [vmem:[#allocation2 + $0x10] sm:$0x1] %v679
        %s681 = scalar_lea.vmem [#allocation2], 408
        %v682 = vld [vmem:[%s681 + $0x4] sm:$0x8]
        %v683 = vsel %vm669, 0, %v682
        %684 = vst [vmem:[%s681 + $0x4] sm:$0x8] %v683
        %685 = vst [vmem:[%s681 + $0x8] sm:$0xf] 0
        %686 = vst [vmem:[%s681 + $0xc] sm:$0xf] 0
        %v687 = vld [vmem:[%s681 + $0x10] sm:$0x1]
        %v688 = vsel %vm677, 0, %v687
        %689 = vst [vmem:[%s681 + $0x10] sm:$0x1] %v688
        %v690 = vld [vmem:[#allocation2 + $0x4] sm:$0x8]
        %v691 = vsel %vm669, 0, %v690
        %692 = vst [vmem:[#allocation2 + $0x4] sm:$0x8] %v691
        %v693 = vld [vmem:[#allocation2 + $0x1c] sm:$0x8]
        %v694 = vsel %vm669, 0, %v693
        %695 = vst [vmem:[#allocation2 + $0x1c] sm:$0x8] %v694
        %v696 = vld [vmem:[#allocation2 + $0x34] sm:$0x8]
        %v697 = vsel %vm669, 0, %v696
        %698 = vst [vmem:[#allocation2 + $0x34] sm:$0x8] %v697
        %v699 = vld [vmem:[#allocation2 + $0x4c] sm:$0x8]
        %v700 = vsel %vm669, 0, %v699
        %701 = vst [vmem:[#allocation2 + $0x4c] sm:$0x8] %v700
        %v702 = vld [vmem:[#allocation2 + $0x64] sm:$0x8]
        %v703 = vsel %vm669, 0, %v702
        %704 = vst [vmem:[#allocation2 + $0x64] sm:$0x8] %v703
        %v705 = vld [vmem:[#allocation2 + $0x7c] sm:$0x8]
        %v706 = vsel %vm669, 0, %v705
        %707 = vst [vmem:[#allocation2 + $0x7c] sm:$0x8] %v706
        %v708 = vld [vmem:[#allocation2 + $0x94] sm:$0x8]
        %v709 = vsel %vm669, 0, %v708
        %710 = vst [vmem:[#allocation2 + $0x94] sm:$0x8] %v709
        %v711 = vld [vmem:[#allocation2 + $0xac] sm:$0x8]
        %v712 = vsel %vm669, 0, %v711
        %713 = vst [vmem:[#allocation2 + $0xac] sm:$0x8] %v712
        %v714 = vld [vmem:[#allocation2 + $0xc4] sm:$0x8]
        %v715 = vsel %vm669, 0, %v714
        %716 = vst [vmem:[#allocation2 + $0xc4] sm:$0x8] %v715
        %v717 = vld [vmem:[#allocation2 + $0xdc] sm:$0x8]
        %v718 = vsel %vm669, 0, %v717
        %719 = vst [vmem:[#allocation2 + $0xdc] sm:$0x8] %v718
        %v720 = vld [vmem:[#allocation2 + $0xf4] sm:$0x8]
        %v721 = vsel %vm669, 0, %v720
        %722 = vst [vmem:[#allocation2 + $0xf4] sm:$0x8] %v721
        %v723 = vld [vmem:[#allocation2 + $0x10c] sm:$0x8]
        %v724 = vsel %vm669, 0, %v723
        %725 = vst [vmem:[#allocation2 + $0x10c] sm:$0x8] %v724
        %v726 = vld [vmem:[#allocation2 + $0x124] sm:$0x8]
        %v727 = vsel %vm669, 0, %v726
        %728 = vst [vmem:[#allocation2 + $0x124] sm:$0x8] %v727
        %v729 = vld [vmem:[#allocation2 + $0x13c] sm:$0x8]
        %v730 = vsel %vm669, 0, %v729
        %731 = vst [vmem:[#allocation2 + $0x13c] sm:$0x8] %v730
        %v732 = vld [vmem:[#allocation2 + $0x154] sm:$0x8]
        %v733 = vsel %vm669, 0, %v732
        %734 = vst [vmem:[#allocation2 + $0x154] sm:$0x8] %v733
        %v735 = vld [vmem:[#allocation2 + $0x16c] sm:$0x8]
        %v736 = vsel %vm669, 0, %v735
        %737 = vst [vmem:[#allocation2 + $0x16c] sm:$0x8] %v736
        %v738 = vld [vmem:[#allocation2 + $0x184] sm:$0x8]
        %v739 = vsel %vm669, 0, %v738
        %740 = vst [vmem:[#allocation2 + $0x184] sm:$0x8] %v739
        %v741 = vld [vmem:[#allocation2 + $0x19c] sm:$0x8]
        %v742 = vsel %vm669, 0, %v741
        %743 = vst [vmem:[#allocation2 + $0x19c] sm:$0x8] %v742
        %v744 = vld [vmem:[#allocation2 + $0x10] sm:$0x1]
        %v745 = vsel %vm677, 0, %v744
        %746 = vst [vmem:[#allocation2 + $0x10] sm:$0x1] %v745
        %v747 = vld [vmem:[#allocation2 + $0x28] sm:$0x1]
        %v748 = vsel %vm677, 0, %v747
        %749 = vst [vmem:[#allocation2 + $0x28] sm:$0x1] %v748
        %v750 = vld [vmem:[#allocation2 + $0x40] sm:$0x1]
        %v751 = vsel %vm677, 0, %v750
        %752 = vst [vmem:[#allocation2 + $0x40] sm:$0x1] %v751
        %v753 = vld [vmem:[#allocation2 + $0x58] sm:$0x1]
        %v754 = vsel %vm677, 0, %v753
        %755 = vst [vmem:[#allocation2 + $0x58] sm:$0x1] %v754
        %v756 = vld [vmem:[#allocation2 + $0x70] sm:$0x1]
        %v757 = vsel %vm677, 0, %v756
        %758 = vst [vmem:[#allocation2 + $0x70] sm:$0x1] %v757
        %v759 = vld [vmem:[#allocation2 + $0x88] sm:$0x1]
        %v760 = vsel %vm677, 0, %v759
        %761 = vst [vmem:[#allocation2 + $0x88] sm:$0x1] %v760
        %v762 = vld [vmem:[#allocation2 + $0xa0] sm:$0x1]
        %v763 = vsel %vm677, 0, %v762
        %764 = vst [vmem:[#allocation2 + $0xa0] sm:$0x1] %v763
        %v765 = vld [vmem:[#allocation2 + $0xb8] sm:$0x1]
        %v766 = vsel %vm677, 0, %v765
        %767 = vst [vmem:[#allocation2 + $0xb8] sm:$0x1] %v766
        %v768 = vld [vmem:[#allocation2 + $0xd0] sm:$0x1]
        %v769 = vsel %vm677, 0, %v768
        %770 = vst [vmem:[#allocation2 + $0xd0] sm:$0x1] %v769
        %v771 = vld [vmem:[#allocation2 + $0xe8] sm:$0x1]
        %v772 = vsel %vm677, 0, %v771
        %773 = vst [vmem:[#allocation2 + $0xe8] sm:$0x1] %v772
        %v774 = vld [vmem:[#allocation2 + $0x100] sm:$0x1]
        %v775 = vsel %vm677, 0, %v774
        %776 = vst [vmem:[#allocation2 + $0x100] sm:$0x1] %v775
        %v777 = vld [vmem:[#allocation2 + $0x118] sm:$0x1]
        %v778 = vsel %vm677, 0, %v777
        %779 = vst [vmem:[#allocation2 + $0x118] sm:$0x1] %v778
        %v780 = vld [vmem:[#allocation2 + $0x130] sm:$0x1]
        %v781 = vsel %vm677, 0, %v780
        %782 = vst [vmem:[#allocation2 + $0x130] sm:$0x1] %v781
        %v783 = vld [vmem:[#allocation2 + $0x148] sm:$0x1]
        %v784 = vsel %vm677, 0, %v783
        %785 = vst [vmem:[#allocation2 + $0x148] sm:$0x1] %v784
        %v786 = vld [vmem:[#allocation2 + $0x160] sm:$0x1]
        %v787 = vsel %vm677, 0, %v786
        %788 = vst [vmem:[#allocation2 + $0x160] sm:$0x1] %v787
        %v789 = vld [vmem:[#allocation2 + $0x178] sm:$0x1]
        %v790 = vsel %vm677, 0, %v789
        %791 = vst [vmem:[#allocation2 + $0x178] sm:$0x1] %v790
        %v792 = vld [vmem:[#allocation2 + $0x190] sm:$0x1]
        %v793 = vsel %vm677, 0, %v792
        %794 = vst [vmem:[#allocation2 + $0x190] sm:$0x1] %v793
        %v795 = vld [vmem:[#allocation2 + $0x1a8] sm:$0x1]
        %v796 = vsel %vm677, 0, %v795
        %797 = vst [vmem:[#allocation2 + $0x1a8] sm:$0x1] %v796
        %v798 = vpack.c.bf16 %v635, %v635
        %v799 = vpack.c.bf16 %v636, %v636
        %v800 = vpack.c.bf16 %v637, %v637
        %v801 = vpack.c.bf16 %v638, %v638
        %v802 = vpack.c.bf16 %v639, %v639
        %v803 = vpack.c.bf16 %v640, %v640
        %v804 = vpack.c.bf16 %v641, %v641
        %v805 = vpack.c.bf16 %v642, %v642
        %v806 = vpack.c.bf16 %v643, %v643
        %v807 = vpack.c.bf16 %v644, %v644
        %v808 = vpack.c.bf16 %v645, %v645
        %v809 = vpack.c.bf16 %v646, %v646
        %v810 = vpack.c.bf16 %v647, %v647
        %v811 = vpack.c.bf16 %v648, %v648
        %v812 = vpack.c.bf16 %v649, %v649
        %v813 = vpack.c.bf16 %v650, %v650
        %v814 = vpack.c.bf16 %v651, %v651
        %v815 = vpack.c.bf16 %v652, %v652
        %v816 = vpack.c.bf16 %v653, %v653
        %v817 = vpack.c.bf16 %v654, %v654
        %v818 = vpack.c.bf16 %v655, %v655
        %v819 = vpack.c.bf16 %v656, %v656
        %v820 = vpack.c.bf16 %v657, %v657
        %v821 = vpack.c.bf16 %v658, %v658
        %v822 = vpack.c.bf16 %v659, %v659
        %v823 = vpack.c.bf16 %v660, %v660
        %v824 = vpack.c.bf16 %v661, %v661
        %v825 = vpack.c.bf16 %v662, %v662
        %v826 = vpack.c.bf16 %v663, %v663
        %v827 = vpack.c.bf16 %v664, %v664
        %v828 = vpack.c.bf16 %v665, %v665
        %v829 = vpack.c.bf16 %v666, %v666
        %s830 = scalar_lea.vmem [#allocation2], 24
        %831 = vst [vmem:[%s830 + $0x8] sm:$0xf] %v798
        %832 = vst [vmem:[%s830 + $0xc] sm:$0xf] %v799
        %833 = vst [vmem:[%s830 + $0x20] sm:$0xf] %v800
        %834 = vst [vmem:[%s830 + $0x24] sm:$0xf] %v801
        %835 = vst [vmem:[%s830 + $0x38] sm:$0xf] %v802
        %836 = vst [vmem:[%s830 + $0x3c] sm:$0xf] %v803
        %837 = vst [vmem:[%s830 + $0x50] sm:$0xf] %v804
        %838 = vst [vmem:[%s830 + $0x54] sm:$0xf] %v805
        %839 = vst [vmem:[%s830 + $0x68] sm:$0xf] %v806
        %840 = vst [vmem:[%s830 + $0x6c] sm:$0xf] %v807
        %841 = vst [vmem:[%s830 + $0x80] sm:$0xf] %v808
        %842 = vst [vmem:[%s830 + $0x84] sm:$0xf] %v809
        %843 = vst [vmem:[%s830 + $0x98] sm:$0xf] %v810
        %844 = vst [vmem:[%s830 + $0x9c] sm:$0xf] %v811
        %845 = vst [vmem:[%s830 + $0xb0] sm:$0xf] %v812
        %846 = vst [vmem:[%s830 + $0xb4] sm:$0xf] %v813
        %847 = vst [vmem:[%s830 + $0xc8] sm:$0xf] %v814
        %848 = vst [vmem:[%s830 + $0xcc] sm:$0xf] %v815
        %849 = vst [vmem:[%s830 + $0xe0] sm:$0xf] %v816
        %850 = vst [vmem:[%s830 + $0xe4] sm:$0xf] %v817
        %851 = vst [vmem:[%s830 + $0xf8] sm:$0xf] %v818
        %852 = vst [vmem:[%s830 + $0xfc] sm:$0xf] %v819
        %853 = vst [vmem:[%s830 + $0x110] sm:$0xf] %v820
        %854 = vst [vmem:[%s830 + $0x114] sm:$0xf] %v821
        %855 = vst [vmem:[%s830 + $0x128] sm:$0xf] %v822
        %856 = vst [vmem:[%s830 + $0x12c] sm:$0xf] %v823
        %857 = vst [vmem:[%s830 + $0x140] sm:$0xf] %v824
        %858 = vst [vmem:[%s830 + $0x144] sm:$0xf] %v825
        %859 = vst [vmem:[%s830 + $0x158] sm:$0xf] %v826
        %860 = vst [vmem:[%s830 + $0x15c] sm:$0xf] %v827
        %861 = vst [vmem:[%s830 + $0x170] sm:$0xf] %v828
        %862 = vst [vmem:[%s830 + $0x174] sm:$0xf] %v829
        %v863 = vld [vmem:[#allocation2 + $0x4] sm:$0x8]
        %v864 = vld [vmem:[#allocation2 + $0x8] sm:$0xf]
        %v865 = vld [vmem:[#allocation2 + $0xc] sm:$0xf]
        %v866 = vld [vmem:[#allocation2 + $0x10] sm:$0x1]
        %v867 = vld [vmem:[#allocation2 + $0x1c] sm:$0x8]
        %v868 = vld [vmem:[#allocation2 + $0x20] sm:$0xf]
        %v869 = vld [vmem:[#allocation2 + $0x24] sm:$0xf]
        %v870 = vld [vmem:[#allocation2 + $0x28] sm:$0x1]
        %v871 = vld [vmem:[#allocation2 + $0x34] sm:$0x8]
        %v872 = vld [vmem:[#allocation2 + $0x38] sm:$0xf]
        %v873 = vld [vmem:[#allocation2 + $0x3c] sm:$0xf]
        %v874 = vld [vmem:[#allocation2 + $0x40] sm:$0x1]
        %v875 = vld [vmem:[#allocation2 + $0x4c] sm:$0x8]
        %v876 = vld [vmem:[#allocation2 + $0x50] sm:$0xf]
        %v877 = vld [vmem:[#allocation2 + $0x54] sm:$0xf]
        %v878 = vld [vmem:[#allocation2 + $0x58] sm:$0x1]
        %v879 = vld [vmem:[#allocation2 + $0x64] sm:$0x8]
        %v880 = vld [vmem:[#allocation2 + $0x68] sm:$0xf]
        %v881 = vld [vmem:[#allocation2 + $0x6c] sm:$0xf]
        %v882 = vld [vmem:[#allocation2 + $0x70] sm:$0x1]
        %v883 = vld [vmem:[#allocation2 + $0x7c] sm:$0x8]
        %v884 = vld [vmem:[#allocation2 + $0x80] sm:$0xf]
        %v885 = vld [vmem:[#allocation2 + $0x84] sm:$0xf]
        %v886 = vld [vmem:[#allocation2 + $0x88] sm:$0x1]
        %v887 = vld [vmem:[#allocation2 + $0x94] sm:$0x8]
        %v888 = vld [vmem:[#allocation2 + $0x98] sm:$0xf]
        %v889 = vld [vmem:[#allocation2 + $0x9c] sm:$0xf]
        %v890 = vld [vmem:[#allocation2 + $0xa0] sm:$0x1]
        %v891 = vld [vmem:[#allocation2 + $0xac] sm:$0x8]
        %v892 = vld [vmem:[#allocation2 + $0xb0] sm:$0xf]
        %v893 = vld [vmem:[#allocation2 + $0xb4] sm:$0xf]
        %v894 = vld [vmem:[#allocation2 + $0xb8] sm:$0x1]
        %v895 = vld [vmem:[#allocation2 + $0xc4] sm:$0x8]
        %v896 = vld [vmem:[#allocation2 + $0xc8] sm:$0xf]
        %v897 = vld [vmem:[#allocation2 + $0xcc] sm:$0xf]
        %v898 = vld [vmem:[#allocation2 + $0xd0] sm:$0x1]
        %v899 = vld [vmem:[#allocation2 + $0xdc] sm:$0x8]
        %v900 = vld [vmem:[#allocation2 + $0xe0] sm:$0xf]
        %v901 = vld [vmem:[#allocation2 + $0xe4] sm:$0xf]
        %v902 = vld [vmem:[#allocation2 + $0xe8] sm:$0x1]
        %v903 = vld [vmem:[#allocation2 + $0xf4] sm:$0x8]
        %v904 = vld [vmem:[#allocation2 + $0xf8] sm:$0xf]
        %v905 = vld [vmem:[#allocation2 + $0xfc] sm:$0xf]
        %v906 = vld [vmem:[#allocation2 + $0x100] sm:$0x1]
        %v907 = vld [vmem:[#allocation2 + $0x10c] sm:$0x8]
        %v908 = vld [vmem:[#allocation2 + $0x110] sm:$0xf]
        %v909 = vld [vmem:[#allocation2 + $0x114] sm:$0xf]
        %v910 = vld [vmem:[#allocation2 + $0x118] sm:$0x1]
        %v911 = vld [vmem:[#allocation2 + $0x124] sm:$0x8]
        %v912 = vld [vmem:[#allocation2 + $0x128] sm:$0xf]
        %v913 = vld [vmem:[#allocation2 + $0x12c] sm:$0xf]
        %v914 = vld [vmem:[#allocation2 + $0x130] sm:$0x1]
        %v915 = vld [vmem:[#allocation2 + $0x13c] sm:$0x8]
        %v916 = vld [vmem:[#allocation2 + $0x140] sm:$0xf]
        %v917 = vld [vmem:[#allocation2 + $0x144] sm:$0xf]
        %v918 = vld [vmem:[#allocation2 + $0x148] sm:$0x1]
        %v919 = vld [vmem:[#allocation2 + $0x154] sm:$0x8]
        %v920 = vld [vmem:[#allocation2 + $0x158] sm:$0xf]
        %v921 = vld [vmem:[#allocation2 + $0x15c] sm:$0xf]
        %v922 = vld [vmem:[#allocation2 + $0x160] sm:$0x1]
        %v923 = vld [vmem:[#allocation2 + $0x16c] sm:$0x8]
        %v924 = vld [vmem:[#allocation2 + $0x170] sm:$0xf]
        %v925 = vld [vmem:[#allocation2 + $0x174] sm:$0xf]
        %v926 = vld [vmem:[#allocation2 + $0x178] sm:$0x1]
        %v975 = vunpack.c.l.b16 %v863
        %v976 = vunpack.c.l.b16 %v864
        %v977 = vunpack.c.l.b16 %v865
        %v978 = vunpack.c.l.b16 %v867
        %v979 = vunpack.c.l.b16 %v868
        %v980 = vunpack.c.l.b16 %v869
        %v981 = vunpack.c.l.b16 %v871
        %v982 = vunpack.c.l.b16 %v872
        %v983 = vunpack.c.l.b16 %v873
        %v984 = vunpack.c.l.b16 %v875
        %v985 = vunpack.c.l.b16 %v876
        %v986 = vunpack.c.l.b16 %v877
        %v987 = vunpack.c.l.b16 %v879
        %v988 = vunpack.c.l.b16 %v880
        %v989 = vunpack.c.l.b16 %v881
        %v990 = vunpack.c.l.b16 %v883
        %v991 = vunpack.c.l.b16 %v884
        %v992 = vunpack.c.l.b16 %v885
        %v993 = vunpack.c.l.b16 %v887
        %v994 = vunpack.c.l.b16 %v888
        %v995 = vunpack.c.l.b16 %v889
        %v996 = vunpack.c.l.b16 %v891
        %v997 = vunpack.c.l.b16 %v892
        %v998 = vunpack.c.l.b16 %v893
        %v999 = vunpack.c.l.b16 %v895
        %v1000 = vunpack.c.l.b16 %v896
        %v1001 = vunpack.c.l.b16 %v897
        %v1002 = vunpack.c.l.b16 %v899
        %v1003 = vunpack.c.l.b16 %v900
        %v1004 = vunpack.c.l.b16 %v901
        %v1005 = vunpack.c.l.b16 %v903
        %v1006 = vunpack.c.l.b16 %v904
        %v1007 = vunpack.c.l.b16 %v905
        %v1008 = vunpack.c.l.b16 %v907
        %v1009 = vunpack.c.l.b16 %v908
        %v1010 = vunpack.c.l.b16 %v909
        %v1011 = vunpack.c.l.b16 %v911
        %v1012 = vunpack.c.l.b16 %v912
        %v1013 = vunpack.c.l.b16 %v913
        %v1014 = vunpack.c.l.b16 %v915
        %v1015 = vunpack.c.l.b16 %v916
        %v1016 = vunpack.c.l.b16 %v917
        %v1017 = vunpack.c.l.b16 %v919
        %v1018 = vunpack.c.l.b16 %v920
        %v1019 = vunpack.c.l.b16 %v921
        %v1020 = vunpack.c.l.b16 %v923
        %v1021 = vunpack.c.l.b16 %v924
        %v1022 = vunpack.c.l.b16 %v925
        %v1023 = vpack.c.b16 %v976, %v975
        %v1024 = vpack.c.b16 %v977, %v977
        %v1025 = vpack.c.b16 %v979, %v978
        %v1026 = vpack.c.b16 %v980, %v980
        %v1027 = vpack.c.b16 %v982, %v981
        %v1028 = vpack.c.b16 %v983, %v983
        %v1029 = vpack.c.b16 %v985, %v984
        %v1030 = vpack.c.b16 %v986, %v986
        %v1031 = vpack.c.b16 %v988, %v987
        %v1032 = vpack.c.b16 %v989, %v989
        %v1033 = vpack.c.b16 %v991, %v990
        %v1034 = vpack.c.b16 %v992, %v992
        %v1035 = vpack.c.b16 %v994, %v993
        %v1036 = vpack.c.b16 %v995, %v995
        %v1037 = vpack.c.b16 %v997, %v996
        %v1038 = vpack.c.b16 %v998, %v998
        %v1039 = vpack.c.b16 %v1000, %v999
        %v1040 = vpack.c.b16 %v1001, %v1001
        %v1041 = vpack.c.b16 %v1003, %v1002
        %v1042 = vpack.c.b16 %v1004, %v1004
        %v1043 = vpack.c.b16 %v1006, %v1005
        %v1044 = vpack.c.b16 %v1007, %v1007
        %v1045 = vpack.c.b16 %v1009, %v1008
        %v1046 = vpack.c.b16 %v1010, %v1010
        %v1047 = vpack.c.b16 %v1012, %v1011
        %v1048 = vpack.c.b16 %v1013, %v1013
        %v1049 = vpack.c.b16 %v1015, %v1014
        %v1050 = vpack.c.b16 %v1016, %v1016
        %v1051 = vpack.c.b16 %v1018, %v1017
        %v1052 = vpack.c.b16 %v1019, %v1019
        %v1053 = vpack.c.b16 %v1021, %v1020
        %v1054 = vpack.c.b16 %v1022, %v1022
        %v1055 = vpack.c.b16 %v977, %v976
        %v1056 = vpack.c.b16 %v980, %v979
        %v1057 = vpack.c.b16 %v983, %v982
        %v1058 = vpack.c.b16 %v986, %v985
        %v1059 = vpack.c.b16 %v989, %v988
        %v1060 = vpack.c.b16 %v992, %v991
        %v1061 = vpack.c.b16 %v995, %v994
        %v1062 = vpack.c.b16 %v998, %v997
        %v1063 = vpack.c.b16 %v1001, %v1000
        %v1064 = vpack.c.b16 %v1004, %v1003
        %v1065 = vpack.c.b16 %v1007, %v1006
        %v1066 = vpack.c.b16 %v1010, %v1009
        %v1067 = vpack.c.b16 %v1013, %v1012
        %v1068 = vpack.c.b16 %v1016, %v1015
        %v1069 = vpack.c.b16 %v1019, %v1018
        %v1070 = vpack.c.b16 %v1022, %v1021
        %v1072 = vshrl.u32 %v1055, 16
        %v1074 = vrot.slane %v1072, 4
        %v1075 = vshll.u32 %v1055, 16
        %v1077 = vrot.slane %v1075, 5
        %v1078 = vor.u32 %v1074, %v1077
        %v1080 = vshrl.u32 %v1056, 16
        %v1082 = vrot.slane %v1080, 4
        %v1083 = vshll.u32 %v1056, 16
        %v1085 = vrot.slane %v1083, 5
        %v1086 = vor.u32 %v1082, %v1085
        %v1088 = vshrl.u32 %v1057, 16
        %v1090 = vrot.slane %v1088, 4
        %v1091 = vshll.u32 %v1057, 16
        %v1093 = vrot.slane %v1091, 5
        %v1094 = vor.u32 %v1090, %v1093
        %v1096 = vshrl.u32 %v1058, 16
        %v1098 = vrot.slane %v1096, 4
        %v1099 = vshll.u32 %v1058, 16
        %v1101 = vrot.slane %v1099, 5
        %v1102 = vor.u32 %v1098, %v1101
        %v1104 = vshrl.u32 %v1059, 16
        %v1106 = vrot.slane %v1104, 4
        %v1107 = vshll.u32 %v1059, 16
        %v1109 = vrot.slane %v1107, 5
        %v1110 = vor.u32 %v1106, %v1109
        %v1112 = vshrl.u32 %v1060, 16
        %v1114 = vrot.slane %v1112, 4
        %v1115 = vshll.u32 %v1060, 16
        %v1117 = vrot.slane %v1115, 5
        %v1118 = vor.u32 %v1114, %v1117
        %v1120 = vshrl.u32 %v1061, 16
        %v1122 = vrot.slane %v1120, 4
        %v1123 = vshll.u32 %v1061, 16
        %v1125 = vrot.slane %v1123, 5
        %v1126 = vor.u32 %v1122, %v1125
        %v1128 = vshrl.u32 %v1062, 16
        %v1130 = vrot.slane %v1128, 4
        %v1131 = vshll.u32 %v1062, 16
        %v1133 = vrot.slane %v1131, 5
        %v1134 = vor.u32 %v1130, %v1133
        %v1136 = vshrl.u32 %v1063, 16
        %v1138 = vrot.slane %v1136, 4
        %v1139 = vshll.u32 %v1063, 16
        %v1141 = vrot.slane %v1139, 5
        %v1142 = vor.u32 %v1138, %v1141
        %v1144 = vshrl.u32 %v1064, 16
        %v1146 = vrot.slane %v1144, 4
        %v1147 = vshll.u32 %v1064, 16
        %v1149 = vrot.slane %v1147, 5
        %v1150 = vor.u32 %v1146, %v1149
        %v1152 = vshrl.u32 %v1065, 16
        %v1154 = vrot.slane %v1152, 4
        %v1155 = vshll.u32 %v1065, 16
        %v1157 = vrot.slane %v1155, 5
        %v1158 = vor.u32 %v1154, %v1157
        %v1160 = vshrl.u32 %v1066, 16
        %v1162 = vrot.slane %v1160, 4
        %v1163 = vshll.u32 %v1066, 16
        %v1165 = vrot.slane %v1163, 5
        %v1166 = vor.u32 %v1162, %v1165
        %v1168 = vshrl.u32 %v1067, 16
        %v1170 = vrot.slane %v1168, 4
        %v1171 = vshll.u32 %v1067, 16
        %v1173 = vrot.slane %v1171, 5
        %v1174 = vor.u32 %v1170, %v1173
        %v1176 = vshrl.u32 %v1068, 16
        %v1178 = vrot.slane %v1176, 4
        %v1179 = vshll.u32 %v1068, 16
        %v1181 = vrot.slane %v1179, 5
        %v1182 = vor.u32 %v1178, %v1181
        %v1184 = vshrl.u32 %v1069, 16
        %v1186 = vrot.slane %v1184, 4
        %v1187 = vshll.u32 %v1069, 16
        %v1189 = vrot.slane %v1187, 5
        %v1190 = vor.u32 %v1186, %v1189
        %v1192 = vshrl.u32 %v1070, 16
        %v1194 = vrot.slane %v1192, 4
        %v1195 = vshll.u32 %v1070, 16
        %v1197 = vrot.slane %v1195, 5
        %v1198 = vor.u32 %v1194, %v1197
        %v1215 = vunpack.c.l.b16 %v866
        %v1216 = vunpack.c.l.b16 %v870
        %v1217 = vunpack.c.l.b16 %v874
        %v1218 = vunpack.c.l.b16 %v878
        %v1219 = vunpack.c.l.b16 %v882
        %v1220 = vunpack.c.l.b16 %v886
        %v1221 = vunpack.c.l.b16 %v890
        %v1222 = vunpack.c.l.b16 %v894
        %v1223 = vunpack.c.l.b16 %v898
        %v1224 = vunpack.c.l.b16 %v902
        %v1225 = vunpack.c.l.b16 %v906
        %v1226 = vunpack.c.l.b16 %v910
        %v1227 = vunpack.c.l.b16 %v914
        %v1228 = vunpack.c.l.b16 %v918
        %v1229 = vunpack.c.l.b16 %v922
        %v1230 = vunpack.c.l.b16 %v926
        %v1231 = vpack.c.b16 %v1215, %v1215
        %v1232 = vpack.c.b16 %v1216, %v1216
        %v1233 = vpack.c.b16 %v1217, %v1217
        %v1234 = vpack.c.b16 %v1218, %v1218
        %v1235 = vpack.c.b16 %v1219, %v1219
        %v1236 = vpack.c.b16 %v1220, %v1220
        %v1237 = vpack.c.b16 %v1221, %v1221
        %v1238 = vpack.c.b16 %v1222, %v1222
        %v1239 = vpack.c.b16 %v1223, %v1223
        %v1240 = vpack.c.b16 %v1224, %v1224
        %v1241 = vpack.c.b16 %v1225, %v1225
        %v1242 = vpack.c.b16 %v1226, %v1226
        %v1243 = vpack.c.b16 %v1227, %v1227
        %v1244 = vpack.c.b16 %v1228, %v1228
        %v1245 = vpack.c.b16 %v1229, %v1229
        %v1246 = vpack.c.b16 %v1230, %v1230
        %vm1247 = vcmask 1042432
        %v1248 = vrot.slane %v1055, 5
        %v1249 = vrot.slane %v1231, 5
        %v1250 = vsel %vm1247, %v1248, %v1249
        %v1251 = vrot.slane %v1056, 5
        %v1252 = vrot.slane %v1232, 5
        %v1253 = vsel %vm1247, %v1251, %v1252
        %v1254 = vrot.slane %v1057, 5
        %v1255 = vrot.slane %v1233, 5
        %v1256 = vsel %vm1247, %v1254, %v1255
        %v1257 = vrot.slane %v1058, 5
        %v1258 = vrot.slane %v1234, 5
        %v1259 = vsel %vm1247, %v1257, %v1258
        %v1260 = vrot.slane %v1059, 5
        %v1261 = vrot.slane %v1235, 5
        %v1262 = vsel %vm1247, %v1260, %v1261
        %v1263 = vrot.slane %v1060, 5
        %v1264 = vrot.slane %v1236, 5
        %v1265 = vsel %vm1247, %v1263, %v1264
        %v1266 = vrot.slane %v1061, 5
        %v1267 = vrot.slane %v1237, 5
        %v1268 = vsel %vm1247, %v1266, %v1267
        %v1269 = vrot.slane %v1062, 5
        %v1270 = vrot.slane %v1238, 5
        %v1271 = vsel %vm1247, %v1269, %v1270
        %v1272 = vrot.slane %v1063, 5
        %v1273 = vrot.slane %v1239, 5
        %v1274 = vsel %vm1247, %v1272, %v1273
        %v1275 = vrot.slane %v1064, 5
        %v1276 = vrot.slane %v1240, 5
        %v1277 = vsel %vm1247, %v1275, %v1276
        %v1278 = vrot.slane %v1065, 5
        %v1279 = vrot.slane %v1241, 5
        %v1280 = vsel %vm1247, %v1278, %v1279
        %v1281 = vrot.slane %v1066, 5
        %v1282 = vrot.slane %v1242, 5
        %v1283 = vsel %vm1247, %v1281, %v1282
        %v1284 = vrot.slane %v1067, 5
        %v1285 = vrot.slane %v1243, 5
        %v1286 = vsel %vm1247, %v1284, %v1285
        %v1287 = vrot.slane %v1068, 5
        %v1288 = vrot.slane %v1244, 5
        %v1289 = vsel %vm1247, %v1287, %v1288
        %v1290 = vrot.slane %v1069, 5
        %v1291 = vrot.slane %v1245, 5
        %v1292 = vsel %vm1247, %v1290, %v1291
        %v1293 = vrot.slane %v1070, 5
        %v1294 = vrot.slane %v1246, 5
        %v1295 = vsel %vm1247, %v1293, %v1294
        %vm1296 = vsmask.f32 4352
        %v1298 = vshrl.u32 %v1023, 16
        %v1300 = vrot.slane %v1298, 3
        %v1301 = vshll.u32 %v1023, 16
        %v1303 = vrot.slane %v1301, 4
        %v1304 = vor.u32 %v1300, %v1303
        %v1306 = vshrl.u32 %v1024, 16
        %v1308 = vrot.slane %v1306, 3
        %v1309 = vshll.u32 %v1024, 16
        %v1311 = vrot.slane %v1309, 4
        %v1312 = vor.u32 %v1308, %v1311
        %v1313 = vsel %vm1296, %v1304, %v1312
        %v1315 = vshrl.u32 %v1078, 16
        %v1317 = vrot.slane %v1315, 3
        %v1318 = vshll.u32 %v1078, 16
        %v1320 = vrot.slane %v1318, 4
        %v1321 = vor.u32 %v1317, %v1320
        %v1322 = vsel %vm1296, %v1321, %v1321
        %v1324 = vshrl.u32 %v1248, 16
        %v1326 = vrot.slane %v1324, 3
        %v1327 = vshll.u32 %v1248, 16
        %v1329 = vrot.slane %v1327, 4
        %v1330 = vor.u32 %v1326, %v1329
        %v1332 = vshrl.u32 %v1250, 16
        %v1334 = vrot.slane %v1332, 3
        %v1335 = vshll.u32 %v1250, 16
        %v1337 = vrot.slane %v1335, 4
        %v1338 = vor.u32 %v1334, %v1337
        %v1339 = vsel %vm1296, %v1330, %v1338
        %v1341 = vshrl.u32 %v1025, 16
        %v1343 = vrot.slane %v1341, 3
        %v1344 = vshll.u32 %v1025, 16
        %v1346 = vrot.slane %v1344, 4
        %v1347 = vor.u32 %v1343, %v1346
        %v1349 = vshrl.u32 %v1026, 16
        %v1351 = vrot.slane %v1349, 3
        %v1352 = vshll.u32 %v1026, 16
        %v1354 = vrot.slane %v1352, 4
        %v1355 = vor.u32 %v1351, %v1354
        %v1356 = vsel %vm1296, %v1347, %v1355
        %v1358 = vshrl.u32 %v1086, 16
        %v1360 = vrot.slane %v1358, 3
        %v1361 = vshll.u32 %v1086, 16
        %v1363 = vrot.slane %v1361, 4
        %v1364 = vor.u32 %v1360, %v1363
        %v1365 = vsel %vm1296, %v1364, %v1364
        %v1367 = vshrl.u32 %v1251, 16
        %v1369 = vrot.slane %v1367, 3
        %v1370 = vshll.u32 %v1251, 16
        %v1372 = vrot.slane %v1370, 4
        %v1373 = vor.u32 %v1369, %v1372
        %v1375 = vshrl.u32 %v1253, 16
        %v1377 = vrot.slane %v1375, 3
        %v1378 = vshll.u32 %v1253, 16
        %v1380 = vrot.slane %v1378, 4
        %v1381 = vor.u32 %v1377, %v1380
        %v1382 = vsel %vm1296, %v1373, %v1381
        %v1384 = vshrl.u32 %v1027, 16
        %v1386 = vrot.slane %v1384, 3
        %v1387 = vshll.u32 %v1027, 16
        %v1389 = vrot.slane %v1387, 4
        %v1390 = vor.u32 %v1386, %v1389
        %v1392 = vshrl.u32 %v1028, 16
        %v1394 = vrot.slane %v1392, 3
        %v1395 = vshll.u32 %v1028, 16
        %v1397 = vrot.slane %v1395, 4
        %v1398 = vor.u32 %v1394, %v1397
        %v1399 = vsel %vm1296, %v1390, %v1398
        %v1401 = vshrl.u32 %v1094, 16
        %v1403 = vrot.slane %v1401, 3
        %v1404 = vshll.u32 %v1094, 16
        %v1406 = vrot.slane %v1404, 4
        %v1407 = vor.u32 %v1403, %v1406
        %v1408 = vsel %vm1296, %v1407, %v1407
        %v1410 = vshrl.u32 %v1254, 16
        %v1412 = vrot.slane %v1410, 3
        %v1413 = vshll.u32 %v1254, 16
        %v1415 = vrot.slane %v1413, 4
        %v1416 = vor.u32 %v1412, %v1415
        %v1418 = vshrl.u32 %v1256, 16
        %v1420 = vrot.slane %v1418, 3
        %v1421 = vshll.u32 %v1256, 16
        %v1423 = vrot.slane %v1421, 4
        %v1424 = vor.u32 %v1420, %v1423
        %v1425 = vsel %vm1296, %v1416, %v1424
        %v1427 = vshrl.u32 %v1029, 16
        %v1429 = vrot.slane %v1427, 3
        %v1430 = vshll.u32 %v1029, 16
        %v1432 = vrot.slane %v1430, 4
        %v1433 = vor.u32 %v1429, %v1432
        %v1435 = vshrl.u32 %v1030, 16
        %v1437 = vrot.slane %v1435, 3
        %v1438 = vshll.u32 %v1030, 16
        %v1440 = vrot.slane %v1438, 4
        %v1441 = vor.u32 %v1437, %v1440
        %v1442 = vsel %vm1296, %v1433, %v1441
        %v1444 = vshrl.u32 %v1102, 16
        %v1446 = vrot.slane %v1444, 3
        %v1447 = vshll.u32 %v1102, 16
        %v1449 = vrot.slane %v1447, 4
        %v1450 = vor.u32 %v1446, %v1449
        %v1451 = vsel %vm1296, %v1450, %v1450
        %v1453 = vshrl.u32 %v1257, 16
        %v1455 = vrot.slane %v1453, 3
        %v1456 = vshll.u32 %v1257, 16
        %v1458 = vrot.slane %v1456, 4
        %v1459 = vor.u32 %v1455, %v1458
        %v1461 = vshrl.u32 %v1259, 16
        %v1463 = vrot.slane %v1461, 3
        %v1464 = vshll.u32 %v1259, 16
        %v1466 = vrot.slane %v1464, 4
        %v1467 = vor.u32 %v1463, %v1466
        %v1468 = vsel %vm1296, %v1459, %v1467
        %v1470 = vshrl.u32 %v1031, 16
        %v1472 = vrot.slane %v1470, 3
        %v1473 = vshll.u32 %v1031, 16
        %v1475 = vrot.slane %v1473, 4
        %v1476 = vor.u32 %v1472, %v1475
        %v1478 = vshrl.u32 %v1032, 16
        %v1480 = vrot.slane %v1478, 3
        %v1481 = vshll.u32 %v1032, 16
        %v1483 = vrot.slane %v1481, 4
        %v1484 = vor.u32 %v1480, %v1483
        %v1485 = vsel %vm1296, %v1476, %v1484
        %v1487 = vshrl.u32 %v1110, 16
        %v1489 = vrot.slane %v1487, 3
        %v1490 = vshll.u32 %v1110, 16
        %v1492 = vrot.slane %v1490, 4
        %v1493 = vor.u32 %v1489, %v1492
        %v1494 = vsel %vm1296, %v1493, %v1493
        %v1496 = vshrl.u32 %v1260, 16
        %v1498 = vrot.slane %v1496, 3
        %v1499 = vshll.u32 %v1260, 16
        %v1501 = vrot.slane %v1499, 4
        %v1502 = vor.u32 %v1498, %v1501
        %v1504 = vshrl.u32 %v1262, 16
        %v1506 = vrot.slane %v1504, 3
        %v1507 = vshll.u32 %v1262, 16
        %v1509 = vrot.slane %v1507, 4
        %v1510 = vor.u32 %v1506, %v1509
        %v1511 = vsel %vm1296, %v1502, %v1510
        %v1513 = vshrl.u32 %v1033, 16
        %v1515 = vrot.slane %v1513, 3
        %v1516 = vshll.u32 %v1033, 16
        %v1518 = vrot.slane %v1516, 4
        %v1519 = vor.u32 %v1515, %v1518
        %v1521 = vshrl.u32 %v1034, 16
        %v1523 = vrot.slane %v1521, 3
        %v1524 = vshll.u32 %v1034, 16
        %v1526 = vrot.slane %v1524, 4
        %v1527 = vor.u32 %v1523, %v1526
        %v1528 = vsel %vm1296, %v1519, %v1527
        %v1530 = vshrl.u32 %v1118, 16
        %v1532 = vrot.slane %v1530, 3
        %v1533 = vshll.u32 %v1118, 16
        %v1535 = vrot.slane %v1533, 4
        %v1536 = vor.u32 %v1532, %v1535
        %v1537 = vsel %vm1296, %v1536, %v1536
        %v1539 = vshrl.u32 %v1263, 16
        %v1541 = vrot.slane %v1539, 3
        %v1542 = vshll.u32 %v1263, 16
        %v1544 = vrot.slane %v1542, 4
        %v1545 = vor.u32 %v1541, %v1544
        %v1547 = vshrl.u32 %v1265, 16
        %v1549 = vrot.slane %v1547, 3
        %v1550 = vshll.u32 %v1265, 16
        %v1552 = vrot.slane %v1550, 4
        %v1553 = vor.u32 %v1549, %v1552
        %v1554 = vsel %vm1296, %v1545, %v1553
        %v1556 = vshrl.u32 %v1035, 16
        %v1558 = vrot.slane %v1556, 3
        %v1559 = vshll.u32 %v1035, 16
        %v1561 = vrot.slane %v1559, 4
        %v1562 = vor.u32 %v1558, %v1561
        %v1564 = vshrl.u32 %v1036, 16
        %v1566 = vrot.slane %v1564, 3
        %v1567 = vshll.u32 %v1036, 16
        %v1569 = vrot.slane %v1567, 4
        %v1570 = vor.u32 %v1566, %v1569
        %v1571 = vsel %vm1296, %v1562, %v1570
        %v1573 = vshrl.u32 %v1126, 16
        %v1575 = vrot.slane %v1573, 3
        %v1576 = vshll.u32 %v1126, 16
        %v1578 = vrot.slane %v1576, 4
        %v1579 = vor.u32 %v1575, %v1578
        %v1580 = vsel %vm1296, %v1579, %v1579
        %v1582 = vshrl.u32 %v1266, 16
        %v1584 = vrot.slane %v1582, 3
        %v1585 = vshll.u32 %v1266, 16
        %v1587 = vrot.slane %v1585, 4
        %v1588 = vor.u32 %v1584, %v1587
        %v1590 = vshrl.u32 %v1268, 16
        %v1592 = vrot.slane %v1590, 3
        %v1593 = vshll.u32 %v1268, 16
        %v1595 = vrot.slane %v1593, 4
        %v1596 = vor.u32 %v1592, %v1595
        %v1597 = vsel %vm1296, %v1588, %v1596
        %v1599 = vshrl.u32 %v1037, 16
        %v1601 = vrot.slane %v1599, 3
        %v1602 = vshll.u32 %v1037, 16
        %v1604 = vrot.slane %v1602, 4
        %v1605 = vor.u32 %v1601, %v1604
        %v1607 = vshrl.u32 %v1038, 16
        %v1609 = vrot.slane %v1607, 3
        %v1610 = vshll.u32 %v1038, 16
        %v1612 = vrot.slane %v1610, 4
        %v1613 = vor.u32 %v1609, %v1612
        %v1614 = vsel %vm1296, %v1605, %v1613
        %v1616 = vshrl.u32 %v1134, 16
        %v1618 = vrot.slane %v1616, 3
        %v1619 = vshll.u32 %v1134, 16
        %v1621 = vrot.slane %v1619, 4
        %v1622 = vor.u32 %v1618, %v1621
        %v1623 = vsel %vm1296, %v1622, %v1622
        %v1625 = vshrl.u32 %v1269, 16
        %v1627 = vrot.slane %v1625, 3
        %v1628 = vshll.u32 %v1269, 16
        %v1630 = vrot.slane %v1628, 4
        %v1631 = vor.u32 %v1627, %v1630
        %v1633 = vshrl.u32 %v1271, 16
        %v1635 = vrot.slane %v1633, 3
        %v1636 = vshll.u32 %v1271, 16
        %v1638 = vrot.slane %v1636, 4
        %v1639 = vor.u32 %v1635, %v1638
        %v1640 = vsel %vm1296, %v1631, %v1639
        %v1642 = vshrl.u32 %v1039, 16
        %v1644 = vrot.slane %v1642, 3
        %v1645 = vshll.u32 %v1039, 16
        %v1647 = vrot.slane %v1645, 4
        %v1648 = vor.u32 %v1644, %v1647
        %v1650 = vshrl.u32 %v1040, 16
        %v1652 = vrot.slane %v1650, 3
        %v1653 = vshll.u32 %v1040, 16
        %v1655 = vrot.slane %v1653, 4
        %v1656 = vor.u32 %v1652, %v1655
        %v1657 = vsel %vm1296, %v1648, %v1656
        %v1659 = vshrl.u32 %v1142, 16
        %v1661 = vrot.slane %v1659, 3
        %v1662 = vshll.u32 %v1142, 16
        %v1664 = vrot.slane %v1662, 4
        %v1665 = vor.u32 %v1661, %v1664
        %v1666 = vsel %vm1296, %v1665, %v1665
        %v1668 = vshrl.u32 %v1272, 16
        %v1670 = vrot.slane %v1668, 3
        %v1671 = vshll.u32 %v1272, 16
        %v1673 = vrot.slane %v1671, 4
        %v1674 = vor.u32 %v1670, %v1673
        %v1676 = vshrl.u32 %v1274, 16
        %v1678 = vrot.slane %v1676, 3
        %v1679 = vshll.u32 %v1274, 16
        %v1681 = vrot.slane %v1679, 4
        %v1682 = vor.u32 %v1678, %v1681
        %v1683 = vsel %vm1296, %v1674, %v1682
        %v1685 = vshrl.u32 %v1041, 16
        %v1687 = vrot.slane %v1685, 3
        %v1688 = vshll.u32 %v1041, 16
        %v1690 = vrot.slane %v1688, 4
        %v1691 = vor.u32 %v1687, %v1690
        %v1693 = vshrl.u32 %v1042, 16
        %v1695 = vrot.slane %v1693, 3
        %v1696 = vshll.u32 %v1042, 16
        %v1698 = vrot.slane %v1696, 4
        %v1699 = vor.u32 %v1695, %v1698
        %v1700 = vsel %vm1296, %v1691, %v1699
        %v1702 = vshrl.u32 %v1150, 16
        %v1704 = vrot.slane %v1702, 3
        %v1705 = vshll.u32 %v1150, 16
        %v1707 = vrot.slane %v1705, 4
        %v1708 = vor.u32 %v1704, %v1707
        %v1709 = vsel %vm1296, %v1708, %v1708
        %v1711 = vshrl.u32 %v1275, 16
        %v1713 = vrot.slane %v1711, 3
        %v1714 = vshll.u32 %v1275, 16
        %v1716 = vrot.slane %v1714, 4
        %v1717 = vor.u32 %v1713, %v1716
        %v1719 = vshrl.u32 %v1277, 16
        %v1721 = vrot.slane %v1719, 3
        %v1722 = vshll.u32 %v1277, 16
        %v1724 = vrot.slane %v1722, 4
        %v1725 = vor.u32 %v1721, %v1724
        %v1726 = vsel %vm1296, %v1717, %v1725
        %v1728 = vshrl.u32 %v1043, 16
        %v1730 = vrot.slane %v1728, 3
        %v1731 = vshll.u32 %v1043, 16
        %v1733 = vrot.slane %v1731, 4
        %v1734 = vor.u32 %v1730, %v1733
        %v1736 = vshrl.u32 %v1044, 16
        %v1738 = vrot.slane %v1736, 3
        %v1739 = vshll.u32 %v1044, 16
        %v1741 = vrot.slane %v1739, 4
        %v1742 = vor.u32 %v1738, %v1741
        %v1743 = vsel %vm1296, %v1734, %v1742
        %v1745 = vshrl.u32 %v1158, 16
        %v1747 = vrot.slane %v1745, 3
        %v1748 = vshll.u32 %v1158, 16
        %v1750 = vrot.slane %v1748, 4
        %v1751 = vor.u32 %v1747, %v1750
        %v1752 = vsel %vm1296, %v1751, %v1751
        %v1754 = vshrl.u32 %v1278, 16
        %v1756 = vrot.slane %v1754, 3
        %v1757 = vshll.u32 %v1278, 16
        %v1759 = vrot.slane %v1757, 4
        %v1760 = vor.u32 %v1756, %v1759
        %v1762 = vshrl.u32 %v1280, 16
        %v1764 = vrot.slane %v1762, 3
        %v1765 = vshll.u32 %v1280, 16
        %v1767 = vrot.slane %v1765, 4
        %v1768 = vor.u32 %v1764, %v1767
        %v1769 = vsel %vm1296, %v1760, %v1768
        %v1771 = vshrl.u32 %v1045, 16
        %v1773 = vrot.slane %v1771, 3
        %v1774 = vshll.u32 %v1045, 16
        %v1776 = vrot.slane %v1774, 4
        %v1777 = vor.u32 %v1773, %v1776
        %v1779 = vshrl.u32 %v1046, 16
        %v1781 = vrot.slane %v1779, 3
        %v1782 = vshll.u32 %v1046, 16
        %v1784 = vrot.slane %v1782, 4
        %v1785 = vor.u32 %v1781, %v1784
        %v1786 = vsel %vm1296, %v1777, %v1785
        %v1788 = vshrl.u32 %v1166, 16
        %v1790 = vrot.slane %v1788, 3
        %v1791 = vshll.u32 %v1166, 16
        %v1793 = vrot.slane %v1791, 4
        %v1794 = vor.u32 %v1790, %v1793
        %v1795 = vsel %vm1296, %v1794, %v1794
        %v1797 = vshrl.u32 %v1281, 16
        %v1799 = vrot.slane %v1797, 3
        %v1800 = vshll.u32 %v1281, 16
        %v1802 = vrot.slane %v1800, 4
        %v1803 = vor.u32 %v1799, %v1802
        %v1805 = vshrl.u32 %v1283, 16
        %v1807 = vrot.slane %v1805, 3
        %v1808 = vshll.u32 %v1283, 16
        %v1810 = vrot.slane %v1808, 4
        %v1811 = vor.u32 %v1807, %v1810
        %v1812 = vsel %vm1296, %v1803, %v1811
        %v1814 = vshrl.u32 %v1047, 16
        %v1816 = vrot.slane %v1814, 3
        %v1817 = vshll.u32 %v1047, 16
        %v1819 = vrot.slane %v1817, 4
        %v1820 = vor.u32 %v1816, %v1819
        %v1822 = vshrl.u32 %v1048, 16
        %v1824 = vrot.slane %v1822, 3
        %v1825 = vshll.u32 %v1048, 16
        %v1827 = vrot.slane %v1825, 4
        %v1828 = vor.u32 %v1824, %v1827
        %v1829 = vsel %vm1296, %v1820, %v1828
        %v1831 = vshrl.u32 %v1174, 16
        %v1833 = vrot.slane %v1831, 3
        %v1834 = vshll.u32 %v1174, 16
        %v1836 = vrot.slane %v1834, 4
        %v1837 = vor.u32 %v1833, %v1836
        %v1838 = vsel %vm1296, %v1837, %v1837
        %v1840 = vshrl.u32 %v1284, 16
        %v1842 = vrot.slane %v1840, 3
        %v1843 = vshll.u32 %v1284, 16
        %v1845 = vrot.slane %v1843, 4
        %v1846 = vor.u32 %v1842, %v1845
        %v1848 = vshrl.u32 %v1286, 16
        %v1850 = vrot.slane %v1848, 3
        %v1851 = vshll.u32 %v1286, 16
        %v1853 = vrot.slane %v1851, 4
        %v1854 = vor.u32 %v1850, %v1853
        %v1855 = vsel %vm1296, %v1846, %v1854
        %v1857 = vshrl.u32 %v1049, 16
        %v1859 = vrot.slane %v1857, 3
        %v1860 = vshll.u32 %v1049, 16
        %v1862 = vrot.slane %v1860, 4
        %v1863 = vor.u32 %v1859, %v1862
        %v1865 = vshrl.u32 %v1050, 16
        %v1867 = vrot.slane %v1865, 3
        %v1868 = vshll.u32 %v1050, 16
        %v1870 = vrot.slane %v1868, 4
        %v1871 = vor.u32 %v1867, %v1870
        %v1872 = vsel %vm1296, %v1863, %v1871
        %v1874 = vshrl.u32 %v1182, 16
        %v1876 = vrot.slane %v1874, 3
        %v1877 = vshll.u32 %v1182, 16
        %v1879 = vrot.slane %v1877, 4
        %v1880 = vor.u32 %v1876, %v1879
        %v1881 = vsel %vm1296, %v1880, %v1880
        %v1883 = vshrl.u32 %v1287, 16
        %v1885 = vrot.slane %v1883, 3
        %v1886 = vshll.u32 %v1287, 16
        %v1888 = vrot.slane %v1886, 4
        %v1889 = vor.u32 %v1885, %v1888
        %v1891 = vshrl.u32 %v1289, 16
        %v1893 = vrot.slane %v1891, 3
        %v1894 = vshll.u32 %v1289, 16
        %v1896 = vrot.slane %v1894, 4
        %v1897 = vor.u32 %v1893, %v1896
        %v1898 = vsel %vm1296, %v1889, %v1897
        %v1900 = vshrl.u32 %v1051, 16
        %v1902 = vrot.slane %v1900, 3
        %v1903 = vshll.u32 %v1051, 16
        %v1905 = vrot.slane %v1903, 4
        %v1906 = vor.u32 %v1902, %v1905
        %v1908 = vshrl.u32 %v1052, 16
        %v1910 = vrot.slane %v1908, 3
        %v1911 = vshll.u32 %v1052, 16
        %v1913 = vrot.slane %v1911, 4
        %v1914 = vor.u32 %v1910, %v1913
        %v1915 = vsel %vm1296, %v1906, %v1914
        %v1917 = vshrl.u32 %v1190, 16
        %v1919 = vrot.slane %v1917, 3
        %v1920 = vshll.u32 %v1190, 16
        %v1922 = vrot.slane %v1920, 4
        %v1923 = vor.u32 %v1919, %v1922
        %v1924 = vsel %vm1296, %v1923, %v1923
        %v1926 = vshrl.u32 %v1290, 16
        %v1928 = vrot.slane %v1926, 3
        %v1929 = vshll.u32 %v1290, 16
        %v1931 = vrot.slane %v1929, 4
        %v1932 = vor.u32 %v1928, %v1931
        %v1934 = vshrl.u32 %v1292, 16
        %v1936 = vrot.slane %v1934, 3
        %v1937 = vshll.u32 %v1292, 16
        %v1939 = vrot.slane %v1937, 4
        %v1940 = vor.u32 %v1936, %v1939
        %v1941 = vsel %vm1296, %v1932, %v1940
        %v1943 = vshrl.u32 %v1053, 16
        %v1945 = vrot.slane %v1943, 3
        %v1946 = vshll.u32 %v1053, 16
        %v1948 = vrot.slane %v1946, 4
        %v1949 = vor.u32 %v1945, %v1948
        %v1951 = vshrl.u32 %v1054, 16
        %v1953 = vrot.slane %v1951, 3
        %v1954 = vshll.u32 %v1054, 16
        %v1956 = vrot.slane %v1954, 4
        %v1957 = vor.u32 %v1953, %v1956
        %v1958 = vsel %vm1296, %v1949, %v1957
        %v1960 = vshrl.u32 %v1198, 16
        %v1962 = vrot.slane %v1960, 3
        %v1963 = vshll.u32 %v1198, 16
        %v1965 = vrot.slane %v1963, 4
        %v1966 = vor.u32 %v1962, %v1965
        %v1967 = vsel %vm1296, %v1966, %v1966
        %v1969 = vshrl.u32 %v1293, 16
        %v1971 = vrot.slane %v1969, 3
        %v1972 = vshll.u32 %v1293, 16
        %v1974 = vrot.slane %v1972, 4
        %v1975 = vor.u32 %v1971, %v1974
        %v1977 = vshrl.u32 %v1295, 16
        %v1979 = vrot.slane %v1977, 3
        %v1980 = vshll.u32 %v1295, 16
        %v1982 = vrot.slane %v1980, 4
        %v1983 = vor.u32 %v1979, %v1982
        %v1984 = vsel %vm1296, %v1975, %v1983
        %v2033 = vld [vmem:[#allocation9] sm:$0xf]
        %v2034 = vld [vmem:[#allocation9 + $0x4] sm:$0xf]
        %v2035 = vld [vmem:[#allocation9 + $0x8] sm:$0xf]
        %v2036 = vld [vmem:[#allocation9 + $0xc] sm:$0xf]
        %v2037 = vld [vmem:[#allocation9 + $0x10] sm:$0xf]
        %v2038 = vld [vmem:[#allocation9 + $0x14] sm:$0xf]
        %v2039 = vld [vmem:[#allocation9 + $0x18] sm:$0xf]
        %v2040 = vld [vmem:[#allocation9 + $0x1c] sm:$0xf]
        %v2041 = vld [vmem:[#allocation9 + $0x20] sm:$0xf]
        %v2042 = vld [vmem:[#allocation9 + $0x24] sm:$0xf]
        %v2043 = vld [vmem:[#allocation9 + $0x28] sm:$0xf]
        %v2044 = vld [vmem:[#allocation9 + $0x2c] sm:$0xf]
        %v2045 = vld [vmem:[#allocation9 + $0x30] sm:$0xf]
        %v2046 = vld [vmem:[#allocation9 + $0x34] sm:$0xf]
        %v2047 = vld [vmem:[#allocation9 + $0x38] sm:$0xf]
        %v2048 = vld [vmem:[#allocation9 + $0x3c] sm:$0xf]
        %v2049 = vld [vmem:[#allocation9 + $0x40] sm:$0xf]
        %v2050 = vld [vmem:[#allocation9 + $0x44] sm:$0xf]
        %v2051 = vld [vmem:[#allocation9 + $0x48] sm:$0xf]
        %v2052 = vld [vmem:[#allocation9 + $0x4c] sm:$0xf]
        %v2053 = vld [vmem:[#allocation9 + $0x50] sm:$0xf]
        %v2054 = vld [vmem:[#allocation9 + $0x54] sm:$0xf]
        %v2055 = vld [vmem:[#allocation9 + $0x58] sm:$0xf]
        %v2056 = vld [vmem:[#allocation9 + $0x5c] sm:$0xf]
        %v2057 = vld [vmem:[#allocation9 + $0x60] sm:$0xf]
        %v2058 = vld [vmem:[#allocation9 + $0x64] sm:$0xf]
        %v2059 = vld [vmem:[#allocation9 + $0x68] sm:$0xf]
        %v2060 = vld [vmem:[#allocation9 + $0x6c] sm:$0xf]
        %v2061 = vld [vmem:[#allocation9 + $0x70] sm:$0xf]
        %v2062 = vld [vmem:[#allocation9 + $0x74] sm:$0xf]
        %v2063 = vld [vmem:[#allocation9 + $0x78] sm:$0xf]
        %v2064 = vld [vmem:[#allocation9 + $0x7c] sm:$0xf]
        %v2065 = vld [vmem:[#allocation9 + $0x80] sm:$0xf]
        %v2066 = vld [vmem:[#allocation9 + $0x84] sm:$0xf]
        %v2067 = vld [vmem:[#allocation9 + $0x88] sm:$0xf]
        %v2068 = vld [vmem:[#allocation9 + $0x8c] sm:$0xf]
        %v2069 = vld [vmem:[#allocation9 + $0x90] sm:$0xf]
        %v2070 = vld [vmem:[#allocation9 + $0x94] sm:$0xf]
        %v2071 = vld [vmem:[#allocation9 + $0x98] sm:$0xf]
        %v2072 = vld [vmem:[#allocation9 + $0x9c] sm:$0xf]
        %v2073 = vld [vmem:[#allocation9 + $0xa0] sm:$0xf]
        %v2074 = vld [vmem:[#allocation9 + $0xa4] sm:$0xf]
        %v2075 = vld [vmem:[#allocation9 + $0xa8] sm:$0xf]
        %v2076 = vld [vmem:[#allocation9 + $0xac] sm:$0xf]
        %v2077 = vld [vmem:[#allocation9 + $0xb0] sm:$0xf]
        %v2078 = vld [vmem:[#allocation9 + $0xb4] sm:$0xf]
        %v2079 = vld [vmem:[#allocation9 + $0xb8] sm:$0xf]
        %v2080 = vld [vmem:[#allocation9 + $0xbc] sm:$0xf]
        %v2129 = vunpack.c.l.b16 %v2033
        %v2130 = vunpack.c.l.b16 %v2034
        %v2131 = vunpack.c.l.b16 %v2035
        %v2132 = vunpack.c.l.b16 %v2036
        %v2133 = vunpack.c.l.b16 %v2037
        %v2134 = vunpack.c.l.b16 %v2038
        %v2135 = vunpack.c.l.b16 %v2039
        %v2136 = vunpack.c.l.b16 %v2040
        %v2137 = vunpack.c.l.b16 %v2041
        %v2138 = vunpack.c.l.b16 %v2042
        %v2139 = vunpack.c.l.b16 %v2043
        %v2140 = vunpack.c.l.b16 %v2044
        %v2141 = vunpack.c.l.b16 %v2045
        %v2142 = vunpack.c.l.b16 %v2046
        %v2143 = vunpack.c.l.b16 %v2047
        %v2144 = vunpack.c.l.b16 %v2048
        %v2145 = vunpack.c.l.b16 %v2049
        %v2146 = vunpack.c.l.b16 %v2050
        %v2147 = vunpack.c.l.b16 %v2051
        %v2148 = vunpack.c.l.b16 %v2052
        %v2149 = vunpack.c.l.b16 %v2053
        %v2150 = vunpack.c.l.b16 %v2054
        %v2151 = vunpack.c.l.b16 %v2055
        %v2152 = vunpack.c.l.b16 %v2056
        %v2153 = vunpack.c.l.b16 %v2057
        %v2154 = vunpack.c.l.b16 %v2058
        %v2155 = vunpack.c.l.b16 %v2059
        %v2156 = vunpack.c.l.b16 %v2060
        %v2157 = vunpack.c.l.b16 %v2061
        %v2158 = vunpack.c.l.b16 %v2062
        %v2159 = vunpack.c.l.b16 %v2063
        %v2160 = vunpack.c.l.b16 %v2064
        %v2161 = vunpack.c.l.b16 %v2065
        %v2162 = vunpack.c.l.b16 %v2066
        %v2163 = vunpack.c.l.b16 %v2067
        %v2164 = vunpack.c.l.b16 %v2068
        %v2165 = vunpack.c.l.b16 %v2069
        %v2166 = vunpack.c.l.b16 %v2070
        %v2167 = vunpack.c.l.b16 %v2071
        %v2168 = vunpack.c.l.b16 %v2072
        %v2169 = vunpack.c.l.b16 %v2073
        %v2170 = vunpack.c.l.b16 %v2074
        %v2171 = vunpack.c.l.b16 %v2075
        %v2172 = vunpack.c.l.b16 %v2076
        %v2173 = vunpack.c.l.b16 %v2077
        %v2174 = vunpack.c.l.b16 %v2078
        %v2175 = vunpack.c.l.b16 %v2079
        %v2176 = vunpack.c.l.b16 %v2080
        %v2177 = vpack.c.b16 %v2130, %v2129
        %v2178 = vpack.c.b16 %v2132, %v2131
        %v2179 = vpack.c.b16 %v2134, %v2133
        %v2180 = vpack.c.b16 %v2136, %v2135
        %v2181 = vpack.c.b16 %v2138, %v2137
        %v2182 = vpack.c.b16 %v2140, %v2139
        %v2183 = vpack.c.b16 %v2142, %v2141
        %v2184 = vpack.c.b16 %v2144, %v2143
        %v2185 = vpack.c.b16 %v2146, %v2145
        %v2186 = vpack.c.b16 %v2148, %v2147
        %v2187 = vpack.c.b16 %v2150, %v2149
        %v2188 = vpack.c.b16 %v2152, %v2151
        %v2189 = vpack.c.b16 %v2154, %v2153
        %v2190 = vpack.c.b16 %v2156, %v2155
        %v2191 = vpack.c.b16 %v2158, %v2157
        %v2192 = vpack.c.b16 %v2160, %v2159
        %v2193 = vpack.c.b16 %v2162, %v2161
        %v2194 = vpack.c.b16 %v2164, %v2163
        %v2195 = vpack.c.b16 %v2166, %v2165
        %v2196 = vpack.c.b16 %v2168, %v2167
        %v2197 = vpack.c.b16 %v2170, %v2169
        %v2198 = vpack.c.b16 %v2172, %v2171
        %v2199 = vpack.c.b16 %v2174, %v2173
        %v2200 = vpack.c.b16 %v2176, %v2175
        %2225 = vmatpush.bf16.msra.mxu0 %v2184
        %2226 = vmatpush.bf16.msra.mxu0 %v2183
        %2227 = vmatpush.bf16.msra.mxu0 %v2182
        %2228 = vmatpush.bf16.msra.mxu0 %v2181
        %2229 = vmatpush.bf16.msra.mxu0 %v2180
        %2230 = vmatpush.bf16.msra.mxu0 %v2179
        %2231 = vmatpush.bf16.msra.mxu0 %v2178
        %2232 = vmatpush.bf16.msra.mxu0 %v2177
        %2233 = vmatmul.bf16.gmra.mxu0 %v1313
        %v2234 = vpop.f32.mrf.mxu0
        %v2235 = vadd.f32 0.0, %v2234
        %v2236 = vpop.f32.mrf.mxu0
        %v2237 = vadd.f32 0.0, %v2236
        %2238 = vmatmul.bf16.gmra.mxu0 %v1356
        %v2239 = vpop.f32.mrf.mxu0
        %v2240 = vadd.f32 0.0, %v2239
        %v2241 = vpop.f32.mrf.mxu0
        %v2242 = vadd.f32 0.0, %v2241
        %2243 = vmatmul.bf16.gmra.mxu0 %v1399
        %v2244 = vpop.f32.mrf.mxu0
        %v2245 = vadd.f32 0.0, %v2244
        %v2246 = vpop.f32.mrf.mxu0
        %v2247 = vadd.f32 0.0, %v2246
        %2248 = vmatmul.bf16.gmra.mxu0 %v1442
        %v2249 = vpop.f32.mrf.mxu0
        %v2250 = vadd.f32 0.0, %v2249
        %v2251 = vpop.f32.mrf.mxu0
        %v2252 = vadd.f32 0.0, %v2251
        %2253 = vmatmul.bf16.gmra.mxu0 %v1485
        %v2254 = vpop.f32.mrf.mxu0
        %v2255 = vadd.f32 0.0, %v2254
        %v2256 = vpop.f32.mrf.mxu0
        %v2257 = vadd.f32 0.0, %v2256
        %2258 = vmatmul.bf16.gmra.mxu0 %v1528
        %v2259 = vpop.f32.mrf.mxu0
        %v2260 = vadd.f32 0.0, %v2259
        %v2261 = vpop.f32.mrf.mxu0
        %v2262 = vadd.f32 0.0, %v2261
        %2263 = vmatmul.bf16.gmra.mxu0 %v1571
        %v2264 = vpop.f32.mrf.mxu0
        %v2265 = vadd.f32 0.0, %v2264
        %v2266 = vpop.f32.mrf.mxu0
        %v2267 = vadd.f32 0.0, %v2266
        %2268 = vmatmul.bf16.gmra.mxu0 %v1614
        %v2269 = vpop.f32.mrf.mxu0
        %v2270 = vadd.f32 0.0, %v2269
        %v2271 = vpop.f32.mrf.mxu0
        %v2272 = vadd.f32 0.0, %v2271
        %2273 = vmatmul.bf16.gmra.mxu0 %v1657
        %v2274 = vpop.f32.mrf.mxu0
        %v2275 = vadd.f32 0.0, %v2274
        %v2276 = vpop.f32.mrf.mxu0
        %v2277 = vadd.f32 0.0, %v2276
        %2278 = vmatmul.bf16.gmra.mxu0 %v1700
        %v2279 = vpop.f32.mrf.mxu0
        %v2280 = vadd.f32 0.0, %v2279
        %v2281 = vpop.f32.mrf.mxu0
        %v2282 = vadd.f32 0.0, %v2281
        %2283 = vmatmul.bf16.gmra.mxu0 %v1743
        %v2284 = vpop.f32.mrf.mxu0
        %v2285 = vadd.f32 0.0, %v2284
        %v2286 = vpop.f32.mrf.mxu0
        %v2287 = vadd.f32 0.0, %v2286
        %2288 = vmatmul.bf16.gmra.mxu0 %v1786
        %v2289 = vpop.f32.mrf.mxu0
        %v2290 = vadd.f32 0.0, %v2289
        %v2291 = vpop.f32.mrf.mxu0
        %v2292 = vadd.f32 0.0, %v2291
        %2293 = vmatmul.bf16.gmra.mxu0 %v1829
        %v2294 = vpop.f32.mrf.mxu0
        %v2295 = vadd.f32 0.0, %v2294
        %v2296 = vpop.f32.mrf.mxu0
        %v2297 = vadd.f32 0.0, %v2296
        %2298 = vmatmul.bf16.gmra.mxu0 %v1872
        %v2299 = vpop.f32.mrf.mxu0
        %v2300 = vadd.f32 0.0, %v2299
        %v2301 = vpop.f32.mrf.mxu0
        %v2302 = vadd.f32 0.0, %v2301
        %2303 = vmatmul.bf16.gmra.mxu0 %v1915
        %v2304 = vpop.f32.mrf.mxu0
        %v2305 = vadd.f32 0.0, %v2304
        %v2306 = vpop.f32.mrf.mxu0
        %v2307 = vadd.f32 0.0, %v2306
        %2308 = vmatmul.bf16.gmra.mxu0 %v1958
        %v2309 = vpop.f32.mrf.mxu0
        %v2310 = vadd.f32 0.0, %v2309
        %v2311 = vpop.f32.mrf.mxu0
        %v2312 = vadd.f32 0.0, %v2311
        %2313 = vdwg.mxu0
        %2314 = vmatpush.bf16.msra.mxu0 %v2192
        %2315 = vmatpush.bf16.msra.mxu0 %v2191
        %2316 = vmatpush.bf16.msra.mxu0 %v2190
        %2317 = vmatpush.bf16.msra.mxu0 %v2189
        %2318 = vmatpush.bf16.msra.mxu0 %v2188
        %2319 = vmatpush.bf16.msra.mxu0 %v2187
        %2320 = vmatpush.bf16.msra.mxu0 %v2186
        %2321 = vmatpush.bf16.msra.mxu0 %v2185
        %2322 = vmatmul.bf16.gmra.mxu0 %v1322
        %v2323 = vpop.f32.mrf.mxu0
        %v2324 = vadd.f32 %v2235, %v2323
        %v2325 = vpop.f32.mrf.mxu0
        %v2326 = vadd.f32 %v2237, %v2325
        %2327 = vmatmul.bf16.gmra.mxu0 %v1365
        %v2328 = vpop.f32.mrf.mxu0
        %v2329 = vadd.f32 %v2240, %v2328
        %v2330 = vpop.f32.mrf.mxu0
        %v2331 = vadd.f32 %v2242, %v2330
        %2332 = vmatmul.bf16.gmra.mxu0 %v1408
        %v2333 = vpop.f32.mrf.mxu0
        %v2334 = vadd.f32 %v2245, %v2333
        %v2335 = vpop.f32.mrf.mxu0
        %v2336 = vadd.f32 %v2247, %v2335
        %2337 = vmatmul.bf16.gmra.mxu0 %v1451
        %v2338 = vpop.f32.mrf.mxu0
        %v2339 = vadd.f32 %v2250, %v2338
        %v2340 = vpop.f32.mrf.mxu0
        %v2341 = vadd.f32 %v2252, %v2340
        %2342 = vmatmul.bf16.gmra.mxu0 %v1494
        %v2343 = vpop.f32.mrf.mxu0
        %v2344 = vadd.f32 %v2255, %v2343
        %v2345 = vpop.f32.mrf.mxu0
        %v2346 = vadd.f32 %v2257, %v2345
        %2347 = vmatmul.bf16.gmra.mxu0 %v1537
        %v2348 = vpop.f32.mrf.mxu0
        %v2349 = vadd.f32 %v2260, %v2348
        %v2350 = vpop.f32.mrf.mxu0
        %v2351 = vadd.f32 %v2262, %v2350
        %2352 = vmatmul.bf16.gmra.mxu0 %v1580
        %v2353 = vpop.f32.mrf.mxu0
        %v2354 = vadd.f32 %v2265, %v2353
        %v2355 = vpop.f32.mrf.mxu0
        %v2356 = vadd.f32 %v2267, %v2355
        %2357 = vmatmul.bf16.gmra.mxu0 %v1623
        %v2358 = vpop.f32.mrf.mxu0
        %v2359 = vadd.f32 %v2270, %v2358
        %v2360 = vpop.f32.mrf.mxu0
        %v2361 = vadd.f32 %v2272, %v2360
        %2362 = vmatmul.bf16.gmra.mxu0 %v1666
        %v2363 = vpop.f32.mrf.mxu0
        %v2364 = vadd.f32 %v2275, %v2363
        %v2365 = vpop.f32.mrf.mxu0
        %v2366 = vadd.f32 %v2277, %v2365
        %2367 = vmatmul.bf16.gmra.mxu0 %v1709
        %v2368 = vpop.f32.mrf.mxu0
        %v2369 = vadd.f32 %v2280, %v2368
        %v2370 = vpop.f32.mrf.mxu0
        %v2371 = vadd.f32 %v2282, %v2370
        %2372 = vmatmul.bf16.gmra.mxu0 %v1752
        %v2373 = vpop.f32.mrf.mxu0
        %v2374 = vadd.f32 %v2285, %v2373
        %v2375 = vpop.f32.mrf.mxu0
        %v2376 = vadd.f32 %v2287, %v2375
        %2377 = vmatmul.bf16.gmra.mxu0 %v1795
        %v2378 = vpop.f32.mrf.mxu0
        %v2379 = vadd.f32 %v2290, %v2378
        %v2380 = vpop.f32.mrf.mxu0
        %v2381 = vadd.f32 %v2292, %v2380
        %2382 = vmatmul.bf16.gmra.mxu0 %v1838
        %v2383 = vpop.f32.mrf.mxu0
        %v2384 = vadd.f32 %v2295, %v2383
        %v2385 = vpop.f32.mrf.mxu0
        %v2386 = vadd.f32 %v2297, %v2385
        %2387 = vmatmul.bf16.gmra.mxu0 %v1881
        %v2388 = vpop.f32.mrf.mxu0
        %v2389 = vadd.f32 %v2300, %v2388
        %v2390 = vpop.f32.mrf.mxu0
        %v2391 = vadd.f32 %v2302, %v2390
        %2392 = vmatmul.bf16.gmra.mxu0 %v1924
        %v2393 = vpop.f32.mrf.mxu0
        %v2394 = vadd.f32 %v2305, %v2393
        %v2395 = vpop.f32.mrf.mxu0
        %v2396 = vadd.f32 %v2307, %v2395
        %2397 = vmatmul.bf16.gmra.mxu0 %v1967
        %v2398 = vpop.f32.mrf.mxu0
        %v2399 = vadd.f32 %v2310, %v2398
        %v2400 = vpop.f32.mrf.mxu0
        %v2401 = vadd.f32 %v2312, %v2400
        %2402 = vdwg.mxu0
        %2403 = vmatpush.bf16.msra.mxu0 %v2200
        %2404 = vmatpush.bf16.msra.mxu0 %v2199
        %2405 = vmatpush.bf16.msra.mxu0 %v2198
        %2406 = vmatpush.bf16.msra.mxu0 %v2197
        %2407 = vmatpush.bf16.msra.mxu0 %v2196
        %2408 = vmatpush.bf16.msra.mxu0 %v2195
        %2409 = vmatpush.bf16.msra.mxu0 %v2194
        %2410 = vmatpush.bf16.msra.mxu0 %v2193
        %2411 = vmatmul.bf16.gmra.mxu0 %v1339
        %v2412 = vpop.f32.mrf.mxu0
        %v2413 = vadd.f32 %v2324, %v2412
        %v2414 = vpop.f32.mrf.mxu0
        %v2415 = vadd.f32 %v2326, %v2414
        %2416 = vmatmul.bf16.gmra.mxu0 %v1382
        %v2417 = vpop.f32.mrf.mxu0
        %v2418 = vadd.f32 %v2329, %v2417
        %v2419 = vpop.f32.mrf.mxu0
        %v2420 = vadd.f32 %v2331, %v2419
        %2421 = vmatmul.bf16.gmra.mxu0 %v1425
        %v2422 = vpop.f32.mrf.mxu0
        %v2423 = vadd.f32 %v2334, %v2422
        %v2424 = vpop.f32.mrf.mxu0
        %v2425 = vadd.f32 %v2336, %v2424
        %2426 = vmatmul.bf16.gmra.mxu0 %v1468
        %v2427 = vpop.f32.mrf.mxu0
        %v2428 = vadd.f32 %v2339, %v2427
        %v2429 = vpop.f32.mrf.mxu0
        %v2430 = vadd.f32 %v2341, %v2429
        %2431 = vmatmul.bf16.gmra.mxu0 %v1511
        %v2432 = vpop.f32.mrf.mxu0
        %v2433 = vadd.f32 %v2344, %v2432
        %v2434 = vpop.f32.mrf.mxu0
        %v2435 = vadd.f32 %v2346, %v2434
        %2436 = vmatmul.bf16.gmra.mxu0 %v1554
        %v2437 = vpop.f32.mrf.mxu0
        %v2438 = vadd.f32 %v2349, %v2437
        %v2439 = vpop.f32.mrf.mxu0
        %v2440 = vadd.f32 %v2351, %v2439
        %2441 = vmatmul.bf16.gmra.mxu0 %v1597
        %v2442 = vpop.f32.mrf.mxu0
        %v2443 = vadd.f32 %v2354, %v2442
        %v2444 = vpop.f32.mrf.mxu0
        %v2445 = vadd.f32 %v2356, %v2444
        %2446 = vmatmul.bf16.gmra.mxu0 %v1640
        %v2447 = vpop.f32.mrf.mxu0
        %v2448 = vadd.f32 %v2359, %v2447
        %v2449 = vpop.f32.mrf.mxu0
        %v2450 = vadd.f32 %v2361, %v2449
        %2451 = vmatmul.bf16.gmra.mxu0 %v1683
        %v2452 = vpop.f32.mrf.mxu0
        %v2453 = vadd.f32 %v2364, %v2452
        %v2454 = vpop.f32.mrf.mxu0
        %v2455 = vadd.f32 %v2366, %v2454
        %2456 = vmatmul.bf16.gmra.mxu0 %v1726
        %v2457 = vpop.f32.mrf.mxu0
        %v2458 = vadd.f32 %v2369, %v2457
        %v2459 = vpop.f32.mrf.mxu0
        %v2460 = vadd.f32 %v2371, %v2459
        %2461 = vmatmul.bf16.gmra.mxu0 %v1769
        %v2462 = vpop.f32.mrf.mxu0
        %v2463 = vadd.f32 %v2374, %v2462
        %v2464 = vpop.f32.mrf.mxu0
        %v2465 = vadd.f32 %v2376, %v2464
        %2466 = vmatmul.bf16.gmra.mxu0 %v1812
        %v2467 = vpop.f32.mrf.mxu0
        %v2468 = vadd.f32 %v2379, %v2467
        %v2469 = vpop.f32.mrf.mxu0
        %v2470 = vadd.f32 %v2381, %v2469
        %2471 = vmatmul.bf16.gmra.mxu0 %v1855
        %v2472 = vpop.f32.mrf.mxu0
        %v2473 = vadd.f32 %v2384, %v2472
        %v2474 = vpop.f32.mrf.mxu0
        %v2475 = vadd.f32 %v2386, %v2474
        %2476 = vmatmul.bf16.gmra.mxu0 %v1898
        %v2477 = vpop.f32.mrf.mxu0
        %v2478 = vadd.f32 %v2389, %v2477
        %v2479 = vpop.f32.mrf.mxu0
        %v2480 = vadd.f32 %v2391, %v2479
        %2481 = vmatmul.bf16.gmra.mxu0 %v1941
        %v2482 = vpop.f32.mrf.mxu0
        %v2483 = vadd.f32 %v2394, %v2482
        %v2484 = vpop.f32.mrf.mxu0
        %v2485 = vadd.f32 %v2396, %v2484
        %2486 = vmatmul.bf16.gmra.mxu0 %v1984
        %v2487 = vpop.f32.mrf.mxu0
        %v2488 = vadd.f32 %v2399, %v2487
        %v2489 = vpop.f32.mrf.mxu0
        %v2490 = vadd.f32 %v2401, %v2489
        %2491 = vdwg.mxu0
        %2492 = vst [vmem:[#allocation3] sm:$0xff] %v2413
        %2493 = vst [vmem:[#allocation3 + $0x8] sm:$0xff] %v2415
        %2494 = vst [vmem:[#allocation3 + $0x10] sm:$0xff] %v2418
        %2495 = vst [vmem:[#allocation3 + $0x18] sm:$0xff] %v2420
        %2496 = vst [vmem:[#allocation3 + $0x20] sm:$0xff] %v2423
        %2497 = vst [vmem:[#allocation3 + $0x28] sm:$0xff] %v2425
        %2498 = vst [vmem:[#allocation3 + $0x30] sm:$0xff] %v2428
        %2499 = vst [vmem:[#allocation3 + $0x38] sm:$0xff] %v2430
        %2500 = vst [vmem:[#allocation3 + $0x40] sm:$0xff] %v2433
        %2501 = vst [vmem:[#allocation3 + $0x48] sm:$0xff] %v2435
        %2502 = vst [vmem:[#allocation3 + $0x50] sm:$0xff] %v2438
        %2503 = vst [vmem:[#allocation3 + $0x58] sm:$0xff] %v2440
        %2504 = vst [vmem:[#allocation3 + $0x60] sm:$0xff] %v2443
        %2505 = vst [vmem:[#allocation3 + $0x68] sm:$0xff] %v2445
        %2506 = vst [vmem:[#allocation3 + $0x70] sm:$0xff] %v2448
        %2507 = vst [vmem:[#allocation3 + $0x78] sm:$0xff] %v2450
        %2508 = vst [vmem:[#allocation3 + $0x80] sm:$0xff] %v2453
        %2509 = vst [vmem:[#allocation3 + $0x88] sm:$0xff] %v2455
        %2510 = vst [vmem:[#allocation3 + $0x90] sm:$0xff] %v2458
        %2511 = vst [vmem:[#allocation3 + $0x98] sm:$0xff] %v2460
        %2512 = vst [vmem:[#allocation3 + $0xa0] sm:$0xff] %v2463
        %2513 = vst [vmem:[#allocation3 + $0xa8] sm:$0xff] %v2465
        %2514 = vst [vmem:[#allocation3 + $0xb0] sm:$0xff] %v2468
        %2515 = vst [vmem:[#allocation3 + $0xb8] sm:$0xff] %v2470
        %2516 = vst [vmem:[#allocation3 + $0xc0] sm:$0xff] %v2473
        %2517 = vst [vmem:[#allocation3 + $0xc8] sm:$0xff] %v2475
        %2518 = vst [vmem:[#allocation3 + $0xd0] sm:$0xff] %v2478
        %2519 = vst [vmem:[#allocation3 + $0xd8] sm:$0xff] %v2480
        %2520 = vst [vmem:[#allocation3 + $0xe0] sm:$0xff] %v2483
        %2521 = vst [vmem:[#allocation3 + $0xe8] sm:$0xff] %v2485
        %2522 = vst [vmem:[#allocation3 + $0xf0] sm:$0xff] %v2488
        %2523 = vst [vmem:[#allocation3 + $0xf8] sm:$0xff] %v2490
        %v2524 = vld [vmem:[%s830 + $0x4] sm:$0x8]
        %v2525 = vld [vmem:[%s830 + $0x8] sm:$0xf]
        %v2526 = vld [vmem:[%s830 + $0xc] sm:$0xf]
        %v2527 = vld [vmem:[%s830 + $0x10] sm:$0x1]
        %v2528 = vld [vmem:[%s830 + $0x1c] sm:$0x8]
        %v2529 = vld [vmem:[%s830 + $0x20] sm:$0xf]
        %v2530 = vld [vmem:[%s830 + $0x24] sm:$0xf]
        %v2531 = vld [vmem:[%s830 + $0x28] sm:$0x1]
        %v2532 = vld [vmem:[%s830 + $0x34] sm:$0x8]
        %v2533 = vld [vmem:[%s830 + $0x38] sm:$0xf]
        %v2534 = vld [vmem:[%s830 + $0x3c] sm:$0xf]
        %v2535 = vld [vmem:[%s830 + $0x40] sm:$0x1]
        %v2536 = vld [vmem:[%s830 + $0x4c] sm:$0x8]
        %v2537 = vld [vmem:[%s830 + $0x50] sm:$0xf]
        %v2538 = vld [vmem:[%s830 + $0x54] sm:$0xf]
        %v2539 = vld [vmem:[%s830 + $0x58] sm:$0x1]
        %v2540 = vld [vmem:[%s830 + $0x64] sm:$0x8]
        %v2541 = vld [vmem:[%s830 + $0x68] sm:$0xf]
        %v2542 = vld [vmem:[%s830 + $0x6c] sm:$0xf]
        %v2543 = vld [vmem:[%s830 + $0x70] sm:$0x1]
        %v2544 = vld [vmem:[%s830 + $0x7c] sm:$0x8]
        %v2545 = vld [vmem:[%s830 + $0x80] sm:$0xf]
        %v2546 = vld [vmem:[%s830 + $0x84] sm:$0xf]
        %v2547 = vld [vmem:[%s830 + $0x88] sm:$0x1]
        %v2548 = vld [vmem:[%s830 + $0x94] sm:$0x8]
        %v2549 = vld [vmem:[%s830 + $0x98] sm:$0xf]
        %v2550 = vld [vmem:[%s830 + $0x9c] sm:$0xf]
        %v2551 = vld [vmem:[%s830 + $0xa0] sm:$0x1]
        %v2552 = vld [vmem:[%s830 + $0xac] sm:$0x8]
        %v2553 = vld [vmem:[%s830 + $0xb0] sm:$0xf]
        %v2554 = vld [vmem:[%s830 + $0xb4] sm:$0xf]
        %v2555 = vld [vmem:[%s830 + $0xb8] sm:$0x1]
        %v2556 = vld [vmem:[%s830 + $0xc4] sm:$0x8]
        %v2557 = vld [vmem:[%s830 + $0xc8] sm:$0xf]
        %v2558 = vld [vmem:[%s830 + $0xcc] sm:$0xf]
        %v2559 = vld [vmem:[%s830 + $0xd0] sm:$0x1]
        %v2560 = vld [vmem:[%s830 + $0xdc] sm:$0x8]
        %v2561 = vld [vmem:[%s830 + $0xe0] sm:$0xf]
        %v2562 = vld [vmem:[%s830 + $0xe4] sm:$0xf]
        %v2563 = vld [vmem:[%s830 + $0xe8] sm:$0x1]
        %v2564 = vld [vmem:[%s830 + $0xf4] sm:$0x8]
        %v2565 = vld [vmem:[%s830 + $0xf8] sm:$0xf]
        %v2566 = vld [vmem:[%s830 + $0xfc] sm:$0xf]
        %v2567 = vld [vmem:[%s830 + $0x100] sm:$0x1]
        %v2568 = vld [vmem:[%s830 + $0x10c] sm:$0x8]
        %v2569 = vld [vmem:[%s830 + $0x110] sm:$0xf]
        %v2570 = vld [vmem:[%s830 + $0x114] sm:$0xf]
        %v2571 = vld [vmem:[%s830 + $0x118] sm:$0x1]
        %v2572 = vld [vmem:[%s830 + $0x124] sm:$0x8]
        %v2573 = vld [vmem:[%s830 + $0x128] sm:$0xf]
        %v2574 = vld [vmem:[%s830 + $0x12c] sm:$0xf]
        %v2575 = vld [vmem:[%s830 + $0x130] sm:$0x1]
        %v2576 = vld [vmem:[%s830 + $0x13c] sm:$0x8]
        %v2577 = vld [vmem:[%s830 + $0x140] sm:$0xf]
        %v2578 = vld [vmem:[%s830 + $0x144] sm:$0xf]
        %v2579 = vld [vmem:[%s830 + $0x148] sm:$0x1]
        %v2580 = vld [vmem:[%s830 + $0x154] sm:$0x8]
        %v2581 = vld [vmem:[%s830 + $0x158] sm:$0xf]
        %v2582 = vld [vmem:[%s830 + $0x15c] sm:$0xf]
        %v2583 = vld [vmem:[%s830 + $0x160] sm:$0x1]
        %v2584 = vld [vmem:[%s830 + $0x16c] sm:$0x8]
        %v2585 = vld [vmem:[%s830 + $0x170] sm:$0xf]
        %v2586 = vld [vmem:[%s830 + $0x174] sm:$0xf]
        %v2587 = vld [vmem:[%s830 + $0x178] sm:$0x1]
        %v2636 = vunpack.c.l.b16 %v2524
        %v2637 = vunpack.c.l.b16 %v2525
        %v2638 = vunpack.c.l.b16 %v2526
        %v2639 = vunpack.c.l.b16 %v2528
        %v2640 = vunpack.c.l.b16 %v2529
        %v2641 = vunpack.c.l.b16 %v2530
        %v2642 = vunpack.c.l.b16 %v2532
        %v2643 = vunpack.c.l.b16 %v2533
        %v2644 = vunpack.c.l.b16 %v2534
        %v2645 = vunpack.c.l.b16 %v2536
        %v2646 = vunpack.c.l.b16 %v2537
        %v2647 = vunpack.c.l.b16 %v2538
        %v2648 = vunpack.c.l.b16 %v2540
        %v2649 = vunpack.c.l.b16 %v2541
        %v2650 = vunpack.c.l.b16 %v2542
        %v2651 = vunpack.c.l.b16 %v2544
        %v2652 = vunpack.c.l.b16 %v2545
        %v2653 = vunpack.c.l.b16 %v2546
        %v2654 = vunpack.c.l.b16 %v2548
        %v2655 = vunpack.c.l.b16 %v2549
        %v2656 = vunpack.c.l.b16 %v2550
        %v2657 = vunpack.c.l.b16 %v2552
        %v2658 = vunpack.c.l.b16 %v2553
        %v2659 = vunpack.c.l.b16 %v2554
        %v2660 = vunpack.c.l.b16 %v2556
        %v2661 = vunpack.c.l.b16 %v2557
        %v2662 = vunpack.c.l.b16 %v2558
        %v2663 = vunpack.c.l.b16 %v2560
        %v2664 = vunpack.c.l.b16 %v2561
        %v2665 = vunpack.c.l.b16 %v2562
        %v2666 = vunpack.c.l.b16 %v2564
        %v2667 = vunpack.c.l.b16 %v2565
        %v2668 = vunpack.c.l.b16 %v2566
        %v2669 = vunpack.c.l.b16 %v2568
        %v2670 = vunpack.c.l.b16 %v2569
        %v2671 = vunpack.c.l.b16 %v2570
        %v2672 = vunpack.c.l.b16 %v2572
        %v2673 = vunpack.c.l.b16 %v2573
        %v2674 = vunpack.c.l.b16 %v2574
        %v2675 = vunpack.c.l.b16 %v2576
        %v2676 = vunpack.c.l.b16 %v2577
        %v2677 = vunpack.c.l.b16 %v2578
        %v2678 = vunpack.c.l.b16 %v2580
        %v2679 = vunpack.c.l.b16 %v2581
        %v2680 = vunpack.c.l.b16 %v2582
        %v2681 = vunpack.c.l.b16 %v2584
        %v2682 = vunpack.c.l.b16 %v2585
        %v2683 = vunpack.c.l.b16 %v2586
        %v2684 = vpack.c.b16 %v2637, %v2636
        %v2685 = vpack.c.b16 %v2638, %v2638
        %v2686 = vpack.c.b16 %v2640, %v2639
        %v2687 = vpack.c.b16 %v2641, %v2641
        %v2688 = vpack.c.b16 %v2643, %v2642
        %v2689 = vpack.c.b16 %v2644, %v2644
        %v2690 = vpack.c.b16 %v2646, %v2645
        %v2691 = vpack.c.b16 %v2647, %v2647
        %v2692 = vpack.c.b16 %v2649, %v2648
        %v2693 = vpack.c.b16 %v2650, %v2650
        %v2694 = vpack.c.b16 %v2652, %v2651
        %v2695 = vpack.c.b16 %v2653, %v2653
        %v2696 = vpack.c.b16 %v2655, %v2654
        %v2697 = vpack.c.b16 %v2656, %v2656
        %v2698 = vpack.c.b16 %v2658, %v2657
        %v2699 = vpack.c.b16 %v2659, %v2659
        %v2700 = vpack.c.b16 %v2661, %v2660
        %v2701 = vpack.c.b16 %v2662, %v2662
        %v2702 = vpack.c.b16 %v2664, %v2663
        %v2703 = vpack.c.b16 %v2665, %v2665
        %v2704 = vpack.c.b16 %v2667, %v2666
        %v2705 = vpack.c.b16 %v2668, %v2668
        %v2706 = vpack.c.b16 %v2670, %v2669
        %v2707 = vpack.c.b16 %v2671, %v2671
        %v2708 = vpack.c.b16 %v2673, %v2672
        %v2709 = vpack.c.b16 %v2674, %v2674
        %v2710 = vpack.c.b16 %v2676, %v2675
        %v2711 = vpack.c.b16 %v2677, %v2677
        %v2712 = vpack.c.b16 %v2679, %v2678
        %v2713 = vpack.c.b16 %v2680, %v2680
        %v2714 = vpack.c.b16 %v2682, %v2681
        %v2715 = vpack.c.b16 %v2683, %v2683
        %v2716 = vpack.c.b16 %v2638, %v2637
        %v2717 = vpack.c.b16 %v2641, %v2640
        %v2718 = vpack.c.b16 %v2644, %v2643
        %v2719 = vpack.c.b16 %v2647, %v2646
        %v2720 = vpack.c.b16 %v2650, %v2649
        %v2721 = vpack.c.b16 %v2653, %v2652
        %v2722 = vpack.c.b16 %v2656, %v2655
        %v2723 = vpack.c.b16 %v2659, %v2658
        %v2724 = vpack.c.b16 %v2662, %v2661
        %v2725 = vpack.c.b16 %v2665, %v2664
        %v2726 = vpack.c.b16 %v2668, %v2667
        %v2727 = vpack.c.b16 %v2671, %v2670
        %v2728 = vpack.c.b16 %v2674, %v2673
        %v2729 = vpack.c.b16 %v2677, %v2676
        %v2730 = vpack.c.b16 %v2680, %v2679
        %v2731 = vpack.c.b16 %v2683, %v2682
        %v2733 = vshrl.u32 %v2716, 16
        %v2735 = vrot.slane %v2733, 4
        %v2736 = vshll.u32 %v2716, 16
        %v2738 = vrot.slane %v2736, 5
        %v2739 = vor.u32 %v2735, %v2738
        %v2741 = vshrl.u32 %v2717, 16
        %v2743 = vrot.slane %v2741, 4
        %v2744 = vshll.u32 %v2717, 16
        %v2746 = vrot.slane %v2744, 5
        %v2747 = vor.u32 %v2743, %v2746
        %v2749 = vshrl.u32 %v2718, 16
        %v2751 = vrot.slane %v2749, 4
        %v2752 = vshll.u32 %v2718, 16
        %v2754 = vrot.slane %v2752, 5
        %v2755 = vor.u32 %v2751, %v2754
        %v2757 = vshrl.u32 %v2719, 16
        %v2759 = vrot.slane %v2757, 4
        %v2760 = vshll.u32 %v2719, 16
        %v2762 = vrot.slane %v2760, 5
        %v2763 = vor.u32 %v2759, %v2762
        %v2765 = vshrl.u32 %v2720, 16
        %v2767 = vrot.slane %v2765, 4
        %v2768 = vshll.u32 %v2720, 16
        %v2770 = vrot.slane %v2768, 5
        %v2771 = vor.u32 %v2767, %v2770
        %v2773 = vshrl.u32 %v2721, 16
        %v2775 = vrot.slane %v2773, 4
        %v2776 = vshll.u32 %v2721, 16
        %v2778 = vrot.slane %v2776, 5
        %v2779 = vor.u32 %v2775, %v2778
        %v2781 = vshrl.u32 %v2722, 16
        %v2783 = vrot.slane %v2781, 4
        %v2784 = vshll.u32 %v2722, 16
        %v2786 = vrot.slane %v2784, 5
        %v2787 = vor.u32 %v2783, %v2786
        %v2789 = vshrl.u32 %v2723, 16
        %v2791 = vrot.slane %v2789, 4
        %v2792 = vshll.u32 %v2723, 16
        %v2794 = vrot.slane %v2792, 5
        %v2795 = vor.u32 %v2791, %v2794
        %v2797 = vshrl.u32 %v2724, 16
        %v2799 = vrot.slane %v2797, 4
        %v2800 = vshll.u32 %v2724, 16
        %v2802 = vrot.slane %v2800, 5
        %v2803 = vor.u32 %v2799, %v2802
        %v2805 = vshrl.u32 %v2725, 16
        %v2807 = vrot.slane %v2805, 4
        %v2808 = vshll.u32 %v2725, 16
        %v2810 = vrot.slane %v2808, 5
        %v2811 = vor.u32 %v2807, %v2810
        %v2813 = vshrl.u32 %v2726, 16
        %v2815 = vrot.slane %v2813, 4
        %v2816 = vshll.u32 %v2726, 16
        %v2818 = vrot.slane %v2816, 5
        %v2819 = vor.u32 %v2815, %v2818
        %v2821 = vshrl.u32 %v2727, 16
        %v2823 = vrot.slane %v2821, 4
        %v2824 = vshll.u32 %v2727, 16
        %v2826 = vrot.slane %v2824, 5
        %v2827 = vor.u32 %v2823, %v2826
        %v2829 = vshrl.u32 %v2728, 16
        %v2831 = vrot.slane %v2829, 4
        %v2832 = vshll.u32 %v2728, 16
        %v2834 = vrot.slane %v2832, 5
        %v2835 = vor.u32 %v2831, %v2834
        %v2837 = vshrl.u32 %v2729, 16
        %v2839 = vrot.slane %v2837, 4
        %v2840 = vshll.u32 %v2729, 16
        %v2842 = vrot.slane %v2840, 5
        %v2843 = vor.u32 %v2839, %v2842
        %v2845 = vshrl.u32 %v2730, 16
        %v2847 = vrot.slane %v2845, 4
        %v2848 = vshll.u32 %v2730, 16
        %v2850 = vrot.slane %v2848, 5
        %v2851 = vor.u32 %v2847, %v2850
        %v2853 = vshrl.u32 %v2731, 16
        %v2855 = vrot.slane %v2853, 4
        %v2856 = vshll.u32 %v2731, 16
        %v2858 = vrot.slane %v2856, 5
        %v2859 = vor.u32 %v2855, %v2858
        %v2876 = vunpack.c.l.b16 %v2527
        %v2877 = vunpack.c.l.b16 %v2531
        %v2878 = vunpack.c.l.b16 %v2535
        %v2879 = vunpack.c.l.b16 %v2539
        %v2880 = vunpack.c.l.b16 %v2543
        %v2881 = vunpack.c.l.b16 %v2547
        %v2882 = vunpack.c.l.b16 %v2551
        %v2883 = vunpack.c.l.b16 %v2555
        %v2884 = vunpack.c.l.b16 %v2559
        %v2885 = vunpack.c.l.b16 %v2563
        %v2886 = vunpack.c.l.b16 %v2567
        %v2887 = vunpack.c.l.b16 %v2571
        %v2888 = vunpack.c.l.b16 %v2575
        %v2889 = vunpack.c.l.b16 %v2579
        %v2890 = vunpack.c.l.b16 %v2583
        %v2891 = vunpack.c.l.b16 %v2587
        %v2892 = vpack.c.b16 %v2876, %v2876
        %v2893 = vpack.c.b16 %v2877, %v2877
        %v2894 = vpack.c.b16 %v2878, %v2878
        %v2895 = vpack.c.b16 %v2879, %v2879
        %v2896 = vpack.c.b16 %v2880, %v2880
        %v2897 = vpack.c.b16 %v2881, %v2881
        %v2898 = vpack.c.b16 %v2882, %v2882
        %v2899 = vpack.c.b16 %v2883, %v2883
        %v2900 = vpack.c.b16 %v2884, %v2884
        %v2901 = vpack.c.b16 %v2885, %v2885
        %v2902 = vpack.c.b16 %v2886, %v2886
        %v2903 = vpack.c.b16 %v2887, %v2887
        %v2904 = vpack.c.b16 %v2888, %v2888
        %v2905 = vpack.c.b16 %v2889, %v2889
        %v2906 = vpack.c.b16 %v2890, %v2890
        %v2907 = vpack.c.b16 %v2891, %v2891
        %v2908 = vrot.slane %v2716, 5
        %v2909 = vrot.slane %v2892, 5
        %v2910 = vsel %vm1247, %v2908, %v2909
        %v2911 = vrot.slane %v2717, 5
        %v2912 = vrot.slane %v2893, 5
        %v2913 = vsel %vm1247, %v2911, %v2912
        %v2914 = vrot.slane %v2718, 5
        %v2915 = vrot.slane %v2894, 5
        %v2916 = vsel %vm1247, %v2914, %v2915
        %v2917 = vrot.slane %v2719, 5
        %v2918 = vrot.slane %v2895, 5
        %v2919 = vsel %vm1247, %v2917, %v2918
        %v2920 = vrot.slane %v2720, 5
        %v2921 = vrot.slane %v2896, 5
        %v2922 = vsel %vm1247, %v2920, %v2921
        %v2923 = vrot.slane %v2721, 5
        %v2924 = vrot.slane %v2897, 5
        %v2925 = vsel %vm1247, %v2923, %v2924
        %v2926 = vrot.slane %v2722, 5
        %v2927 = vrot.slane %v2898, 5
        %v2928 = vsel %vm1247, %v2926, %v2927
        %v2929 = vrot.slane %v2723, 5
        %v2930 = vrot.slane %v2899, 5
        %v2931 = vsel %vm1247, %v2929, %v2930
        %v2932 = vrot.slane %v2724, 5
        %v2933 = vrot.slane %v2900, 5
        %v2934 = vsel %vm1247, %v2932, %v2933
        %v2935 = vrot.slane %v2725, 5
        %v2936 = vrot.slane %v2901, 5
        %v2937 = vsel %vm1247, %v2935, %v2936
        %v2938 = vrot.slane %v2726, 5
        %v2939 = vrot.slane %v2902, 5
        %v2940 = vsel %vm1247, %v2938, %v2939
        %v2941 = vrot.slane %v2727, 5
        %v2942 = vrot.slane %v2903, 5
        %v2943 = vsel %vm1247, %v2941, %v2942
        %v2944 = vrot.slane %v2728, 5
        %v2945 = vrot.slane %v2904, 5
        %v2946 = vsel %vm1247, %v2944, %v2945
        %v2947 = vrot.slane %v2729, 5
        %v2948 = vrot.slane %v2905, 5
        %v2949 = vsel %vm1247, %v2947, %v2948
        %v2950 = vrot.slane %v2730, 5
        %v2951 = vrot.slane %v2906, 5
        %v2952 = vsel %vm1247, %v2950, %v2951
        %v2953 = vrot.slane %v2731, 5
        %v2954 = vrot.slane %v2907, 5
        %v2955 = vsel %vm1247, %v2953, %v2954
        %v2957 = vshrl.u32 %v2684, 16
        %v2959 = vrot.slane %v2957, 3
        %v2960 = vshll.u32 %v2684, 16
        %v2962 = vrot.slane %v2960, 4
        %v2963 = vor.u32 %v2959, %v2962
        %v2965 = vshrl.u32 %v2685, 16
        %v2967 = vrot.slane %v2965, 3
        %v2968 = vshll.u32 %v2685, 16
        %v2970 = vrot.slane %v2968, 4
        %v2971 = vor.u32 %v2967, %v2970
        %v2972 = vsel %vm1296, %v2963, %v2971
        %v2974 = vshrl.u32 %v2739, 16
        %v2976 = vrot.slane %v2974, 3
        %v2977 = vshll.u32 %v2739, 16
        %v2979 = vrot.slane %v2977, 4
        %v2980 = vor.u32 %v2976, %v2979
        %v2981 = vsel %vm1296, %v2980, %v2980
        %v2983 = vshrl.u32 %v2908, 16
        %v2985 = vrot.slane %v2983, 3
        %v2986 = vshll.u32 %v2908, 16
        %v2988 = vrot.slane %v2986, 4
        %v2989 = vor.u32 %v2985, %v2988
        %v2991 = vshrl.u32 %v2910, 16
        %v2993 = vrot.slane %v2991, 3
        %v2994 = vshll.u32 %v2910, 16
        %v2996 = vrot.slane %v2994, 4
        %v2997 = vor.u32 %v2993, %v2996
        %v2998 = vsel %vm1296, %v2989, %v2997
        %v3000 = vshrl.u32 %v2686, 16
        %v3002 = vrot.slane %v3000, 3
        %v3003 = vshll.u32 %v2686, 16
        %v3005 = vrot.slane %v3003, 4
        %v3006 = vor.u32 %v3002, %v3005
        %v3008 = vshrl.u32 %v2687, 16
        %v3010 = vrot.slane %v3008, 3
        %v3011 = vshll.u32 %v2687, 16
        %v3013 = vrot.slane %v3011, 4
        %v3014 = vor.u32 %v3010, %v3013
        %v3015 = vsel %vm1296, %v3006, %v3014
        %v3017 = vshrl.u32 %v2747, 16
        %v3019 = vrot.slane %v3017, 3
        %v3020 = vshll.u32 %v2747, 16
        %v3022 = vrot.slane %v3020, 4
        %v3023 = vor.u32 %v3019, %v3022
        %v3024 = vsel %vm1296, %v3023, %v3023
        %v3026 = vshrl.u32 %v2911, 16
        %v3028 = vrot.slane %v3026, 3
        %v3029 = vshll.u32 %v2911, 16
        %v3031 = vrot.slane %v3029, 4
        %v3032 = vor.u32 %v3028, %v3031
        %v3034 = vshrl.u32 %v2913, 16
        %v3036 = vrot.slane %v3034, 3
        %v3037 = vshll.u32 %v2913, 16
        %v3039 = vrot.slane %v3037, 4
        %v3040 = vor.u32 %v3036, %v3039
        %v3041 = vsel %vm1296, %v3032, %v3040
        %v3043 = vshrl.u32 %v2688, 16
        %v3045 = vrot.slane %v3043, 3
        %v3046 = vshll.u32 %v2688, 16
        %v3048 = vrot.slane %v3046, 4
        %v3049 = vor.u32 %v3045, %v3048
        %v3051 = vshrl.u32 %v2689, 16
        %v3053 = vrot.slane %v3051, 3
        %v3054 = vshll.u32 %v2689, 16
        %v3056 = vrot.slane %v3054, 4
        %v3057 = vor.u32 %v3053, %v3056
        %v3058 = vsel %vm1296, %v3049, %v3057
        %v3060 = vshrl.u32 %v2755, 16
        %v3062 = vrot.slane %v3060, 3
        %v3063 = vshll.u32 %v2755, 16
        %v3065 = vrot.slane %v3063, 4
        %v3066 = vor.u32 %v3062, %v3065
        %v3067 = vsel %vm1296, %v3066, %v3066
        %v3069 = vshrl.u32 %v2914, 16
        %v3071 = vrot.slane %v3069, 3
        %v3072 = vshll.u32 %v2914, 16
        %v3074 = vrot.slane %v3072, 4
        %v3075 = vor.u32 %v3071, %v3074
        %v3077 = vshrl.u32 %v2916, 16
        %v3079 = vrot.slane %v3077, 3
        %v3080 = vshll.u32 %v2916, 16
        %v3082 = vrot.slane %v3080, 4
        %v3083 = vor.u32 %v3079, %v3082
        %v3084 = vsel %vm1296, %v3075, %v3083
        %v3086 = vshrl.u32 %v2690, 16
        %v3088 = vrot.slane %v3086, 3
        %v3089 = vshll.u32 %v2690, 16
        %v3091 = vrot.slane %v3089, 4
        %v3092 = vor.u32 %v3088, %v3091
        %v3094 = vshrl.u32 %v2691, 16
        %v3096 = vrot.slane %v3094, 3
        %v3097 = vshll.u32 %v2691, 16
        %v3099 = vrot.slane %v3097, 4
        %v3100 = vor.u32 %v3096, %v3099
        %v3101 = vsel %vm1296, %v3092, %v3100
        %v3103 = vshrl.u32 %v2763, 16
        %v3105 = vrot.slane %v3103, 3
        %v3106 = vshll.u32 %v2763, 16
        %v3108 = vrot.slane %v3106, 4
        %v3109 = vor.u32 %v3105, %v3108
        %v3110 = vsel %vm1296, %v3109, %v3109
        %v3112 = vshrl.u32 %v2917, 16
        %v3114 = vrot.slane %v3112, 3
        %v3115 = vshll.u32 %v2917, 16
        %v3117 = vrot.slane %v3115, 4
        %v3118 = vor.u32 %v3114, %v3117
        %v3120 = vshrl.u32 %v2919, 16
        %v3122 = vrot.slane %v3120, 3
        %v3123 = vshll.u32 %v2919, 16
        %v3125 = vrot.slane %v3123, 4
        %v3126 = vor.u32 %v3122, %v3125
        %v3127 = vsel %vm1296, %v3118, %v3126
        %v3129 = vshrl.u32 %v2692, 16
        %v3131 = vrot.slane %v3129, 3
        %v3132 = vshll.u32 %v2692, 16
        %v3134 = vrot.slane %v3132, 4
        %v3135 = vor.u32 %v3131, %v3134
        %v3137 = vshrl.u32 %v2693, 16
        %v3139 = vrot.slane %v3137, 3
        %v3140 = vshll.u32 %v2693, 16
        %v3142 = vrot.slane %v3140, 4
        %v3143 = vor.u32 %v3139, %v3142
        %v3144 = vsel %vm1296, %v3135, %v3143
        %v3146 = vshrl.u32 %v2771, 16
        %v3148 = vrot.slane %v3146, 3
        %v3149 = vshll.u32 %v2771, 16
        %v3151 = vrot.slane %v3149, 4
        %v3152 = vor.u32 %v3148, %v3151
        %v3153 = vsel %vm1296, %v3152, %v3152
        %v3155 = vshrl.u32 %v2920, 16
        %v3157 = vrot.slane %v3155, 3
        %v3158 = vshll.u32 %v2920, 16
        %v3160 = vrot.slane %v3158, 4
        %v3161 = vor.u32 %v3157, %v3160
        %v3163 = vshrl.u32 %v2922, 16
        %v3165 = vrot.slane %v3163, 3
        %v3166 = vshll.u32 %v2922, 16
        %v3168 = vrot.slane %v3166, 4
        %v3169 = vor.u32 %v3165, %v3168
        %v3170 = vsel %vm1296, %v3161, %v3169
        %v3172 = vshrl.u32 %v2694, 16
        %v3174 = vrot.slane %v3172, 3
        %v3175 = vshll.u32 %v2694, 16
        %v3177 = vrot.slane %v3175, 4
        %v3178 = vor.u32 %v3174, %v3177
        %v3180 = vshrl.u32 %v2695, 16
        %v3182 = vrot.slane %v3180, 3
        %v3183 = vshll.u32 %v2695, 16
        %v3185 = vrot.slane %v3183, 4
        %v3186 = vor.u32 %v3182, %v3185
        %v3187 = vsel %vm1296, %v3178, %v3186
        %v3189 = vshrl.u32 %v2779, 16
        %v3191 = vrot.slane %v3189, 3
        %v3192 = vshll.u32 %v2779, 16
        %v3194 = vrot.slane %v3192, 4
        %v3195 = vor.u32 %v3191, %v3194
        %v3196 = vsel %vm1296, %v3195, %v3195
        %v3198 = vshrl.u32 %v2923, 16
        %v3200 = vrot.slane %v3198, 3
        %v3201 = vshll.u32 %v2923, 16
        %v3203 = vrot.slane %v3201, 4
        %v3204 = vor.u32 %v3200, %v3203
        %v3206 = vshrl.u32 %v2925, 16
        %v3208 = vrot.slane %v3206, 3
        %v3209 = vshll.u32 %v2925, 16
        %v3211 = vrot.slane %v3209, 4
        %v3212 = vor.u32 %v3208, %v3211
        %v3213 = vsel %vm1296, %v3204, %v3212
        %v3215 = vshrl.u32 %v2696, 16
        %v3217 = vrot.slane %v3215, 3
        %v3218 = vshll.u32 %v2696, 16
        %v3220 = vrot.slane %v3218, 4
        %v3221 = vor.u32 %v3217, %v3220
        %v3223 = vshrl.u32 %v2697, 16
        %v3225 = vrot.slane %v3223, 3
        %v3226 = vshll.u32 %v2697, 16
        %v3228 = vrot.slane %v3226, 4
        %v3229 = vor.u32 %v3225, %v3228
        %v3230 = vsel %vm1296, %v3221, %v3229
        %v3232 = vshrl.u32 %v2787, 16
        %v3234 = vrot.slane %v3232, 3
        %v3235 = vshll.u32 %v2787, 16
        %v3237 = vrot.slane %v3235, 4
        %v3238 = vor.u32 %v3234, %v3237
        %v3239 = vsel %vm1296, %v3238, %v3238
        %v3241 = vshrl.u32 %v2926, 16
        %v3243 = vrot.slane %v3241, 3
        %v3244 = vshll.u32 %v2926, 16
        %v3246 = vrot.slane %v3244, 4
        %v3247 = vor.u32 %v3243, %v3246
        %v3249 = vshrl.u32 %v2928, 16
        %v3251 = vrot.slane %v3249, 3
        %v3252 = vshll.u32 %v2928, 16
        %v3254 = vrot.slane %v3252, 4
        %v3255 = vor.u32 %v3251, %v3254
        %v3256 = vsel %vm1296, %v3247, %v3255
        %v3258 = vshrl.u32 %v2698, 16
        %v3260 = vrot.slane %v3258, 3
        %v3261 = vshll.u32 %v2698, 16
        %v3263 = vrot.slane %v3261, 4
        %v3264 = vor.u32 %v3260, %v3263
        %v3266 = vshrl.u32 %v2699, 16
        %v3268 = vrot.slane %v3266, 3
        %v3269 = vshll.u32 %v2699, 16
        %v3271 = vrot.slane %v3269, 4
        %v3272 = vor.u32 %v3268, %v3271
        %v3273 = vsel %vm1296, %v3264, %v3272
        %v3275 = vshrl.u32 %v2795, 16
        %v3277 = vrot.slane %v3275, 3
        %v3278 = vshll.u32 %v2795, 16
        %v3280 = vrot.slane %v3278, 4
        %v3281 = vor.u32 %v3277, %v3280
        %v3282 = vsel %vm1296, %v3281, %v3281
        %v3284 = vshrl.u32 %v2929, 16
        %v3286 = vrot.slane %v3284, 3
        %v3287 = vshll.u32 %v2929, 16
        %v3289 = vrot.slane %v3287, 4
        %v3290 = vor.u32 %v3286, %v3289
        %v3292 = vshrl.u32 %v2931, 16
        %v3294 = vrot.slane %v3292, 3
        %v3295 = vshll.u32 %v2931, 16
        %v3297 = vrot.slane %v3295, 4
        %v3298 = vor.u32 %v3294, %v3297
        %v3299 = vsel %vm1296, %v3290, %v3298
        %v3301 = vshrl.u32 %v2700, 16
        %v3303 = vrot.slane %v3301, 3
        %v3304 = vshll.u32 %v2700, 16
        %v3306 = vrot.slane %v3304, 4
        %v3307 = vor.u32 %v3303, %v3306
        %v3309 = vshrl.u32 %v2701, 16
        %v3311 = vrot.slane %v3309, 3
        %v3312 = vshll.u32 %v2701, 16
        %v3314 = vrot.slane %v3312, 4
        %v3315 = vor.u32 %v3311, %v3314
        %v3316 = vsel %vm1296, %v3307, %v3315
        %v3318 = vshrl.u32 %v2803, 16
        %v3320 = vrot.slane %v3318, 3
        %v3321 = vshll.u32 %v2803, 16
        %v3323 = vrot.slane %v3321, 4
        %v3324 = vor.u32 %v3320, %v3323
        %v3325 = vsel %vm1296, %v3324, %v3324
        %v3327 = vshrl.u32 %v2932, 16
        %v3329 = vrot.slane %v3327, 3
        %v3330 = vshll.u32 %v2932, 16
        %v3332 = vrot.slane %v3330, 4
        %v3333 = vor.u32 %v3329, %v3332
        %v3335 = vshrl.u32 %v2934, 16
        %v3337 = vrot.slane %v3335, 3
        %v3338 = vshll.u32 %v2934, 16
        %v3340 = vrot.slane %v3338, 4
        %v3341 = vor.u32 %v3337, %v3340
        %v3342 = vsel %vm1296, %v3333, %v3341
        %v3344 = vshrl.u32 %v2702, 16
        %v3346 = vrot.slane %v3344, 3
        %v3347 = vshll.u32 %v2702, 16
        %v3349 = vrot.slane %v3347, 4
        %v3350 = vor.u32 %v3346, %v3349
        %v3352 = vshrl.u32 %v2703, 16
        %v3354 = vrot.slane %v3352, 3
        %v3355 = vshll.u32 %v2703, 16
        %v3357 = vrot.slane %v3355, 4
        %v3358 = vor.u32 %v3354, %v3357
        %v3359 = vsel %vm1296, %v3350, %v3358
        %v3361 = vshrl.u32 %v2811, 16
        %v3363 = vrot.slane %v3361, 3
        %v3364 = vshll.u32 %v2811, 16
        %v3366 = vrot.slane %v3364, 4
        %v3367 = vor.u32 %v3363, %v3366
        %v3368 = vsel %vm1296, %v3367, %v3367
        %v3370 = vshrl.u32 %v2935, 16
        %v3372 = vrot.slane %v3370, 3
        %v3373 = vshll.u32 %v2935, 16
        %v3375 = vrot.slane %v3373, 4
        %v3376 = vor.u32 %v3372, %v3375
        %v3378 = vshrl.u32 %v2937, 16
        %v3380 = vrot.slane %v3378, 3
        %v3381 = vshll.u32 %v2937, 16
        %v3383 = vrot.slane %v3381, 4
        %v3384 = vor.u32 %v3380, %v3383
        %v3385 = vsel %vm1296, %v3376, %v3384
        %v3387 = vshrl.u32 %v2704, 16
        %v3389 = vrot.slane %v3387, 3
        %v3390 = vshll.u32 %v2704, 16
        %v3392 = vrot.slane %v3390, 4
        %v3393 = vor.u32 %v3389, %v3392
        %v3395 = vshrl.u32 %v2705, 16
        %v3397 = vrot.slane %v3395, 3
        %v3398 = vshll.u32 %v2705, 16
        %v3400 = vrot.slane %v3398, 4
        %v3401 = vor.u32 %v3397, %v3400
        %v3402 = vsel %vm1296, %v3393, %v3401
        %v3404 = vshrl.u32 %v2819, 16
        %v3406 = vrot.slane %v3404, 3
        %v3407 = vshll.u32 %v2819, 16
        %v3409 = vrot.slane %v3407, 4
        %v3410 = vor.u32 %v3406, %v3409
        %v3411 = vsel %vm1296, %v3410, %v3410
        %v3413 = vshrl.u32 %v2938, 16
        %v3415 = vrot.slane %v3413, 3
        %v3416 = vshll.u32 %v2938, 16
        %v3418 = vrot.slane %v3416, 4
        %v3419 = vor.u32 %v3415, %v3418
        %v3421 = vshrl.u32 %v2940, 16
        %v3423 = vrot.slane %v3421, 3
        %v3424 = vshll.u32 %v2940, 16
        %v3426 = vrot.slane %v3424, 4
        %v3427 = vor.u32 %v3423, %v3426
        %v3428 = vsel %vm1296, %v3419, %v3427
        %v3430 = vshrl.u32 %v2706, 16
        %v3432 = vrot.slane %v3430, 3
        %v3433 = vshll.u32 %v2706, 16
        %v3435 = vrot.slane %v3433, 4
        %v3436 = vor.u32 %v3432, %v3435
        %v3438 = vshrl.u32 %v2707, 16
        %v3440 = vrot.slane %v3438, 3
        %v3441 = vshll.u32 %v2707, 16
        %v3443 = vrot.slane %v3441, 4
        %v3444 = vor.u32 %v3440, %v3443
        %v3445 = vsel %vm1296, %v3436, %v3444
        %v3447 = vshrl.u32 %v2827, 16
        %v3449 = vrot.slane %v3447, 3
        %v3450 = vshll.u32 %v2827, 16
        %v3452 = vrot.slane %v3450, 4
        %v3453 = vor.u32 %v3449, %v3452
        %v3454 = vsel %vm1296, %v3453, %v3453
        %v3456 = vshrl.u32 %v2941, 16
        %v3458 = vrot.slane %v3456, 3
        %v3459 = vshll.u32 %v2941, 16
        %v3461 = vrot.slane %v3459, 4
        %v3462 = vor.u32 %v3458, %v3461
        %v3464 = vshrl.u32 %v2943, 16
        %v3466 = vrot.slane %v3464, 3
        %v3467 = vshll.u32 %v2943, 16
        %v3469 = vrot.slane %v3467, 4
        %v3470 = vor.u32 %v3466, %v3469
        %v3471 = vsel %vm1296, %v3462, %v3470
        %v3473 = vshrl.u32 %v2708, 16
        %v3475 = vrot.slane %v3473, 3
        %v3476 = vshll.u32 %v2708, 16
        %v3478 = vrot.slane %v3476, 4
        %v3479 = vor.u32 %v3475, %v3478
        %v3481 = vshrl.u32 %v2709, 16
        %v3483 = vrot.slane %v3481, 3
        %v3484 = vshll.u32 %v2709, 16
        %v3486 = vrot.slane %v3484, 4
        %v3487 = vor.u32 %v3483, %v3486
        %v3488 = vsel %vm1296, %v3479, %v3487
        %v3490 = vshrl.u32 %v2835, 16
        %v3492 = vrot.slane %v3490, 3
        %v3493 = vshll.u32 %v2835, 16
        %v3495 = vrot.slane %v3493, 4
        %v3496 = vor.u32 %v3492, %v3495
        %v3497 = vsel %vm1296, %v3496, %v3496
        %v3499 = vshrl.u32 %v2944, 16
        %v3501 = vrot.slane %v3499, 3
        %v3502 = vshll.u32 %v2944, 16
        %v3504 = vrot.slane %v3502, 4
        %v3505 = vor.u32 %v3501, %v3504
        %v3507 = vshrl.u32 %v2946, 16
        %v3509 = vrot.slane %v3507, 3
        %v3510 = vshll.u32 %v2946, 16
        %v3512 = vrot.slane %v3510, 4
        %v3513 = vor.u32 %v3509, %v3512
        %v3514 = vsel %vm1296, %v3505, %v3513
        %v3516 = vshrl.u32 %v2710, 16
        %v3518 = vrot.slane %v3516, 3
        %v3519 = vshll.u32 %v2710, 16
        %v3521 = vrot.slane %v3519, 4
        %v3522 = vor.u32 %v3518, %v3521
        %v3524 = vshrl.u32 %v2711, 16
        %v3526 = vrot.slane %v3524, 3
        %v3527 = vshll.u32 %v2711, 16
        %v3529 = vrot.slane %v3527, 4
        %v3530 = vor.u32 %v3526, %v3529
        %v3531 = vsel %vm1296, %v3522, %v3530
        %v3533 = vshrl.u32 %v2843, 16
        %v3535 = vrot.slane %v3533, 3
        %v3536 = vshll.u32 %v2843, 16
        %v3538 = vrot.slane %v3536, 4
        %v3539 = vor.u32 %v3535, %v3538
        %v3540 = vsel %vm1296, %v3539, %v3539
        %v3542 = vshrl.u32 %v2947, 16
        %v3544 = vrot.slane %v3542, 3
        %v3545 = vshll.u32 %v2947, 16
        %v3547 = vrot.slane %v3545, 4
        %v3548 = vor.u32 %v3544, %v3547
        %v3550 = vshrl.u32 %v2949, 16
        %v3552 = vrot.slane %v3550, 3
        %v3553 = vshll.u32 %v2949, 16
        %v3555 = vrot.slane %v3553, 4
        %v3556 = vor.u32 %v3552, %v3555
        %v3557 = vsel %vm1296, %v3548, %v3556
        %v3559 = vshrl.u32 %v2712, 16
        %v3561 = vrot.slane %v3559, 3
        %v3562 = vshll.u32 %v2712, 16
        %v3564 = vrot.slane %v3562, 4
        %v3565 = vor.u32 %v3561, %v3564
        %v3567 = vshrl.u32 %v2713, 16
        %v3569 = vrot.slane %v3567, 3
        %v3570 = vshll.u32 %v2713, 16
        %v3572 = vrot.slane %v3570, 4
        %v3573 = vor.u32 %v3569, %v3572
        %v3574 = vsel %vm1296, %v3565, %v3573
        %v3576 = vshrl.u32 %v2851, 16
        %v3578 = vrot.slane %v3576, 3
        %v3579 = vshll.u32 %v2851, 16
        %v3581 = vrot.slane %v3579, 4
        %v3582 = vor.u32 %v3578, %v3581
        %v3583 = vsel %vm1296, %v3582, %v3582
        %v3585 = vshrl.u32 %v2950, 16
        %v3587 = vrot.slane %v3585, 3
        %v3588 = vshll.u32 %v2950, 16
        %v3590 = vrot.slane %v3588, 4
        %v3591 = vor.u32 %v3587, %v3590
        %v3593 = vshrl.u32 %v2952, 16
        %v3595 = vrot.slane %v3593, 3
        %v3596 = vshll.u32 %v2952, 16
        %v3598 = vrot.slane %v3596, 4
        %v3599 = vor.u32 %v3595, %v3598
        %v3600 = vsel %vm1296, %v3591, %v3599
        %v3602 = vshrl.u32 %v2714, 16
        %v3604 = vrot.slane %v3602, 3
        %v3605 = vshll.u32 %v2714, 16
        %v3607 = vrot.slane %v3605, 4
        %v3608 = vor.u32 %v3604, %v3607
        %v3610 = vshrl.u32 %v2715, 16
        %v3612 = vrot.slane %v3610, 3
        %v3613 = vshll.u32 %v2715, 16
        %v3615 = vrot.slane %v3613, 4
        %v3616 = vor.u32 %v3612, %v3615
        %v3617 = vsel %vm1296, %v3608, %v3616
        %v3619 = vshrl.u32 %v2859, 16
        %v3621 = vrot.slane %v3619, 3
        %v3622 = vshll.u32 %v2859, 16
        %v3624 = vrot.slane %v3622, 4
        %v3625 = vor.u32 %v3621, %v3624
        %v3626 = vsel %vm1296, %v3625, %v3625
        %v3628 = vshrl.u32 %v2953, 16
        %v3630 = vrot.slane %v3628, 3
        %v3631 = vshll.u32 %v2953, 16
        %v3633 = vrot.slane %v3631, 4
        %v3634 = vor.u32 %v3630, %v3633
        %v3636 = vshrl.u32 %v2955, 16
        %v3638 = vrot.slane %v3636, 3
        %v3639 = vshll.u32 %v2955, 16
        %v3641 = vrot.slane %v3639, 4
        %v3642 = vor.u32 %v3638, %v3641
        %v3643 = vsel %vm1296, %v3634, %v3642
        %s3692 = scalar_lea.vmem [#allocation9], 192
        %v3693 = vld [vmem:[%s3692] sm:$0xf]
        %v3694 = vld [vmem:[%s3692 + $0x4] sm:$0xf]
        %v3695 = vld [vmem:[%s3692 + $0x8] sm:$0xf]
        %v3696 = vld [vmem:[%s3692 + $0xc] sm:$0xf]
        %v3697 = vld [vmem:[%s3692 + $0x10] sm:$0xf]
        %v3698 = vld [vmem:[%s3692 + $0x14] sm:$0xf]
        %v3699 = vld [vmem:[%s3692 + $0x18] sm:$0xf]
        %v3700 = vld [vmem:[%s3692 + $0x1c] sm:$0xf]
        %v3701 = vld [vmem:[%s3692 + $0x20] sm:$0xf]
        %v3702 = vld [vmem:[%s3692 + $0x24] sm:$0xf]
        %v3703 = vld [vmem:[%s3692 + $0x28] sm:$0xf]
        %v3704 = vld [vmem:[%s3692 + $0x2c] sm:$0xf]
        %v3705 = vld [vmem:[%s3692 + $0x30] sm:$0xf]
        %v3706 = vld [vmem:[%s3692 + $0x34] sm:$0xf]
        %v3707 = vld [vmem:[%s3692 + $0x38] sm:$0xf]
        %v3708 = vld [vmem:[%s3692 + $0x3c] sm:$0xf]
        %v3709 = vld [vmem:[%s3692 + $0x40] sm:$0xf]
        %v3710 = vld [vmem:[%s3692 + $0x44] sm:$0xf]
        %v3711 = vld [vmem:[%s3692 + $0x48] sm:$0xf]
        %v3712 = vld [vmem:[%s3692 + $0x4c] sm:$0xf]
        %v3713 = vld [vmem:[%s3692 + $0x50] sm:$0xf]
        %v3714 = vld [vmem:[%s3692 + $0x54] sm:$0xf]
        %v3715 = vld [vmem:[%s3692 + $0x58] sm:$0xf]
        %v3716 = vld [vmem:[%s3692 + $0x5c] sm:$0xf]
        %v3717 = vld [vmem:[%s3692 + $0x60] sm:$0xf]
        %v3718 = vld [vmem:[%s3692 + $0x64] sm:$0xf]
        %v3719 = vld [vmem:[%s3692 + $0x68] sm:$0xf]
        %v3720 = vld [vmem:[%s3692 + $0x6c] sm:$0xf]
        %v3721 = vld [vmem:[%s3692 + $0x70] sm:$0xf]
        %v3722 = vld [vmem:[%s3692 + $0x74] sm:$0xf]
        %v3723 = vld [vmem:[%s3692 + $0x78] sm:$0xf]
        %v3724 = vld [vmem:[%s3692 + $0x7c] sm:$0xf]
        %v3725 = vld [vmem:[%s3692 + $0x80] sm:$0xf]
        %v3726 = vld [vmem:[%s3692 + $0x84] sm:$0xf]
        %v3727 = vld [vmem:[%s3692 + $0x88] sm:$0xf]
        %v3728 = vld [vmem:[%s3692 + $0x8c] sm:$0xf]
        %v3729 = vld [vmem:[%s3692 + $0x90] sm:$0xf]
        %v3730 = vld [vmem:[%s3692 + $0x94] sm:$0xf]
        %v3731 = vld [vmem:[%s3692 + $0x98] sm:$0xf]
        %v3732 = vld [vmem:[%s3692 + $0x9c] sm:$0xf]
        %v3733 = vld [vmem:[%s3692 + $0xa0] sm:$0xf]
        %v3734 = vld [vmem:[%s3692 + $0xa4] sm:$0xf]
        %v3735 = vld [vmem:[%s3692 + $0xa8] sm:$0xf]
        %v3736 = vld [vmem:[%s3692 + $0xac] sm:$0xf]
        %v3737 = vld [vmem:[%s3692 + $0xb0] sm:$0xf]
        %v3738 = vld [vmem:[%s3692 + $0xb4] sm:$0xf]
        %v3739 = vld [vmem:[%s3692 + $0xb8] sm:$0xf]
        %v3740 = vld [vmem:[%s3692 + $0xbc] sm:$0xf]
        %v3789 = vunpack.c.l.b16 %v3693
        %v3790 = vunpack.c.l.b16 %v3694
        %v3791 = vunpack.c.l.b16 %v3695
        %v3792 = vunpack.c.l.b16 %v3696
        %v3793 = vunpack.c.l.b16 %v3697
        %v3794 = vunpack.c.l.b16 %v3698
        %v3795 = vunpack.c.l.b16 %v3699
        %v3796 = vunpack.c.l.b16 %v3700
        %v3797 = vunpack.c.l.b16 %v3701
        %v3798 = vunpack.c.l.b16 %v3702
        %v3799 = vunpack.c.l.b16 %v3703
        %v3800 = vunpack.c.l.b16 %v3704
        %v3801 = vunpack.c.l.b16 %v3705
        %v3802 = vunpack.c.l.b16 %v3706
        %v3803 = vunpack.c.l.b16 %v3707
        %v3804 = vunpack.c.l.b16 %v3708
        %v3805 = vunpack.c.l.b16 %v3709
        %v3806 = vunpack.c.l.b16 %v3710
        %v3807 = vunpack.c.l.b16 %v3711
        %v3808 = vunpack.c.l.b16 %v3712
        %v3809 = vunpack.c.l.b16 %v3713
        %v3810 = vunpack.c.l.b16 %v3714
        %v3811 = vunpack.c.l.b16 %v3715
        %v3812 = vunpack.c.l.b16 %v3716
        %v3813 = vunpack.c.l.b16 %v3717
        %v3814 = vunpack.c.l.b16 %v3718
        %v3815 = vunpack.c.l.b16 %v3719
        %v3816 = vunpack.c.l.b16 %v3720
        %v3817 = vunpack.c.l.b16 %v3721
        %v3818 = vunpack.c.l.b16 %v3722
        %v3819 = vunpack.c.l.b16 %v3723
        %v3820 = vunpack.c.l.b16 %v3724
        %v3821 = vunpack.c.l.b16 %v3725
        %v3822 = vunpack.c.l.b16 %v3726
        %v3823 = vunpack.c.l.b16 %v3727
        %v3824 = vunpack.c.l.b16 %v3728
        %v3825 = vunpack.c.l.b16 %v3729
        %v3826 = vunpack.c.l.b16 %v3730
        %v3827 = vunpack.c.l.b16 %v3731
        %v3828 = vunpack.c.l.b16 %v3732
        %v3829 = vunpack.c.l.b16 %v3733
        %v3830 = vunpack.c.l.b16 %v3734
        %v3831 = vunpack.c.l.b16 %v3735
        %v3832 = vunpack.c.l.b16 %v3736
        %v3833 = vunpack.c.l.b16 %v3737
        %v3834 = vunpack.c.l.b16 %v3738
        %v3835 = vunpack.c.l.b16 %v3739
        %v3836 = vunpack.c.l.b16 %v3740
        %v3837 = vpack.c.b16 %v3790, %v3789
        %v3838 = vpack.c.b16 %v3792, %v3791
        %v3839 = vpack.c.b16 %v3794, %v3793
        %v3840 = vpack.c.b16 %v3796, %v3795
        %v3841 = vpack.c.b16 %v3798, %v3797
        %v3842 = vpack.c.b16 %v3800, %v3799
        %v3843 = vpack.c.b16 %v3802, %v3801
        %v3844 = vpack.c.b16 %v3804, %v3803
        %v3845 = vpack.c.b16 %v3806, %v3805
        %v3846 = vpack.c.b16 %v3808, %v3807
        %v3847 = vpack.c.b16 %v3810, %v3809
        %v3848 = vpack.c.b16 %v3812, %v3811
        %v3849 = vpack.c.b16 %v3814, %v3813
        %v3850 = vpack.c.b16 %v3816, %v3815
        %v3851 = vpack.c.b16 %v3818, %v3817
        %v3852 = vpack.c.b16 %v3820, %v3819
        %v3853 = vpack.c.b16 %v3822, %v3821
        %v3854 = vpack.c.b16 %v3824, %v3823
        %v3855 = vpack.c.b16 %v3826, %v3825
        %v3856 = vpack.c.b16 %v3828, %v3827
        %v3857 = vpack.c.b16 %v3830, %v3829
        %v3858 = vpack.c.b16 %v3832, %v3831
        %v3859 = vpack.c.b16 %v3834, %v3833
        %v3860 = vpack.c.b16 %v3836, %v3835
        %3885 = vmatpush.bf16.msra.mxu0 %v3844
        %3886 = vmatpush.bf16.msra.mxu0 %v3843
        %3887 = vmatpush.bf16.msra.mxu0 %v3842
        %3888 = vmatpush.bf16.msra.mxu0 %v3841
        %3889 = vmatpush.bf16.msra.mxu0 %v3840
        %3890 = vmatpush.bf16.msra.mxu0 %v3839
        %3891 = vmatpush.bf16.msra.mxu0 %v3838
        %3892 = vmatpush.bf16.msra.mxu0 %v3837
        %3893 = vmatmul.bf16.gmra.mxu0 %v2972
        %v3894 = vpop.f32.mrf.mxu0
        %v3895 = vadd.f32 0.0, %v3894
        %v3896 = vpop.f32.mrf.mxu0
        %v3897 = vadd.f32 0.0, %v3896
        %3898 = vmatmul.bf16.gmra.mxu0 %v3015
        %v3899 = vpop.f32.mrf.mxu0
        %v3900 = vadd.f32 0.0, %v3899
        %v3901 = vpop.f32.mrf.mxu0
        %v3902 = vadd.f32 0.0, %v3901
        %3903 = vmatmul.bf16.gmra.mxu0 %v3058
        %v3904 = vpop.f32.mrf.mxu0
        %v3905 = vadd.f32 0.0, %v3904
        %v3906 = vpop.f32.mrf.mxu0
        %v3907 = vadd.f32 0.0, %v3906
        %3908 = vmatmul.bf16.gmra.mxu0 %v3101
        %v3909 = vpop.f32.mrf.mxu0
        %v3910 = vadd.f32 0.0, %v3909
        %v3911 = vpop.f32.mrf.mxu0
        %v3912 = vadd.f32 0.0, %v3911
        %3913 = vmatmul.bf16.gmra.mxu0 %v3144
        %v3914 = vpop.f32.mrf.mxu0
        %v3915 = vadd.f32 0.0, %v3914
        %v3916 = vpop.f32.mrf.mxu0
        %v3917 = vadd.f32 0.0, %v3916
        %3918 = vmatmul.bf16.gmra.mxu0 %v3187
        %v3919 = vpop.f32.mrf.mxu0
        %v3920 = vadd.f32 0.0, %v3919
        %v3921 = vpop.f32.mrf.mxu0
        %v3922 = vadd.f32 0.0, %v3921
        %3923 = vmatmul.bf16.gmra.mxu0 %v3230
        %v3924 = vpop.f32.mrf.mxu0
        %v3925 = vadd.f32 0.0, %v3924
        %v3926 = vpop.f32.mrf.mxu0
        %v3927 = vadd.f32 0.0, %v3926
        %3928 = vmatmul.bf16.gmra.mxu0 %v3273
        %v3929 = vpop.f32.mrf.mxu0
        %v3930 = vadd.f32 0.0, %v3929
        %v3931 = vpop.f32.mrf.mxu0
        %v3932 = vadd.f32 0.0, %v3931
        %3933 = vmatmul.bf16.gmra.mxu0 %v3316
        %v3934 = vpop.f32.mrf.mxu0
        %v3935 = vadd.f32 0.0, %v3934
        %v3936 = vpop.f32.mrf.mxu0
        %v3937 = vadd.f32 0.0, %v3936
        %3938 = vmatmul.bf16.gmra.mxu0 %v3359
        %v3939 = vpop.f32.mrf.mxu0
        %v3940 = vadd.f32 0.0, %v3939
        %v3941 = vpop.f32.mrf.mxu0
        %v3942 = vadd.f32 0.0, %v3941
        %3943 = vmatmul.bf16.gmra.mxu0 %v3402
        %v3944 = vpop.f32.mrf.mxu0
        %v3945 = vadd.f32 0.0, %v3944
        %v3946 = vpop.f32.mrf.mxu0
        %v3947 = vadd.f32 0.0, %v3946
        %3948 = vmatmul.bf16.gmra.mxu0 %v3445
        %v3949 = vpop.f32.mrf.mxu0
        %v3950 = vadd.f32 0.0, %v3949
        %v3951 = vpop.f32.mrf.mxu0
        %v3952 = vadd.f32 0.0, %v3951
        %3953 = vmatmul.bf16.gmra.mxu0 %v3488
        %v3954 = vpop.f32.mrf.mxu0
        %v3955 = vadd.f32 0.0, %v3954
        %v3956 = vpop.f32.mrf.mxu0
        %v3957 = vadd.f32 0.0, %v3956
        %3958 = vmatmul.bf16.gmra.mxu0 %v3531
        %v3959 = vpop.f32.mrf.mxu0
        %v3960 = vadd.f32 0.0, %v3959
        %v3961 = vpop.f32.mrf.mxu0
        %v3962 = vadd.f32 0.0, %v3961
        %3963 = vmatmul.bf16.gmra.mxu0 %v3574
        %v3964 = vpop.f32.mrf.mxu0
        %v3965 = vadd.f32 0.0, %v3964
        %v3966 = vpop.f32.mrf.mxu0
        %v3967 = vadd.f32 0.0, %v3966
        %3968 = vmatmul.bf16.gmra.mxu0 %v3617
        %v3969 = vpop.f32.mrf.mxu0
        %v3970 = vadd.f32 0.0, %v3969
        %v3971 = vpop.f32.mrf.mxu0
        %v3972 = vadd.f32 0.0, %v3971
        %3973 = vdwg.mxu0
        %3974 = vmatpush.bf16.msra.mxu0 %v3852
        %3975 = vmatpush.bf16.msra.mxu0 %v3851
        %3976 = vmatpush.bf16.msra.mxu0 %v3850
        %3977 = vmatpush.bf16.msra.mxu0 %v3849
        %3978 = vmatpush.bf16.msra.mxu0 %v3848
        %3979 = vmatpush.bf16.msra.mxu0 %v3847
        %3980 = vmatpush.bf16.msra.mxu0 %v3846
        %3981 = vmatpush.bf16.msra.mxu0 %v3845
        %3982 = vmatmul.bf16.gmra.mxu0 %v2981
        %v3983 = vpop.f32.mrf.mxu0
        %v3984 = vadd.f32 %v3895, %v3983
        %v3985 = vpop.f32.mrf.mxu0
        %v3986 = vadd.f32 %v3897, %v3985
        %3987 = vmatmul.bf16.gmra.mxu0 %v3024
        %v3988 = vpop.f32.mrf.mxu0
        %v3989 = vadd.f32 %v3900, %v3988
        %v3990 = vpop.f32.mrf.mxu0
        %v3991 = vadd.f32 %v3902, %v3990
        %3992 = vmatmul.bf16.gmra.mxu0 %v3067
        %v3993 = vpop.f32.mrf.mxu0
        %v3994 = vadd.f32 %v3905, %v3993
        %v3995 = vpop.f32.mrf.mxu0
        %v3996 = vadd.f32 %v3907, %v3995
        %3997 = vmatmul.bf16.gmra.mxu0 %v3110
        %v3998 = vpop.f32.mrf.mxu0
        %v3999 = vadd.f32 %v3910, %v3998
        %v4000 = vpop.f32.mrf.mxu0
        %v4001 = vadd.f32 %v3912, %v4000
        %4002 = vmatmul.bf16.gmra.mxu0 %v3153
        %v4003 = vpop.f32.mrf.mxu0
        %v4004 = vadd.f32 %v3915, %v4003
        %v4005 = vpop.f32.mrf.mxu0
        %v4006 = vadd.f32 %v3917, %v4005
        %4007 = vmatmul.bf16.gmra.mxu0 %v3196
        %v4008 = vpop.f32.mrf.mxu0
        %v4009 = vadd.f32 %v3920, %v4008
        %v4010 = vpop.f32.mrf.mxu0
        %v4011 = vadd.f32 %v3922, %v4010
        %4012 = vmatmul.bf16.gmra.mxu0 %v3239
        %v4013 = vpop.f32.mrf.mxu0
        %v4014 = vadd.f32 %v3925, %v4013
        %v4015 = vpop.f32.mrf.mxu0
        %v4016 = vadd.f32 %v3927, %v4015
        %4017 = vmatmul.bf16.gmra.mxu0 %v3282
        %v4018 = vpop.f32.mrf.mxu0
        %v4019 = vadd.f32 %v3930, %v4018
        %v4020 = vpop.f32.mrf.mxu0
        %v4021 = vadd.f32 %v3932, %v4020
        %4022 = vmatmul.bf16.gmra.mxu0 %v3325
        %v4023 = vpop.f32.mrf.mxu0
        %v4024 = vadd.f32 %v3935, %v4023
        %v4025 = vpop.f32.mrf.mxu0
        %v4026 = vadd.f32 %v3937, %v4025
        %4027 = vmatmul.bf16.gmra.mxu0 %v3368
        %v4028 = vpop.f32.mrf.mxu0
        %v4029 = vadd.f32 %v3940, %v4028
        %v4030 = vpop.f32.mrf.mxu0
        %v4031 = vadd.f32 %v3942, %v4030
        %4032 = vmatmul.bf16.gmra.mxu0 %v3411
        %v4033 = vpop.f32.mrf.mxu0
        %v4034 = vadd.f32 %v3945, %v4033
        %v4035 = vpop.f32.mrf.mxu0
        %v4036 = vadd.f32 %v3947, %v4035
        %4037 = vmatmul.bf16.gmra.mxu0 %v3454
        %v4038 = vpop.f32.mrf.mxu0
        %v4039 = vadd.f32 %v3950, %v4038
        %v4040 = vpop.f32.mrf.mxu0
        %v4041 = vadd.f32 %v3952, %v4040
        %4042 = vmatmul.bf16.gmra.mxu0 %v3497
        %v4043 = vpop.f32.mrf.mxu0
        %v4044 = vadd.f32 %v3955, %v4043
        %v4045 = vpop.f32.mrf.mxu0
        %v4046 = vadd.f32 %v3957, %v4045
        %4047 = vmatmul.bf16.gmra.mxu0 %v3540
        %v4048 = vpop.f32.mrf.mxu0
        %v4049 = vadd.f32 %v3960, %v4048
        %v4050 = vpop.f32.mrf.mxu0
        %v4051 = vadd.f32 %v3962, %v4050
        %4052 = vmatmul.bf16.gmra.mxu0 %v3583
        %v4053 = vpop.f32.mrf.mxu0
        %v4054 = vadd.f32 %v3965, %v4053
        %v4055 = vpop.f32.mrf.mxu0
        %v4056 = vadd.f32 %v3967, %v4055
        %4057 = vmatmul.bf16.gmra.mxu0 %v3626
        %v4058 = vpop.f32.mrf.mxu0
        %v4059 = vadd.f32 %v3970, %v4058
        %v4060 = vpop.f32.mrf.mxu0
        %v4061 = vadd.f32 %v3972, %v4060
        %4062 = vdwg.mxu0
        %4063 = vmatpush.bf16.msra.mxu0 %v3860
        %4064 = vmatpush.bf16.msra.mxu0 %v3859
        %4065 = vmatpush.bf16.msra.mxu0 %v3858
        %4066 = vmatpush.bf16.msra.mxu0 %v3857
        %4067 = vmatpush.bf16.msra.mxu0 %v3856
        %4068 = vmatpush.bf16.msra.mxu0 %v3855
        %4069 = vmatpush.bf16.msra.mxu0 %v3854
        %4070 = vmatpush.bf16.msra.mxu0 %v3853
        %4071 = vmatmul.bf16.gmra.mxu0 %v2998
        %v4072 = vpop.f32.mrf.mxu0
        %v4073 = vadd.f32 %v3984, %v4072
        %v4074 = vpop.f32.mrf.mxu0
        %v4075 = vadd.f32 %v3986, %v4074
        %4076 = vmatmul.bf16.gmra.mxu0 %v3041
        %v4077 = vpop.f32.mrf.mxu0
        %v4078 = vadd.f32 %v3989, %v4077
        %v4079 = vpop.f32.mrf.mxu0
        %v4080 = vadd.f32 %v3991, %v4079
        %4081 = vmatmul.bf16.gmra.mxu0 %v3084
        %v4082 = vpop.f32.mrf.mxu0
        %v4083 = vadd.f32 %v3994, %v4082
        %v4084 = vpop.f32.mrf.mxu0
        %v4085 = vadd.f32 %v3996, %v4084
        %4086 = vmatmul.bf16.gmra.mxu0 %v3127
        %v4087 = vpop.f32.mrf.mxu0
        %v4088 = vadd.f32 %v3999, %v4087
        %v4089 = vpop.f32.mrf.mxu0
        %v4090 = vadd.f32 %v4001, %v4089
        %4091 = vmatmul.bf16.gmra.mxu0 %v3170
        %v4092 = vpop.f32.mrf.mxu0
        %v4093 = vadd.f32 %v4004, %v4092
        %v4094 = vpop.f32.mrf.mxu0
        %v4095 = vadd.f32 %v4006, %v4094
        %4096 = vmatmul.bf16.gmra.mxu0 %v3213
        %v4097 = vpop.f32.mrf.mxu0
        %v4098 = vadd.f32 %v4009, %v4097
        %v4099 = vpop.f32.mrf.mxu0
        %v4100 = vadd.f32 %v4011, %v4099
        %4101 = vmatmul.bf16.gmra.mxu0 %v3256
        %v4102 = vpop.f32.mrf.mxu0
        %v4103 = vadd.f32 %v4014, %v4102
        %v4104 = vpop.f32.mrf.mxu0
        %v4105 = vadd.f32 %v4016, %v4104
        %4106 = vmatmul.bf16.gmra.mxu0 %v3299
        %v4107 = vpop.f32.mrf.mxu0
        %v4108 = vadd.f32 %v4019, %v4107
        %v4109 = vpop.f32.mrf.mxu0
        %v4110 = vadd.f32 %v4021, %v4109
        %4111 = vmatmul.bf16.gmra.mxu0 %v3342
        %v4112 = vpop.f32.mrf.mxu0
        %v4113 = vadd.f32 %v4024, %v4112
        %v4114 = vpop.f32.mrf.mxu0
        %v4115 = vadd.f32 %v4026, %v4114
        %4116 = vmatmul.bf16.gmra.mxu0 %v3385
        %v4117 = vpop.f32.mrf.mxu0
        %v4118 = vadd.f32 %v4029, %v4117
        %v4119 = vpop.f32.mrf.mxu0
        %v4120 = vadd.f32 %v4031, %v4119
        %4121 = vmatmul.bf16.gmra.mxu0 %v3428
        %v4122 = vpop.f32.mrf.mxu0
        %v4123 = vadd.f32 %v4034, %v4122
        %v4124 = vpop.f32.mrf.mxu0
        %v4125 = vadd.f32 %v4036, %v4124
        %4126 = vmatmul.bf16.gmra.mxu0 %v3471
        %v4127 = vpop.f32.mrf.mxu0
        %v4128 = vadd.f32 %v4039, %v4127
        %v4129 = vpop.f32.mrf.mxu0
        %v4130 = vadd.f32 %v4041, %v4129
        %4131 = vmatmul.bf16.gmra.mxu0 %v3514
        %v4132 = vpop.f32.mrf.mxu0
        %v4133 = vadd.f32 %v4044, %v4132
        %v4134 = vpop.f32.mrf.mxu0
        %v4135 = vadd.f32 %v4046, %v4134
        %4136 = vmatmul.bf16.gmra.mxu0 %v3557
        %v4137 = vpop.f32.mrf.mxu0
        %v4138 = vadd.f32 %v4049, %v4137
        %v4139 = vpop.f32.mrf.mxu0
        %v4140 = vadd.f32 %v4051, %v4139
        %4141 = vmatmul.bf16.gmra.mxu0 %v3600
        %v4142 = vpop.f32.mrf.mxu0
        %v4143 = vadd.f32 %v4054, %v4142
        %v4144 = vpop.f32.mrf.mxu0
        %v4145 = vadd.f32 %v4056, %v4144
        %4146 = vmatmul.bf16.gmra.mxu0 %v3643
        %v4147 = vpop.f32.mrf.mxu0
        %v4148 = vadd.f32 %v4059, %v4147
        %v4149 = vpop.f32.mrf.mxu0
        %v4150 = vadd.f32 %v4061, %v4149
        %4151 = vdwg.mxu0
        %v4152 = vld [vmem:[#allocation3] sm:$0xff]
        %v4153 = vld [vmem:[#allocation3 + $0x8] sm:$0xff]
        %v4154 = vld [vmem:[#allocation3 + $0x10] sm:$0xff]
        %v4155 = vld [vmem:[#allocation3 + $0x18] sm:$0xff]
        %v4156 = vld [vmem:[#allocation3 + $0x20] sm:$0xff]
        %v4157 = vld [vmem:[#allocation3 + $0x28] sm:$0xff]
        %v4158 = vld [vmem:[#allocation3 + $0x30] sm:$0xff]
        %v4159 = vld [vmem:[#allocation3 + $0x38] sm:$0xff]
        %v4160 = vld [vmem:[#allocation3 + $0x40] sm:$0xff]
        %v4161 = vld [vmem:[#allocation3 + $0x48] sm:$0xff]
        %v4162 = vld [vmem:[#allocation3 + $0x50] sm:$0xff]
        %v4163 = vld [vmem:[#allocation3 + $0x58] sm:$0xff]
        %v4164 = vld [vmem:[#allocation3 + $0x60] sm:$0xff]
        %v4165 = vld [vmem:[#allocation3 + $0x68] sm:$0xff]
        %v4166 = vld [vmem:[#allocation3 + $0x70] sm:$0xff]
        %v4167 = vld [vmem:[#allocation3 + $0x78] sm:$0xff]
        %v4168 = vld [vmem:[#allocation3 + $0x80] sm:$0xff]
        %v4169 = vld [vmem:[#allocation3 + $0x88] sm:$0xff]
        %v4170 = vld [vmem:[#allocation3 + $0x90] sm:$0xff]
        %v4171 = vld [vmem:[#allocation3 + $0x98] sm:$0xff]
        %v4172 = vld [vmem:[#allocation3 + $0xa0] sm:$0xff]
        %v4173 = vld [vmem:[#allocation3 + $0xa8] sm:$0xff]
        %v4174 = vld [vmem:[#allocation3 + $0xb0] sm:$0xff]
        %v4175 = vld [vmem:[#allocation3 + $0xb8] sm:$0xff]
        %v4176 = vld [vmem:[#allocation3 + $0xc0] sm:$0xff]
        %v4177 = vld [vmem:[#allocation3 + $0xc8] sm:$0xff]
        %v4178 = vld [vmem:[#allocation3 + $0xd0] sm:$0xff]
        %v4179 = vld [vmem:[#allocation3 + $0xd8] sm:$0xff]
        %v4180 = vld [vmem:[#allocation3 + $0xe0] sm:$0xff]
        %v4181 = vld [vmem:[#allocation3 + $0xe8] sm:$0xff]
        %v4182 = vld [vmem:[#allocation3 + $0xf0] sm:$0xff]
        %v4183 = vld [vmem:[#allocation3 + $0xf8] sm:$0xff]
        %v4184 = vadd.f32 %v4152, %v4073
        %v4185 = vadd.f32 %v4153, %v4075
        %v4186 = vadd.f32 %v4154, %v4078
        %v4187 = vadd.f32 %v4155, %v4080
        %v4188 = vadd.f32 %v4156, %v4083
        %v4189 = vadd.f32 %v4157, %v4085
        %v4190 = vadd.f32 %v4158, %v4088
        %v4191 = vadd.f32 %v4159, %v4090
        %v4192 = vadd.f32 %v4160, %v4093
        %v4193 = vadd.f32 %v4161, %v4095
        %v4194 = vadd.f32 %v4162, %v4098
        %v4195 = vadd.f32 %v4163, %v4100
        %v4196 = vadd.f32 %v4164, %v4103
        %v4197 = vadd.f32 %v4165, %v4105
        %v4198 = vadd.f32 %v4166, %v4108
        %v4199 = vadd.f32 %v4167, %v4110
        %v4200 = vadd.f32 %v4168, %v4113
        %v4201 = vadd.f32 %v4169, %v4115
        %v4202 = vadd.f32 %v4170, %v4118
        %v4203 = vadd.f32 %v4171, %v4120
        %v4204 = vadd.f32 %v4172, %v4123
        %v4205 = vadd.f32 %v4173, %v4125
        %v4206 = vadd.f32 %v4174, %v4128
        %v4207 = vadd.f32 %v4175, %v4130
        %v4208 = vadd.f32 %v4176, %v4133
        %v4209 = vadd.f32 %v4177, %v4135
        %v4210 = vadd.f32 %v4178, %v4138
        %v4211 = vadd.f32 %v4179, %v4140
        %v4212 = vadd.f32 %v4180, %v4143
        %v4213 = vadd.f32 %v4181, %v4145
        %v4214 = vadd.f32 %v4182, %v4148
        %v4215 = vadd.f32 %v4183, %v4150
        %4216 = vst [vmem:[#allocation3] sm:$0xff] %v4184
        %4217 = vst [vmem:[#allocation3 + $0x8] sm:$0xff] %v4185
        %4218 = vst [vmem:[#allocation3 + $0x10] sm:$0xff] %v4186
        %4219 = vst [vmem:[#allocation3 + $0x18] sm:$0xff] %v4187
        %4220 = vst [vmem:[#allocation3 + $0x20] sm:$0xff] %v4188
        %4221 = vst [vmem:[#allocation3 + $0x28] sm:$0xff] %v4189
        %4222 = vst [vmem:[#allocation3 + $0x30] sm:$0xff] %v4190
        %4223 = vst [vmem:[#allocation3 + $0x38] sm:$0xff] %v4191
        %4224 = vst [vmem:[#allocation3 + $0x40] sm:$0xff] %v4192
        %4225 = vst [vmem:[#allocation3 + $0x48] sm:$0xff] %v4193
        %4226 = vst [vmem:[#allocation3 + $0x50] sm:$0xff] %v4194
        %4227 = vst [vmem:[#allocation3 + $0x58] sm:$0xff] %v4195
        %4228 = vst [vmem:[#allocation3 + $0x60] sm:$0xff] %v4196
        %4229 = vst [vmem:[#allocation3 + $0x68] sm:$0xff] %v4197
        %4230 = vst [vmem:[#allocation3 + $0x70] sm:$0xff] %v4198
        %4231 = vst [vmem:[#allocation3 + $0x78] sm:$0xff] %v4199
        %4232 = vst [vmem:[#allocation3 + $0x80] sm:$0xff] %v4200
        %4233 = vst [vmem:[#allocation3 + $0x88] sm:$0xff] %v4201
        %4234 = vst [vmem:[#allocation3 + $0x90] sm:$0xff] %v4202
        %4235 = vst [vmem:[#allocation3 + $0x98] sm:$0xff] %v4203
        %4236 = vst [vmem:[#allocation3 + $0xa0] sm:$0xff] %v4204
        %4237 = vst [vmem:[#allocation3 + $0xa8] sm:$0xff] %v4205
        %4238 = vst [vmem:[#allocation3 + $0xb0] sm:$0xff] %v4206
        %4239 = vst [vmem:[#allocation3 + $0xb8] sm:$0xff] %v4207
        %4240 = vst [vmem:[#allocation3 + $0xc0] sm:$0xff] %v4208
        %4241 = vst [vmem:[#allocation3 + $0xc8] sm:$0xff] %v4209
        %4242 = vst [vmem:[#allocation3 + $0xd0] sm:$0xff] %v4210
        %4243 = vst [vmem:[#allocation3 + $0xd8] sm:$0xff] %v4211
        %4244 = vst [vmem:[#allocation3 + $0xe0] sm:$0xff] %v4212
        %4245 = vst [vmem:[#allocation3 + $0xe8] sm:$0xff] %v4213
        %4246 = vst [vmem:[#allocation3 + $0xf0] sm:$0xff] %v4214
        %4247 = vst [vmem:[#allocation3 + $0xf8] sm:$0xff] %v4215
        %s4248 = scalar_lea.vmem [#allocation2], 48
        %v4249 = vld [vmem:[%s4248 + $0x4] sm:$0x8]
        %v4250 = vld [vmem:[%s4248 + $0x8] sm:$0xf]
        %v4251 = vld [vmem:[%s4248 + $0xc] sm:$0xf]
        %v4252 = vld [vmem:[%s4248 + $0x10] sm:$0x1]
        %v4253 = vld [vmem:[%s4248 + $0x1c] sm:$0x8]
        %v4254 = vld [vmem:[%s4248 + $0x20] sm:$0xf]
        %v4255 = vld [vmem:[%s4248 + $0x24] sm:$0xf]
        %v4256 = vld [vmem:[%s4248 + $0x28] sm:$0x1]
        %v4257 = vld [vmem:[%s4248 + $0x34] sm:$0x8]
        %v4258 = vld [vmem:[%s4248 + $0x38] sm:$0xf]
        %v4259 = vld [vmem:[%s4248 + $0x3c] sm:$0xf]
        %v4260 = vld [vmem:[%s4248 + $0x40] sm:$0x1]
        %v4261 = vld [vmem:[%s4248 + $0x4c] sm:$0x8]
        %v4262 = vld [vmem:[%s4248 + $0x50] sm:$0xf]
        %v4263 = vld [vmem:[%s4248 + $0x54] sm:$0xf]
        %v4264 = vld [vmem:[%s4248 + $0x58] sm:$0x1]
        %v4265 = vld [vmem:[%s4248 + $0x64] sm:$0x8]
        %v4266 = vld [vmem:[%s4248 + $0x68] sm:$0xf]
        %v4267 = vld [vmem:[%s4248 + $0x6c] sm:$0xf]
        %v4268 = vld [vmem:[%s4248 + $0x70] sm:$0x1]
        %v4269 = vld [vmem:[%s4248 + $0x7c] sm:$0x8]
        %v4270 = vld [vmem:[%s4248 + $0x80] sm:$0xf]
        %v4271 = vld [vmem:[%s4248 + $0x84] sm:$0xf]
        %v4272 = vld [vmem:[%s4248 + $0x88] sm:$0x1]
        %v4273 = vld [vmem:[%s4248 + $0x94] sm:$0x8]
        %v4274 = vld [vmem:[%s4248 + $0x98] sm:$0xf]
        %v4275 = vld [vmem:[%s4248 + $0x9c] sm:$0xf]
        %v4276 = vld [vmem:[%s4248 + $0xa0] sm:$0x1]
        %v4277 = vld [vmem:[%s4248 + $0xac] sm:$0x8]
        %v4278 = vld [vmem:[%s4248 + $0xb0] sm:$0xf]
        %v4279 = vld [vmem:[%s4248 + $0xb4] sm:$0xf]
        %v4280 = vld [vmem:[%s4248 + $0xb8] sm:$0x1]
        %v4281 = vld [vmem:[%s4248 + $0xc4] sm:$0x8]
        %v4282 = vld [vmem:[%s4248 + $0xc8] sm:$0xf]
        %v4283 = vld [vmem:[%s4248 + $0xcc] sm:$0xf]
        %v4284 = vld [vmem:[%s4248 + $0xd0] sm:$0x1]
        %v4285 = vld [vmem:[%s4248 + $0xdc] sm:$0x8]
        %v4286 = vld [vmem:[%s4248 + $0xe0] sm:$0xf]
        %v4287 = vld [vmem:[%s4248 + $0xe4] sm:$0xf]
        %v4288 = vld [vmem:[%s4248 + $0xe8] sm:$0x1]
        %v4289 = vld [vmem:[%s4248 + $0xf4] sm:$0x8]
        %v4290 = vld [vmem:[%s4248 + $0xf8] sm:$0xf]
        %v4291 = vld [vmem:[%s4248 + $0xfc] sm:$0xf]
        %v4292 = vld [vmem:[%s4248 + $0x100] sm:$0x1]
        %v4293 = vld [vmem:[%s4248 + $0x10c] sm:$0x8]
        %v4294 = vld [vmem:[%s4248 + $0x110] sm:$0xf]
        %v4295 = vld [vmem:[%s4248 + $0x114] sm:$0xf]
        %v4296 = vld [vmem:[%s4248 + $0x118] sm:$0x1]
        %v4297 = vld [vmem:[%s4248 + $0x124] sm:$0x8]
        %v4298 = vld [vmem:[%s4248 + $0x128] sm:$0xf]
        %v4299 = vld [vmem:[%s4248 + $0x12c] sm:$0xf]
        %v4300 = vld [vmem:[%s4248 + $0x130] sm:$0x1]
        %v4301 = vld [vmem:[%s4248 + $0x13c] sm:$0x8]
        %v4302 = vld [vmem:[%s4248 + $0x140] sm:$0xf]
        %v4303 = vld [vmem:[%s4248 + $0x144] sm:$0xf]
        %v4304 = vld [vmem:[%s4248 + $0x148] sm:$0x1]
        %v4305 = vld [vmem:[%s4248 + $0x154] sm:$0x8]
        %v4306 = vld [vmem:[%s4248 + $0x158] sm:$0xf]
        %v4307 = vld [vmem:[%s4248 + $0x15c] sm:$0xf]
        %v4308 = vld [vmem:[%s4248 + $0x160] sm:$0x1]
        %v4309 = vld [vmem:[%s4248 + $0x16c] sm:$0x8]
        %v4310 = vld [vmem:[%s4248 + $0x170] sm:$0xf]
        %v4311 = vld [vmem:[%s4248 + $0x174] sm:$0xf]
        %v4312 = vld [vmem:[%s4248 + $0x178] sm:$0x1]
        %v4361 = vunpack.c.l.b16 %v4249
        %v4362 = vunpack.c.l.b16 %v4250
        %v4363 = vunpack.c.l.b16 %v4251
        %v4364 = vunpack.c.l.b16 %v4253
        %v4365 = vunpack.c.l.b16 %v4254
        %v4366 = vunpack.c.l.b16 %v4255
        %v4367 = vunpack.c.l.b16 %v4257
        %v4368 = vunpack.c.l.b16 %v4258
        %v4369 = vunpack.c.l.b16 %v4259
        %v4370 = vunpack.c.l.b16 %v4261
        %v4371 = vunpack.c.l.b16 %v4262
        %v4372 = vunpack.c.l.b16 %v4263
        %v4373 = vunpack.c.l.b16 %v4265
        %v4374 = vunpack.c.l.b16 %v4266
        %v4375 = vunpack.c.l.b16 %v4267
        %v4376 = vunpack.c.l.b16 %v4269
        %v4377 = vunpack.c.l.b16 %v4270
        %v4378 = vunpack.c.l.b16 %v4271
        %v4379 = vunpack.c.l.b16 %v4273
        %v4380 = vunpack.c.l.b16 %v4274
        %v4381 = vunpack.c.l.b16 %v4275
        %v4382 = vunpack.c.l.b16 %v4277
        %v4383 = vunpack.c.l.b16 %v4278
        %v4384 = vunpack.c.l.b16 %v4279
        %v4385 = vunpack.c.l.b16 %v4281
        %v4386 = vunpack.c.l.b16 %v4282
        %v4387 = vunpack.c.l.b16 %v4283
        %v4388 = vunpack.c.l.b16 %v4285
        %v4389 = vunpack.c.l.b16 %v4286
        %v4390 = vunpack.c.l.b16 %v4287
        %v4391 = vunpack.c.l.b16 %v4289
        %v4392 = vunpack.c.l.b16 %v4290
        %v4393 = vunpack.c.l.b16 %v4291
        %v4394 = vunpack.c.l.b16 %v4293
        %v4395 = vunpack.c.l.b16 %v4294
        %v4396 = vunpack.c.l.b16 %v4295
        %v4397 = vunpack.c.l.b16 %v4297
        %v4398 = vunpack.c.l.b16 %v4298
        %v4399 = vunpack.c.l.b16 %v4299
        %v4400 = vunpack.c.l.b16 %v4301
        %v4401 = vunpack.c.l.b16 %v4302
        %v4402 = vunpack.c.l.b16 %v4303
        %v4403 = vunpack.c.l.b16 %v4305
        %v4404 = vunpack.c.l.b16 %v4306
        %v4405 = vunpack.c.l.b16 %v4307
        %v4406 = vunpack.c.l.b16 %v4309
        %v4407 = vunpack.c.l.b16 %v4310
        %v4408 = vunpack.c.l.b16 %v4311
        %v4409 = vpack.c.b16 %v4362, %v4361
        %v4410 = vpack.c.b16 %v4363, %v4363
        %v4411 = vpack.c.b16 %v4365, %v4364
        %v4412 = vpack.c.b16 %v4366, %v4366
        %v4413 = vpack.c.b16 %v4368, %v4367
        %v4414 = vpack.c.b16 %v4369, %v4369
        %v4415 = vpack.c.b16 %v4371, %v4370
        %v4416 = vpack.c.b16 %v4372, %v4372
        %v4417 = vpack.c.b16 %v4374, %v4373
        %v4418 = vpack.c.b16 %v4375, %v4375
        %v4419 = vpack.c.b16 %v4377, %v4376
        %v4420 = vpack.c.b16 %v4378, %v4378
        %v4421 = vpack.c.b16 %v4380, %v4379
        %v4422 = vpack.c.b16 %v4381, %v4381
        %v4423 = vpack.c.b16 %v4383, %v4382
        %v4424 = vpack.c.b16 %v4384, %v4384
        %v4425 = vpack.c.b16 %v4386, %v4385
        %v4426 = vpack.c.b16 %v4387, %v4387
        %v4427 = vpack.c.b16 %v4389, %v4388
        %v4428 = vpack.c.b16 %v4390, %v4390
        %v4429 = vpack.c.b16 %v4392, %v4391
        %v4430 = vpack.c.b16 %v4393, %v4393
        %v4431 = vpack.c.b16 %v4395, %v4394
        %v4432 = vpack.c.b16 %v4396, %v4396
        %v4433 = vpack.c.b16 %v4398, %v4397
        %v4434 = vpack.c.b16 %v4399, %v4399
        %v4435 = vpack.c.b16 %v4401, %v4400
        %v4436 = vpack.c.b16 %v4402, %v4402
        %v4437 = vpack.c.b16 %v4404, %v4403
        %v4438 = vpack.c.b16 %v4405, %v4405
        %v4439 = vpack.c.b16 %v4407, %v4406
        %v4440 = vpack.c.b16 %v4408, %v4408
        %v4441 = vpack.c.b16 %v4363, %v4362
        %v4442 = vpack.c.b16 %v4366, %v4365
        %v4443 = vpack.c.b16 %v4369, %v4368
        %v4444 = vpack.c.b16 %v4372, %v4371
        %v4445 = vpack.c.b16 %v4375, %v4374
        %v4446 = vpack.c.b16 %v4378, %v4377
        %v4447 = vpack.c.b16 %v4381, %v4380
        %v4448 = vpack.c.b16 %v4384, %v4383
        %v4449 = vpack.c.b16 %v4387, %v4386
        %v4450 = vpack.c.b16 %v4390, %v4389
        %v4451 = vpack.c.b16 %v4393, %v4392
        %v4452 = vpack.c.b16 %v4396, %v4395
        %v4453 = vpack.c.b16 %v4399, %v4398
        %v4454 = vpack.c.b16 %v4402, %v4401
        %v4455 = vpack.c.b16 %v4405, %v4404
        %v4456 = vpack.c.b16 %v4408, %v4407
        %v4458 = vshrl.u32 %v4441, 16
        %v4460 = vrot.slane %v4458, 4
        %v4461 = vshll.u32 %v4441, 16
        %v4463 = vrot.slane %v4461, 5
        %v4464 = vor.u32 %v4460, %v4463
        %v4466 = vshrl.u32 %v4442, 16
        %v4468 = vrot.slane %v4466, 4
        %v4469 = vshll.u32 %v4442, 16
        %v4471 = vrot.slane %v4469, 5
        %v4472 = vor.u32 %v4468, %v4471
        %v4474 = vshrl.u32 %v4443, 16
        %v4476 = vrot.slane %v4474, 4
        %v4477 = vshll.u32 %v4443, 16
        %v4479 = vrot.slane %v4477, 5
        %v4480 = vor.u32 %v4476, %v4479
        %v4482 = vshrl.u32 %v4444, 16
        %v4484 = vrot.slane %v4482, 4
        %v4485 = vshll.u32 %v4444, 16
        %v4487 = vrot.slane %v4485, 5
        %v4488 = vor.u32 %v4484, %v4487
        %v4490 = vshrl.u32 %v4445, 16
        %v4492 = vrot.slane %v4490, 4
        %v4493 = vshll.u32 %v4445, 16
        %v4495 = vrot.slane %v4493, 5
        %v4496 = vor.u32 %v4492, %v4495
        %v4498 = vshrl.u32 %v4446, 16
        %v4500 = vrot.slane %v4498, 4
        %v4501 = vshll.u32 %v4446, 16
        %v4503 = vrot.slane %v4501, 5
        %v4504 = vor.u32 %v4500, %v4503
        %v4506 = vshrl.u32 %v4447, 16
        %v4508 = vrot.slane %v4506, 4
        %v4509 = vshll.u32 %v4447, 16
        %v4511 = vrot.slane %v4509, 5
        %v4512 = vor.u32 %v4508, %v4511
        %v4514 = vshrl.u32 %v4448, 16
        %v4516 = vrot.slane %v4514, 4
        %v4517 = vshll.u32 %v4448, 16
        %v4519 = vrot.slane %v4517, 5
        %v4520 = vor.u32 %v4516, %v4519
        %v4522 = vshrl.u32 %v4449, 16
        %v4524 = vrot.slane %v4522, 4
        %v4525 = vshll.u32 %v4449, 16
        %v4527 = vrot.slane %v4525, 5
        %v4528 = vor.u32 %v4524, %v4527
        %v4530 = vshrl.u32 %v4450, 16
        %v4532 = vrot.slane %v4530, 4
        %v4533 = vshll.u32 %v4450, 16
        %v4535 = vrot.slane %v4533, 5
        %v4536 = vor.u32 %v4532, %v4535
        %v4538 = vshrl.u32 %v4451, 16
        %v4540 = vrot.slane %v4538, 4
        %v4541 = vshll.u32 %v4451, 16
        %v4543 = vrot.slane %v4541, 5
        %v4544 = vor.u32 %v4540, %v4543
        %v4546 = vshrl.u32 %v4452, 16
        %v4548 = vrot.slane %v4546, 4
        %v4549 = vshll.u32 %v4452, 16
        %v4551 = vrot.slane %v4549, 5
        %v4552 = vor.u32 %v4548, %v4551
        %v4554 = vshrl.u32 %v4453, 16
        %v4556 = vrot.slane %v4554, 4
        %v4557 = vshll.u32 %v4453, 16
        %v4559 = vrot.slane %v4557, 5
        %v4560 = vor.u32 %v4556, %v4559
        %v4562 = vshrl.u32 %v4454, 16
        %v4564 = vrot.slane %v4562, 4
        %v4565 = vshll.u32 %v4454, 16
        %v4567 = vrot.slane %v4565, 5
        %v4568 = vor.u32 %v4564, %v4567
        %v4570 = vshrl.u32 %v4455, 16
        %v4572 = vrot.slane %v4570, 4
        %v4573 = vshll.u32 %v4455, 16
        %v4575 = vrot.slane %v4573, 5
        %v4576 = vor.u32 %v4572, %v4575
        %v4578 = vshrl.u32 %v4456, 16
        %v4580 = vrot.slane %v4578, 4
        %v4581 = vshll.u32 %v4456, 16
        %v4583 = vrot.slane %v4581, 5
        %v4584 = vor.u32 %v4580, %v4583
        %v4601 = vunpack.c.l.b16 %v4252
        %v4602 = vunpack.c.l.b16 %v4256
        %v4603 = vunpack.c.l.b16 %v4260
        %v4604 = vunpack.c.l.b16 %v4264
        %v4605 = vunpack.c.l.b16 %v4268
        %v4606 = vunpack.c.l.b16 %v4272
        %v4607 = vunpack.c.l.b16 %v4276
        %v4608 = vunpack.c.l.b16 %v4280
        %v4609 = vunpack.c.l.b16 %v4284
        %v4610 = vunpack.c.l.b16 %v4288
        %v4611 = vunpack.c.l.b16 %v4292
        %v4612 = vunpack.c.l.b16 %v4296
        %v4613 = vunpack.c.l.b16 %v4300
        %v4614 = vunpack.c.l.b16 %v4304
        %v4615 = vunpack.c.l.b16 %v4308
        %v4616 = vunpack.c.l.b16 %v4312
        %v4617 = vpack.c.b16 %v4601, %v4601
        %v4618 = vpack.c.b16 %v4602, %v4602
        %v4619 = vpack.c.b16 %v4603, %v4603
        %v4620 = vpack.c.b16 %v4604, %v4604
        %v4621 = vpack.c.b16 %v4605, %v4605
        %v4622 = vpack.c.b16 %v4606, %v4606
        %v4623 = vpack.c.b16 %v4607, %v4607
        %v4624 = vpack.c.b16 %v4608, %v4608
        %v4625 = vpack.c.b16 %v4609, %v4609
        %v4626 = vpack.c.b16 %v4610, %v4610
        %v4627 = vpack.c.b16 %v4611, %v4611
        %v4628 = vpack.c.b16 %v4612, %v4612
        %v4629 = vpack.c.b16 %v4613, %v4613
        %v4630 = vpack.c.b16 %v4614, %v4614
        %v4631 = vpack.c.b16 %v4615, %v4615
        %v4632 = vpack.c.b16 %v4616, %v4616
        %v4633 = vrot.slane %v4441, 5
        %v4634 = vrot.slane %v4617, 5
        %v4635 = vsel %vm1247, %v4633, %v4634
        %v4636 = vrot.slane %v4442, 5
        %v4637 = vrot.slane %v4618, 5
        %v4638 = vsel %vm1247, %v4636, %v4637
        %v4639 = vrot.slane %v4443, 5
        %v4640 = vrot.slane %v4619, 5
        %v4641 = vsel %vm1247, %v4639, %v4640
        %v4642 = vrot.slane %v4444, 5
        %v4643 = vrot.slane %v4620, 5
        %v4644 = vsel %vm1247, %v4642, %v4643
        %v4645 = vrot.slane %v4445, 5
        %v4646 = vrot.slane %v4621, 5
        %v4647 = vsel %vm1247, %v4645, %v4646
        %v4648 = vrot.slane %v4446, 5
        %v4649 = vrot.slane %v4622, 5
        %v4650 = vsel %vm1247, %v4648, %v4649
        %v4651 = vrot.slane %v4447, 5
        %v4652 = vrot.slane %v4623, 5
        %v4653 = vsel %vm1247, %v4651, %v4652
        %v4654 = vrot.slane %v4448, 5
        %v4655 = vrot.slane %v4624, 5
        %v4656 = vsel %vm1247, %v4654, %v4655
        %v4657 = vrot.slane %v4449, 5
        %v4658 = vrot.slane %v4625, 5
        %v4659 = vsel %vm1247, %v4657, %v4658
        %v4660 = vrot.slane %v4450, 5
        %v4661 = vrot.slane %v4626, 5
        %v4662 = vsel %vm1247, %v4660, %v4661
        %v4663 = vrot.slane %v4451, 5
        %v4664 = vrot.slane %v4627, 5
        %v4665 = vsel %vm1247, %v4663, %v4664
        %v4666 = vrot.slane %v4452, 5
        %v4667 = vrot.slane %v4628, 5
        %v4668 = vsel %vm1247, %v4666, %v4667
        %v4669 = vrot.slane %v4453, 5
        %v4670 = vrot.slane %v4629, 5
        %v4671 = vsel %vm1247, %v4669, %v4670
        %v4672 = vrot.slane %v4454, 5
        %v4673 = vrot.slane %v4630, 5
        %v4674 = vsel %vm1247, %v4672, %v4673
        %v4675 = vrot.slane %v4455, 5
        %v4676 = vrot.slane %v4631, 5
        %v4677 = vsel %vm1247, %v4675, %v4676
        %v4678 = vrot.slane %v4456, 5
        %v4679 = vrot.slane %v4632, 5
        %v4680 = vsel %vm1247, %v4678, %v4679
        %v4682 = vshrl.u32 %v4409, 16
        %v4684 = vrot.slane %v4682, 3
        %v4685 = vshll.u32 %v4409, 16
        %v4687 = vrot.slane %v4685, 4
        %v4688 = vor.u32 %v4684, %v4687
        %v4690 = vshrl.u32 %v4410, 16
        %v4692 = vrot.slane %v4690, 3
        %v4693 = vshll.u32 %v4410, 16
        %v4695 = vrot.slane %v4693, 4
        %v4696 = vor.u32 %v4692, %v4695
        %v4697 = vsel %vm1296, %v4688, %v4696
        %v4699 = vshrl.u32 %v4464, 16
        %v4701 = vrot.slane %v4699, 3
        %v4702 = vshll.u32 %v4464, 16
        %v4704 = vrot.slane %v4702, 4
        %v4705 = vor.u32 %v4701, %v4704
        %v4706 = vsel %vm1296, %v4705, %v4705
        %v4708 = vshrl.u32 %v4633, 16
        %v4710 = vrot.slane %v4708, 3
        %v4711 = vshll.u32 %v4633, 16
        %v4713 = vrot.slane %v4711, 4
        %v4714 = vor.u32 %v4710, %v4713
        %v4716 = vshrl.u32 %v4635, 16
        %v4718 = vrot.slane %v4716, 3
        %v4719 = vshll.u32 %v4635, 16
        %v4721 = vrot.slane %v4719, 4
        %v4722 = vor.u32 %v4718, %v4721
        %v4723 = vsel %vm1296, %v4714, %v4722
        %v4725 = vshrl.u32 %v4411, 16
        %v4727 = vrot.slane %v4725, 3
        %v4728 = vshll.u32 %v4411, 16
        %v4730 = vrot.slane %v4728, 4
        %v4731 = vor.u32 %v4727, %v4730
        %v4733 = vshrl.u32 %v4412, 16
        %v4735 = vrot.slane %v4733, 3
        %v4736 = vshll.u32 %v4412, 16
        %v4738 = vrot.slane %v4736, 4
        %v4739 = vor.u32 %v4735, %v4738
        %v4740 = vsel %vm1296, %v4731, %v4739
        %v4742 = vshrl.u32 %v4472, 16
        %v4744 = vrot.slane %v4742, 3
        %v4745 = vshll.u32 %v4472, 16
        %v4747 = vrot.slane %v4745, 4
        %v4748 = vor.u32 %v4744, %v4747
        %v4749 = vsel %vm1296, %v4748, %v4748
        %v4751 = vshrl.u32 %v4636, 16
        %v4753 = vrot.slane %v4751, 3
        %v4754 = vshll.u32 %v4636, 16
        %v4756 = vrot.slane %v4754, 4
        %v4757 = vor.u32 %v4753, %v4756
        %v4759 = vshrl.u32 %v4638, 16
        %v4761 = vrot.slane %v4759, 3
        %v4762 = vshll.u32 %v4638, 16
        %v4764 = vrot.slane %v4762, 4
        %v4765 = vor.u32 %v4761, %v4764
        %v4766 = vsel %vm1296, %v4757, %v4765
        %v4768 = vshrl.u32 %v4413, 16
        %v4770 = vrot.slane %v4768, 3
        %v4771 = vshll.u32 %v4413, 16
        %v4773 = vrot.slane %v4771, 4
        %v4774 = vor.u32 %v4770, %v4773
        %v4776 = vshrl.u32 %v4414, 16
        %v4778 = vrot.slane %v4776, 3
        %v4779 = vshll.u32 %v4414, 16
        %v4781 = vrot.slane %v4779, 4
        %v4782 = vor.u32 %v4778, %v4781
        %v4783 = vsel %vm1296, %v4774, %v4782
        %v4785 = vshrl.u32 %v4480, 16
        %v4787 = vrot.slane %v4785, 3
        %v4788 = vshll.u32 %v4480, 16
        %v4790 = vrot.slane %v4788, 4
        %v4791 = vor.u32 %v4787, %v4790
        %v4792 = vsel %vm1296, %v4791, %v4791
        %v4794 = vshrl.u32 %v4639, 16
        %v4796 = vrot.slane %v4794, 3
        %v4797 = vshll.u32 %v4639, 16
        %v4799 = vrot.slane %v4797, 4
        %v4800 = vor.u32 %v4796, %v4799
        %v4802 = vshrl.u32 %v4641, 16
        %v4804 = vrot.slane %v4802, 3
        %v4805 = vshll.u32 %v4641, 16
        %v4807 = vrot.slane %v4805, 4
        %v4808 = vor.u32 %v4804, %v4807
        %v4809 = vsel %vm1296, %v4800, %v4808
        %v4811 = vshrl.u32 %v4415, 16
        %v4813 = vrot.slane %v4811, 3
        %v4814 = vshll.u32 %v4415, 16
        %v4816 = vrot.slane %v4814, 4
        %v4817 = vor.u32 %v4813, %v4816
        %v4819 = vshrl.u32 %v4416, 16
        %v4821 = vrot.slane %v4819, 3
        %v4822 = vshll.u32 %v4416, 16
        %v4824 = vrot.slane %v4822, 4
        %v4825 = vor.u32 %v4821, %v4824
        %v4826 = vsel %vm1296, %v4817, %v4825
        %v4828 = vshrl.u32 %v4488, 16
        %v4830 = vrot.slane %v4828, 3
        %v4831 = vshll.u32 %v4488, 16
        %v4833 = vrot.slane %v4831, 4
        %v4834 = vor.u32 %v4830, %v4833
        %v4835 = vsel %vm1296, %v4834, %v4834
        %v4837 = vshrl.u32 %v4642, 16
        %v4839 = vrot.slane %v4837, 3
        %v4840 = vshll.u32 %v4642, 16
        %v4842 = vrot.slane %v4840, 4
        %v4843 = vor.u32 %v4839, %v4842
        %v4845 = vshrl.u32 %v4644, 16
        %v4847 = vrot.slane %v4845, 3
        %v4848 = vshll.u32 %v4644, 16
        %v4850 = vrot.slane %v4848, 4
        %v4851 = vor.u32 %v4847, %v4850
        %v4852 = vsel %vm1296, %v4843, %v4851
        %v4854 = vshrl.u32 %v4417, 16
        %v4856 = vrot.slane %v4854, 3
        %v4857 = vshll.u32 %v4417, 16
        %v4859 = vrot.slane %v4857, 4
        %v4860 = vor.u32 %v4856, %v4859
        %v4862 = vshrl.u32 %v4418, 16
        %v4864 = vrot.slane %v4862, 3
        %v4865 = vshll.u32 %v4418, 16
        %v4867 = vrot.slane %v4865, 4
        %v4868 = vor.u32 %v4864, %v4867
        %v4869 = vsel %vm1296, %v4860, %v4868
        %v4871 = vshrl.u32 %v4496, 16
        %v4873 = vrot.slane %v4871, 3
        %v4874 = vshll.u32 %v4496, 16
        %v4876 = vrot.slane %v4874, 4
        %v4877 = vor.u32 %v4873, %v4876
        %v4878 = vsel %vm1296, %v4877, %v4877
        %v4880 = vshrl.u32 %v4645, 16
        %v4882 = vrot.slane %v4880, 3
        %v4883 = vshll.u32 %v4645, 16
        %v4885 = vrot.slane %v4883, 4
        %v4886 = vor.u32 %v4882, %v4885
        %v4888 = vshrl.u32 %v4647, 16
        %v4890 = vrot.slane %v4888, 3
        %v4891 = vshll.u32 %v4647, 16
        %v4893 = vrot.slane %v4891, 4
        %v4894 = vor.u32 %v4890, %v4893
        %v4895 = vsel %vm1296, %v4886, %v4894
        %v4897 = vshrl.u32 %v4419, 16
        %v4899 = vrot.slane %v4897, 3
        %v4900 = vshll.u32 %v4419, 16
        %v4902 = vrot.slane %v4900, 4
        %v4903 = vor.u32 %v4899, %v4902
        %v4905 = vshrl.u32 %v4420, 16
        %v4907 = vrot.slane %v4905, 3
        %v4908 = vshll.u32 %v4420, 16
        %v4910 = vrot.slane %v4908, 4
        %v4911 = vor.u32 %v4907, %v4910
        %v4912 = vsel %vm1296, %v4903, %v4911
        %v4914 = vshrl.u32 %v4504, 16
        %v4916 = vrot.slane %v4914, 3
        %v4917 = vshll.u32 %v4504, 16
        %v4919 = vrot.slane %v4917, 4
        %v4920 = vor.u32 %v4916, %v4919
        %v4921 = vsel %vm1296, %v4920, %v4920
        %v4923 = vshrl.u32 %v4648, 16
        %v4925 = vrot.slane %v4923, 3
        %v4926 = vshll.u32 %v4648, 16
        %v4928 = vrot.slane %v4926, 4
        %v4929 = vor.u32 %v4925, %v4928
        %v4931 = vshrl.u32 %v4650, 16
        %v4933 = vrot.slane %v4931, 3
        %v4934 = vshll.u32 %v4650, 16
        %v4936 = vrot.slane %v4934, 4
        %v4937 = vor.u32 %v4933, %v4936
        %v4938 = vsel %vm1296, %v4929, %v4937
        %v4940 = vshrl.u32 %v4421, 16
        %v4942 = vrot.slane %v4940, 3
        %v4943 = vshll.u32 %v4421, 16
        %v4945 = vrot.slane %v4943, 4
        %v4946 = vor.u32 %v4942, %v4945
        %v4948 = vshrl.u32 %v4422, 16
        %v4950 = vrot.slane %v4948, 3
        %v4951 = vshll.u32 %v4422, 16
        %v4953 = vrot.slane %v4951, 4
        %v4954 = vor.u32 %v4950, %v4953
        %v4955 = vsel %vm1296, %v4946, %v4954
        %v4957 = vshrl.u32 %v4512, 16
        %v4959 = vrot.slane %v4957, 3
        %v4960 = vshll.u32 %v4512, 16
        %v4962 = vrot.slane %v4960, 4
        %v4963 = vor.u32 %v4959, %v4962
        %v4964 = vsel %vm1296, %v4963, %v4963
        %v4966 = vshrl.u32 %v4651, 16
        %v4968 = vrot.slane %v4966, 3
        %v4969 = vshll.u32 %v4651, 16
        %v4971 = vrot.slane %v4969, 4
        %v4972 = vor.u32 %v4968, %v4971
        %v4974 = vshrl.u32 %v4653, 16
        %v4976 = vrot.slane %v4974, 3
        %v4977 = vshll.u32 %v4653, 16
        %v4979 = vrot.slane %v4977, 4
        %v4980 = vor.u32 %v4976, %v4979
        %v4981 = vsel %vm1296, %v4972, %v4980
        %v4983 = vshrl.u32 %v4423, 16
        %v4985 = vrot.slane %v4983, 3
        %v4986 = vshll.u32 %v4423, 16
        %v4988 = vrot.slane %v4986, 4
        %v4989 = vor.u32 %v4985, %v4988
        %v4991 = vshrl.u32 %v4424, 16
        %v4993 = vrot.slane %v4991, 3
        %v4994 = vshll.u32 %v4424, 16
        %v4996 = vrot.slane %v4994, 4
        %v4997 = vor.u32 %v4993, %v4996
        %v4998 = vsel %vm1296, %v4989, %v4997
        %v5000 = vshrl.u32 %v4520, 16
        %v5002 = vrot.slane %v5000, 3
        %v5003 = vshll.u32 %v4520, 16
        %v5005 = vrot.slane %v5003, 4
        %v5006 = vor.u32 %v5002, %v5005
        %v5007 = vsel %vm1296, %v5006, %v5006
        %v5009 = vshrl.u32 %v4654, 16
        %v5011 = vrot.slane %v5009, 3
        %v5012 = vshll.u32 %v4654, 16
        %v5014 = vrot.slane %v5012, 4
        %v5015 = vor.u32 %v5011, %v5014
        %v5017 = vshrl.u32 %v4656, 16
        %v5019 = vrot.slane %v5017, 3
        %v5020 = vshll.u32 %v4656, 16
        %v5022 = vrot.slane %v5020, 4
        %v5023 = vor.u32 %v5019, %v5022
        %v5024 = vsel %vm1296, %v5015, %v5023
        %v5026 = vshrl.u32 %v4425, 16
        %v5028 = vrot.slane %v5026, 3
        %v5029 = vshll.u32 %v4425, 16
        %v5031 = vrot.slane %v5029, 4
        %v5032 = vor.u32 %v5028, %v5031
        %v5034 = vshrl.u32 %v4426, 16
        %v5036 = vrot.slane %v5034, 3
        %v5037 = vshll.u32 %v4426, 16
        %v5039 = vrot.slane %v5037, 4
        %v5040 = vor.u32 %v5036, %v5039
        %v5041 = vsel %vm1296, %v5032, %v5040
        %v5043 = vshrl.u32 %v4528, 16
        %v5045 = vrot.slane %v5043, 3
        %v5046 = vshll.u32 %v4528, 16
        %v5048 = vrot.slane %v5046, 4
        %v5049 = vor.u32 %v5045, %v5048
        %v5050 = vsel %vm1296, %v5049, %v5049
        %v5052 = vshrl.u32 %v4657, 16
        %v5054 = vrot.slane %v5052, 3
        %v5055 = vshll.u32 %v4657, 16
        %v5057 = vrot.slane %v5055, 4
        %v5058 = vor.u32 %v5054, %v5057
        %v5060 = vshrl.u32 %v4659, 16
        %v5062 = vrot.slane %v5060, 3
        %v5063 = vshll.u32 %v4659, 16
        %v5065 = vrot.slane %v5063, 4
        %v5066 = vor.u32 %v5062, %v5065
        %v5067 = vsel %vm1296, %v5058, %v5066
        %v5069 = vshrl.u32 %v4427, 16
        %v5071 = vrot.slane %v5069, 3
        %v5072 = vshll.u32 %v4427, 16
        %v5074 = vrot.slane %v5072, 4
        %v5075 = vor.u32 %v5071, %v5074
        %v5077 = vshrl.u32 %v4428, 16
        %v5079 = vrot.slane %v5077, 3
        %v5080 = vshll.u32 %v4428, 16
        %v5082 = vrot.slane %v5080, 4
        %v5083 = vor.u32 %v5079, %v5082
        %v5084 = vsel %vm1296, %v5075, %v5083
        %v5086 = vshrl.u32 %v4536, 16
        %v5088 = vrot.slane %v5086, 3
        %v5089 = vshll.u32 %v4536, 16
        %v5091 = vrot.slane %v5089, 4
        %v5092 = vor.u32 %v5088, %v5091
        %v5093 = vsel %vm1296, %v5092, %v5092
        %v5095 = vshrl.u32 %v4660, 16
        %v5097 = vrot.slane %v5095, 3
        %v5098 = vshll.u32 %v4660, 16
        %v5100 = vrot.slane %v5098, 4
        %v5101 = vor.u32 %v5097, %v5100
        %v5103 = vshrl.u32 %v4662, 16
        %v5105 = vrot.slane %v5103, 3
        %v5106 = vshll.u32 %v4662, 16
        %v5108 = vrot.slane %v5106, 4
        %v5109 = vor.u32 %v5105, %v5108
        %v5110 = vsel %vm1296, %v5101, %v5109
        %v5112 = vshrl.u32 %v4429, 16
        %v5114 = vrot.slane %v5112, 3
        %v5115 = vshll.u32 %v4429, 16
        %v5117 = vrot.slane %v5115, 4
        %v5118 = vor.u32 %v5114, %v5117
        %v5120 = vshrl.u32 %v4430, 16
        %v5122 = vrot.slane %v5120, 3
        %v5123 = vshll.u32 %v4430, 16
        %v5125 = vrot.slane %v5123, 4
        %v5126 = vor.u32 %v5122, %v5125
        %v5127 = vsel %vm1296, %v5118, %v5126
        %v5129 = vshrl.u32 %v4544, 16
        %v5131 = vrot.slane %v5129, 3
        %v5132 = vshll.u32 %v4544, 16
        %v5134 = vrot.slane %v5132, 4
        %v5135 = vor.u32 %v5131, %v5134
        %v5136 = vsel %vm1296, %v5135, %v5135
        %v5138 = vshrl.u32 %v4663, 16
        %v5140 = vrot.slane %v5138, 3
        %v5141 = vshll.u32 %v4663, 16
        %v5143 = vrot.slane %v5141, 4
        %v5144 = vor.u32 %v5140, %v5143
        %v5146 = vshrl.u32 %v4665, 16
        %v5148 = vrot.slane %v5146, 3
        %v5149 = vshll.u32 %v4665, 16
        %v5151 = vrot.slane %v5149, 4
        %v5152 = vor.u32 %v5148, %v5151
        %v5153 = vsel %vm1296, %v5144, %v5152
        %v5155 = vshrl.u32 %v4431, 16
        %v5157 = vrot.slane %v5155, 3
        %v5158 = vshll.u32 %v4431, 16
        %v5160 = vrot.slane %v5158, 4
        %v5161 = vor.u32 %v5157, %v5160
        %v5163 = vshrl.u32 %v4432, 16
        %v5165 = vrot.slane %v5163, 3
        %v5166 = vshll.u32 %v4432, 16
        %v5168 = vrot.slane %v5166, 4
        %v5169 = vor.u32 %v5165, %v5168
        %v5170 = vsel %vm1296, %v5161, %v5169
        %v5172 = vshrl.u32 %v4552, 16
        %v5174 = vrot.slane %v5172, 3
        %v5175 = vshll.u32 %v4552, 16
        %v5177 = vrot.slane %v5175, 4
        %v5178 = vor.u32 %v5174, %v5177
        %v5179 = vsel %vm1296, %v5178, %v5178
        %v5181 = vshrl.u32 %v4666, 16
        %v5183 = vrot.slane %v5181, 3
        %v5184 = vshll.u32 %v4666, 16
        %v5186 = vrot.slane %v5184, 4
        %v5187 = vor.u32 %v5183, %v5186
        %v5189 = vshrl.u32 %v4668, 16
        %v5191 = vrot.slane %v5189, 3
        %v5192 = vshll.u32 %v4668, 16
        %v5194 = vrot.slane %v5192, 4
        %v5195 = vor.u32 %v5191, %v5194
        %v5196 = vsel %vm1296, %v5187, %v5195
        %v5198 = vshrl.u32 %v4433, 16
        %v5200 = vrot.slane %v5198, 3
        %v5201 = vshll.u32 %v4433, 16
        %v5203 = vrot.slane %v5201, 4
        %v5204 = vor.u32 %v5200, %v5203
        %v5206 = vshrl.u32 %v4434, 16
        %v5208 = vrot.slane %v5206, 3
        %v5209 = vshll.u32 %v4434, 16
        %v5211 = vrot.slane %v5209, 4
        %v5212 = vor.u32 %v5208, %v5211
        %v5213 = vsel %vm1296, %v5204, %v5212
        %v5215 = vshrl.u32 %v4560, 16
        %v5217 = vrot.slane %v5215, 3
        %v5218 = vshll.u32 %v4560, 16
        %v5220 = vrot.slane %v5218, 4
        %v5221 = vor.u32 %v5217, %v5220
        %v5222 = vsel %vm1296, %v5221, %v5221
        %v5224 = vshrl.u32 %v4669, 16
        %v5226 = vrot.slane %v5224, 3
        %v5227 = vshll.u32 %v4669, 16
        %v5229 = vrot.slane %v5227, 4
        %v5230 = vor.u32 %v5226, %v5229
        %v5232 = vshrl.u32 %v4671, 16
        %v5234 = vrot.slane %v5232, 3
        %v5235 = vshll.u32 %v4671, 16
        %v5237 = vrot.slane %v5235, 4
        %v5238 = vor.u32 %v5234, %v5237
        %v5239 = vsel %vm1296, %v5230, %v5238
        %v5241 = vshrl.u32 %v4435, 16
        %v5243 = vrot.slane %v5241, 3
        %v5244 = vshll.u32 %v4435, 16
        %v5246 = vrot.slane %v5244, 4
        %v5247 = vor.u32 %v5243, %v5246
        %v5249 = vshrl.u32 %v4436, 16
        %v5251 = vrot.slane %v5249, 3
        %v5252 = vshll.u32 %v4436, 16
        %v5254 = vrot.slane %v5252, 4
        %v5255 = vor.u32 %v5251, %v5254
        %v5256 = vsel %vm1296, %v5247, %v5255
        %v5258 = vshrl.u32 %v4568, 16
        %v5260 = vrot.slane %v5258, 3
        %v5261 = vshll.u32 %v4568, 16
        %v5263 = vrot.slane %v5261, 4
        %v5264 = vor.u32 %v5260, %v5263
        %v5265 = vsel %vm1296, %v5264, %v5264
        %v5267 = vshrl.u32 %v4672, 16
        %v5269 = vrot.slane %v5267, 3
        %v5270 = vshll.u32 %v4672, 16
        %v5272 = vrot.slane %v5270, 4
        %v5273 = vor.u32 %v5269, %v5272
        %v5275 = vshrl.u32 %v4674, 16
        %v5277 = vrot.slane %v5275, 3
        %v5278 = vshll.u32 %v4674, 16
        %v5280 = vrot.slane %v5278, 4
        %v5281 = vor.u32 %v5277, %v5280
        %v5282 = vsel %vm1296, %v5273, %v5281
        %v5284 = vshrl.u32 %v4437, 16
        %v5286 = vrot.slane %v5284, 3
        %v5287 = vshll.u32 %v4437, 16
        %v5289 = vrot.slane %v5287, 4
        %v5290 = vor.u32 %v5286, %v5289
        %v5292 = vshrl.u32 %v4438, 16
        %v5294 = vrot.slane %v5292, 3
        %v5295 = vshll.u32 %v4438, 16
        %v5297 = vrot.slane %v5295, 4
        %v5298 = vor.u32 %v5294, %v5297
        %v5299 = vsel %vm1296, %v5290, %v5298
        %v5301 = vshrl.u32 %v4576, 16
        %v5303 = vrot.slane %v5301, 3
        %v5304 = vshll.u32 %v4576, 16
        %v5306 = vrot.slane %v5304, 4
        %v5307 = vor.u32 %v5303, %v5306
        %v5308 = vsel %vm1296, %v5307, %v5307
        %v5310 = vshrl.u32 %v4675, 16
        %v5312 = vrot.slane %v5310, 3
        %v5313 = vshll.u32 %v4675, 16
        %v5315 = vrot.slane %v5313, 4
        %v5316 = vor.u32 %v5312, %v5315
        %v5318 = vshrl.u32 %v4677, 16
        %v5320 = vrot.slane %v5318, 3
        %v5321 = vshll.u32 %v4677, 16
        %v5323 = vrot.slane %v5321, 4
        %v5324 = vor.u32 %v5320, %v5323
        %v5325 = vsel %vm1296, %v5316, %v5324
        %v5327 = vshrl.u32 %v4439, 16
        %v5329 = vrot.slane %v5327, 3
        %v5330 = vshll.u32 %v4439, 16
        %v5332 = vrot.slane %v5330, 4
        %v5333 = vor.u32 %v5329, %v5332
        %v5335 = vshrl.u32 %v4440, 16
        %v5337 = vrot.slane %v5335, 3
        %v5338 = vshll.u32 %v4440, 16
        %v5340 = vrot.slane %v5338, 4
        %v5341 = vor.u32 %v5337, %v5340
        %v5342 = vsel %vm1296, %v5333, %v5341
        %v5344 = vshrl.u32 %v4584, 16
        %v5346 = vrot.slane %v5344, 3
        %v5347 = vshll.u32 %v4584, 16
        %v5349 = vrot.slane %v5347, 4
        %v5350 = vor.u32 %v5346, %v5349
        %v5351 = vsel %vm1296, %v5350, %v5350
        %v5353 = vshrl.u32 %v4678, 16
        %v5355 = vrot.slane %v5353, 3
        %v5356 = vshll.u32 %v4678, 16
        %v5358 = vrot.slane %v5356, 4
        %v5359 = vor.u32 %v5355, %v5358
        %v5361 = vshrl.u32 %v4680, 16
        %v5363 = vrot.slane %v5361, 3
        %v5364 = vshll.u32 %v4680, 16
        %v5366 = vrot.slane %v5364, 4
        %v5367 = vor.u32 %v5363, %v5366
        %v5368 = vsel %vm1296, %v5359, %v5367
        %s5417 = scalar_lea.vmem [#allocation9], 384
        %v5418 = vld [vmem:[%s5417] sm:$0xf]
        %v5419 = vld [vmem:[%s5417 + $0x4] sm:$0xf]
        %v5420 = vld [vmem:[%s5417 + $0x8] sm:$0xf]
        %v5421 = vld [vmem:[%s5417 + $0xc] sm:$0xf]
        %v5422 = vld [vmem:[%s5417 + $0x10] sm:$0xf]
        %v5423 = vld [vmem:[%s5417 + $0x14] sm:$0xf]
        %v5424 = vld [vmem:[%s5417 + $0x18] sm:$0xf]
        %v5425 = vld [vmem:[%s5417 + $0x1c] sm:$0xf]
        %v5426 = vld [vmem:[%s5417 + $0x20] sm:$0xf]
        %v5427 = vld [vmem:[%s5417 + $0x24] sm:$0xf]
        %v5428 = vld [vmem:[%s5417 + $0x28] sm:$0xf]
        %v5429 = vld [vmem:[%s5417 + $0x2c] sm:$0xf]
        %v5430 = vld [vmem:[%s5417 + $0x30] sm:$0xf]
        %v5431 = vld [vmem:[%s5417 + $0x34] sm:$0xf]
        %v5432 = vld [vmem:[%s5417 + $0x38] sm:$0xf]
        %v5433 = vld [vmem:[%s5417 + $0x3c] sm:$0xf]
        %v5434 = vld [vmem:[%s5417 + $0x40] sm:$0xf]
        %v5435 = vld [vmem:[%s5417 + $0x44] sm:$0xf]
        %v5436 = vld [vmem:[%s5417 + $0x48] sm:$0xf]
        %v5437 = vld [vmem:[%s5417 + $0x4c] sm:$0xf]
        %v5438 = vld [vmem:[%s5417 + $0x50] sm:$0xf]
        %v5439 = vld [vmem:[%s5417 + $0x54] sm:$0xf]
        %v5440 = vld [vmem:[%s5417 + $0x58] sm:$0xf]
        %v5441 = vld [vmem:[%s5417 + $0x5c] sm:$0xf]
        %v5442 = vld [vmem:[%s5417 + $0x60] sm:$0xf]
        %v5443 = vld [vmem:[%s5417 + $0x64] sm:$0xf]
        %v5444 = vld [vmem:[%s5417 + $0x68] sm:$0xf]
        %v5445 = vld [vmem:[%s5417 + $0x6c] sm:$0xf]
        %v5446 = vld [vmem:[%s5417 + $0x70] sm:$0xf]
        %v5447 = vld [vmem:[%s5417 + $0x74] sm:$0xf]
        %v5448 = vld [vmem:[%s5417 + $0x78] sm:$0xf]
        %v5449 = vld [vmem:[%s5417 + $0x7c] sm:$0xf]
        %v5450 = vld [vmem:[%s5417 + $0x80] sm:$0xf]
        %v5451 = vld [vmem:[%s5417 + $0x84] sm:$0xf]
        %v5452 = vld [vmem:[%s5417 + $0x88] sm:$0xf]
        %v5453 = vld [vmem:[%s5417 + $0x8c] sm:$0xf]
        %v5454 = vld [vmem:[%s5417 + $0x90] sm:$0xf]
        %v5455 = vld [vmem:[%s5417 + $0x94] sm:$0xf]
        %v5456 = vld [vmem:[%s5417 + $0x98] sm:$0xf]
        %v5457 = vld [vmem:[%s5417 + $0x9c] sm:$0xf]
        %v5458 = vld [vmem:[%s5417 + $0xa0] sm:$0xf]
        %v5459 = vld [vmem:[%s5417 + $0xa4] sm:$0xf]
        %v5460 = vld [vmem:[%s5417 + $0xa8] sm:$0xf]
        %v5461 = vld [vmem:[%s5417 + $0xac] sm:$0xf]
        %v5462 = vld [vmem:[%s5417 + $0xb0] sm:$0xf]
        %v5463 = vld [vmem:[%s5417 + $0xb4] sm:$0xf]
        %v5464 = vld [vmem:[%s5417 + $0xb8] sm:$0xf]
        %v5465 = vld [vmem:[%s5417 + $0xbc] sm:$0xf]
        %v5514 = vunpack.c.l.b16 %v5418
        %v5515 = vunpack.c.l.b16 %v5419
        %v5516 = vunpack.c.l.b16 %v5420
        %v5517 = vunpack.c.l.b16 %v5421
        %v5518 = vunpack.c.l.b16 %v5422
        %v5519 = vunpack.c.l.b16 %v5423
        %v5520 = vunpack.c.l.b16 %v5424
        %v5521 = vunpack.c.l.b16 %v5425
        %v5522 = vunpack.c.l.b16 %v5426
        %v5523 = vunpack.c.l.b16 %v5427
        %v5524 = vunpack.c.l.b16 %v5428
        %v5525 = vunpack.c.l.b16 %v5429
        %v5526 = vunpack.c.l.b16 %v5430
        %v5527 = vunpack.c.l.b16 %v5431
        %v5528 = vunpack.c.l.b16 %v5432
        %v5529 = vunpack.c.l.b16 %v5433
        %v5530 = vunpack.c.l.b16 %v5434
        %v5531 = vunpack.c.l.b16 %v5435
        %v5532 = vunpack.c.l.b16 %v5436
        %v5533 = vunpack.c.l.b16 %v5437
        %v5534 = vunpack.c.l.b16 %v5438
        %v5535 = vunpack.c.l.b16 %v5439
        %v5536 = vunpack.c.l.b16 %v5440
        %v5537 = vunpack.c.l.b16 %v5441
        %v5538 = vunpack.c.l.b16 %v5442
        %v5539 = vunpack.c.l.b16 %v5443
        %v5540 = vunpack.c.l.b16 %v5444
        %v5541 = vunpack.c.l.b16 %v5445
        %v5542 = vunpack.c.l.b16 %v5446
        %v5543 = vunpack.c.l.b16 %v5447
        %v5544 = vunpack.c.l.b16 %v5448
        %v5545 = vunpack.c.l.b16 %v5449
        %v5546 = vunpack.c.l.b16 %v5450
        %v5547 = vunpack.c.l.b16 %v5451
        %v5548 = vunpack.c.l.b16 %v5452
        %v5549 = vunpack.c.l.b16 %v5453
        %v5550 = vunpack.c.l.b16 %v5454
        %v5551 = vunpack.c.l.b16 %v5455
        %v5552 = vunpack.c.l.b16 %v5456
        %v5553 = vunpack.c.l.b16 %v5457
        %v5554 = vunpack.c.l.b16 %v5458
        %v5555 = vunpack.c.l.b16 %v5459
        %v5556 = vunpack.c.l.b16 %v5460
        %v5557 = vunpack.c.l.b16 %v5461
        %v5558 = vunpack.c.l.b16 %v5462
        %v5559 = vunpack.c.l.b16 %v5463
        %v5560 = vunpack.c.l.b16 %v5464
        %v5561 = vunpack.c.l.b16 %v5465
        %v5562 = vpack.c.b16 %v5515, %v5514
        %v5563 = vpack.c.b16 %v5517, %v5516
        %v5564 = vpack.c.b16 %v5519, %v5518
        %v5565 = vpack.c.b16 %v5521, %v5520
        %v5566 = vpack.c.b16 %v5523, %v5522
        %v5567 = vpack.c.b16 %v5525, %v5524
        %v5568 = vpack.c.b16 %v5527, %v5526
        %v5569 = vpack.c.b16 %v5529, %v5528
        %v5570 = vpack.c.b16 %v5531, %v5530
        %v5571 = vpack.c.b16 %v5533, %v5532
        %v5572 = vpack.c.b16 %v5535, %v5534
        %v5573 = vpack.c.b16 %v5537, %v5536
        %v5574 = vpack.c.b16 %v5539, %v5538
        %v5575 = vpack.c.b16 %v5541, %v5540
        %v5576 = vpack.c.b16 %v5543, %v5542
        %v5577 = vpack.c.b16 %v5545, %v5544
        %v5578 = vpack.c.b16 %v5547, %v5546
        %v5579 = vpack.c.b16 %v5549, %v5548
        %v5580 = vpack.c.b16 %v5551, %v5550
        %v5581 = vpack.c.b16 %v5553, %v5552
        %v5582 = vpack.c.b16 %v5555, %v5554
        %v5583 = vpack.c.b16 %v5557, %v5556
        %v5584 = vpack.c.b16 %v5559, %v5558
        %v5585 = vpack.c.b16 %v5561, %v5560
        %5610 = vmatpush.bf16.msra.mxu0 %v5569
        %5611 = vmatpush.bf16.msra.mxu0 %v5568
        %5612 = vmatpush.bf16.msra.mxu0 %v5567
        %5613 = vmatpush.bf16.msra.mxu0 %v5566
        %5614 = vmatpush.bf16.msra.mxu0 %v5565
        %5615 = vmatpush.bf16.msra.mxu0 %v5564
        %5616 = vmatpush.bf16.msra.mxu0 %v5563
        %5617 = vmatpush.bf16.msra.mxu0 %v5562
        %5618 = vmatmul.bf16.gmra.mxu0 %v4697
        %v5619 = vpop.f32.mrf.mxu0
        %v5620 = vadd.f32 0.0, %v5619
        %v5621 = vpop.f32.mrf.mxu0
        %v5622 = vadd.f32 0.0, %v5621
        %5623 = vmatmul.bf16.gmra.mxu0 %v4740
        %v5624 = vpop.f32.mrf.mxu0
        %v5625 = vadd.f32 0.0, %v5624
        %v5626 = vpop.f32.mrf.mxu0
        %v5627 = vadd.f32 0.0, %v5626
        %5628 = vmatmul.bf16.gmra.mxu0 %v4783
        %v5629 = vpop.f32.mrf.mxu0
        %v5630 = vadd.f32 0.0, %v5629
        %v5631 = vpop.f32.mrf.mxu0
        %v5632 = vadd.f32 0.0, %v5631
        %5633 = vmatmul.bf16.gmra.mxu0 %v4826
        %v5634 = vpop.f32.mrf.mxu0
        %v5635 = vadd.f32 0.0, %v5634
        %v5636 = vpop.f32.mrf.mxu0
        %v5637 = vadd.f32 0.0, %v5636
        %5638 = vmatmul.bf16.gmra.mxu0 %v4869
        %v5639 = vpop.f32.mrf.mxu0
        %v5640 = vadd.f32 0.0, %v5639
        %v5641 = vpop.f32.mrf.mxu0
        %v5642 = vadd.f32 0.0, %v5641
        %5643 = vmatmul.bf16.gmra.mxu0 %v4912
        %v5644 = vpop.f32.mrf.mxu0
        %v5645 = vadd.f32 0.0, %v5644
        %v5646 = vpop.f32.mrf.mxu0
        %v5647 = vadd.f32 0.0, %v5646
        %5648 = vmatmul.bf16.gmra.mxu0 %v4955
        %v5649 = vpop.f32.mrf.mxu0
        %v5650 = vadd.f32 0.0, %v5649
        %v5651 = vpop.f32.mrf.mxu0
        %v5652 = vadd.f32 0.0, %v5651
        %5653 = vmatmul.bf16.gmra.mxu0 %v4998
        %v5654 = vpop.f32.mrf.mxu0
        %v5655 = vadd.f32 0.0, %v5654
        %v5656 = vpop.f32.mrf.mxu0
        %v5657 = vadd.f32 0.0, %v5656
        %5658 = vmatmul.bf16.gmra.mxu0 %v5041
        %v5659 = vpop.f32.mrf.mxu0
        %v5660 = vadd.f32 0.0, %v5659
        %v5661 = vpop.f32.mrf.mxu0
        %v5662 = vadd.f32 0.0, %v5661
        %5663 = vmatmul.bf16.gmra.mxu0 %v5084
        %v5664 = vpop.f32.mrf.mxu0
        %v5665 = vadd.f32 0.0, %v5664
        %v5666 = vpop.f32.mrf.mxu0
        %v5667 = vadd.f32 0.0, %v5666
        %5668 = vmatmul.bf16.gmra.mxu0 %v5127
        %v5669 = vpop.f32.mrf.mxu0
        %v5670 = vadd.f32 0.0, %v5669
        %v5671 = vpop.f32.mrf.mxu0
        %v5672 = vadd.f32 0.0, %v5671
        %5673 = vmatmul.bf16.gmra.mxu0 %v5170
        %v5674 = vpop.f32.mrf.mxu0
        %v5675 = vadd.f32 0.0, %v5674
        %v5676 = vpop.f32.mrf.mxu0
        %v5677 = vadd.f32 0.0, %v5676
        %5678 = vmatmul.bf16.gmra.mxu0 %v5213
        %v5679 = vpop.f32.mrf.mxu0
        %v5680 = vadd.f32 0.0, %v5679
        %v5681 = vpop.f32.mrf.mxu0
        %v5682 = vadd.f32 0.0, %v5681
        %5683 = vmatmul.bf16.gmra.mxu0 %v5256
        %v5684 = vpop.f32.mrf.mxu0
        %v5685 = vadd.f32 0.0, %v5684
        %v5686 = vpop.f32.mrf.mxu0
        %v5687 = vadd.f32 0.0, %v5686
        %5688 = vmatmul.bf16.gmra.mxu0 %v5299
        %v5689 = vpop.f32.mrf.mxu0
        %v5690 = vadd.f32 0.0, %v5689
        %v5691 = vpop.f32.mrf.mxu0
        %v5692 = vadd.f32 0.0, %v5691
        %5693 = vmatmul.bf16.gmra.mxu0 %v5342
        %v5694 = vpop.f32.mrf.mxu0
        %v5695 = vadd.f32 0.0, %v5694
        %v5696 = vpop.f32.mrf.mxu0
        %v5697 = vadd.f32 0.0, %v5696
        %5698 = vdwg.mxu0
        %5699 = vmatpush.bf16.msra.mxu0 %v5577
        %5700 = vmatpush.bf16.msra.mxu0 %v5576
        %5701 = vmatpush.bf16.msra.mxu0 %v5575
        %5702 = vmatpush.bf16.msra.mxu0 %v5574
        %5703 = vmatpush.bf16.msra.mxu0 %v5573
        %5704 = vmatpush.bf16.msra.mxu0 %v5572
        %5705 = vmatpush.bf16.msra.mxu0 %v5571
        %5706 = vmatpush.bf16.msra.mxu0 %v5570
        %5707 = vmatmul.bf16.gmra.mxu0 %v4706
        %v5708 = vpop.f32.mrf.mxu0
        %v5709 = vadd.f32 %v5620, %v5708
        %v5710 = vpop.f32.mrf.mxu0
        %v5711 = vadd.f32 %v5622, %v5710
        %5712 = vmatmul.bf16.gmra.mxu0 %v4749
        %v5713 = vpop.f32.mrf.mxu0
        %v5714 = vadd.f32 %v5625, %v5713
        %v5715 = vpop.f32.mrf.mxu0
        %v5716 = vadd.f32 %v5627, %v5715
        %5717 = vmatmul.bf16.gmra.mxu0 %v4792
        %v5718 = vpop.f32.mrf.mxu0
        %v5719 = vadd.f32 %v5630, %v5718
        %v5720 = vpop.f32.mrf.mxu0
        %v5721 = vadd.f32 %v5632, %v5720
        %5722 = vmatmul.bf16.gmra.mxu0 %v4835
        %v5723 = vpop.f32.mrf.mxu0
        %v5724 = vadd.f32 %v5635, %v5723
        %v5725 = vpop.f32.mrf.mxu0
        %v5726 = vadd.f32 %v5637, %v5725
        %5727 = vmatmul.bf16.gmra.mxu0 %v4878
        %v5728 = vpop.f32.mrf.mxu0
        %v5729 = vadd.f32 %v5640, %v5728
        %v5730 = vpop.f32.mrf.mxu0
        %v5731 = vadd.f32 %v5642, %v5730
        %5732 = vmatmul.bf16.gmra.mxu0 %v4921
        %v5733 = vpop.f32.mrf.mxu0
        %v5734 = vadd.f32 %v5645, %v5733
        %v5735 = vpop.f32.mrf.mxu0
        %v5736 = vadd.f32 %v5647, %v5735
        %5737 = vmatmul.bf16.gmra.mxu0 %v4964
        %v5738 = vpop.f32.mrf.mxu0
        %v5739 = vadd.f32 %v5650, %v5738
        %v5740 = vpop.f32.mrf.mxu0
        %v5741 = vadd.f32 %v5652, %v5740
        %5742 = vmatmul.bf16.gmra.mxu0 %v5007
        %v5743 = vpop.f32.mrf.mxu0
        %v5744 = vadd.f32 %v5655, %v5743
        %v5745 = vpop.f32.mrf.mxu0
        %v5746 = vadd.f32 %v5657, %v5745
        %5747 = vmatmul.bf16.gmra.mxu0 %v5050
        %v5748 = vpop.f32.mrf.mxu0
        %v5749 = vadd.f32 %v5660, %v5748
        %v5750 = vpop.f32.mrf.mxu0
        %v5751 = vadd.f32 %v5662, %v5750
        %5752 = vmatmul.bf16.gmra.mxu0 %v5093
        %v5753 = vpop.f32.mrf.mxu0
        %v5754 = vadd.f32 %v5665, %v5753
        %v5755 = vpop.f32.mrf.mxu0
        %v5756 = vadd.f32 %v5667, %v5755
        %5757 = vmatmul.bf16.gmra.mxu0 %v5136
        %v5758 = vpop.f32.mrf.mxu0
        %v5759 = vadd.f32 %v5670, %v5758
        %v5760 = vpop.f32.mrf.mxu0
        %v5761 = vadd.f32 %v5672, %v5760
        %5762 = vmatmul.bf16.gmra.mxu0 %v5179
        %v5763 = vpop.f32.mrf.mxu0
        %v5764 = vadd.f32 %v5675, %v5763
        %v5765 = vpop.f32.mrf.mxu0
        %v5766 = vadd.f32 %v5677, %v5765
        %5767 = vmatmul.bf16.gmra.mxu0 %v5222
        %v5768 = vpop.f32.mrf.mxu0
        %v5769 = vadd.f32 %v5680, %v5768
        %v5770 = vpop.f32.mrf.mxu0
        %v5771 = vadd.f32 %v5682, %v5770
        %5772 = vmatmul.bf16.gmra.mxu0 %v5265
        %v5773 = vpop.f32.mrf.mxu0
        %v5774 = vadd.f32 %v5685, %v5773
        %v5775 = vpop.f32.mrf.mxu0
        %v5776 = vadd.f32 %v5687, %v5775
        %5777 = vmatmul.bf16.gmra.mxu0 %v5308
        %v5778 = vpop.f32.mrf.mxu0
        %v5779 = vadd.f32 %v5690, %v5778
        %v5780 = vpop.f32.mrf.mxu0
        %v5781 = vadd.f32 %v5692, %v5780
        %5782 = vmatmul.bf16.gmra.mxu0 %v5351
        %v5783 = vpop.f32.mrf.mxu0
        %v5784 = vadd.f32 %v5695, %v5783
        %v5785 = vpop.f32.mrf.mxu0
        %v5786 = vadd.f32 %v5697, %v5785
        %5787 = vdwg.mxu0
        %5788 = vmatpush.bf16.msra.mxu0 %v5585
        %5789 = vmatpush.bf16.msra.mxu0 %v5584
        %5790 = vmatpush.bf16.msra.mxu0 %v5583
        %5791 = vmatpush.bf16.msra.mxu0 %v5582
        %5792 = vmatpush.bf16.msra.mxu0 %v5581
        %5793 = vmatpush.bf16.msra.mxu0 %v5580
        %5794 = vmatpush.bf16.msra.mxu0 %v5579
        %5795 = vmatpush.bf16.msra.mxu0 %v5578
        %5796 = vmatmul.bf16.gmra.mxu0 %v4723
        %v5797 = vpop.f32.mrf.mxu0
        %v5798 = vadd.f32 %v5709, %v5797
        %v5799 = vpop.f32.mrf.mxu0
        %v5800 = vadd.f32 %v5711, %v5799
        %5801 = vmatmul.bf16.gmra.mxu0 %v4766
        %v5802 = vpop.f32.mrf.mxu0
        %v5803 = vadd.f32 %v5714, %v5802
        %v5804 = vpop.f32.mrf.mxu0
        %v5805 = vadd.f32 %v5716, %v5804
        %5806 = vmatmul.bf16.gmra.mxu0 %v4809
        %v5807 = vpop.f32.mrf.mxu0
        %v5808 = vadd.f32 %v5719, %v5807
        %v5809 = vpop.f32.mrf.mxu0
        %v5810 = vadd.f32 %v5721, %v5809
        %5811 = vmatmul.bf16.gmra.mxu0 %v4852
        %v5812 = vpop.f32.mrf.mxu0
        %v5813 = vadd.f32 %v5724, %v5812
        %v5814 = vpop.f32.mrf.mxu0
        %v5815 = vadd.f32 %v5726, %v5814
        %5816 = vmatmul.bf16.gmra.mxu0 %v4895
        %v5817 = vpop.f32.mrf.mxu0
        %v5818 = vadd.f32 %v5729, %v5817
        %v5819 = vpop.f32.mrf.mxu0
        %v5820 = vadd.f32 %v5731, %v5819
        %5821 = vmatmul.bf16.gmra.mxu0 %v4938
        %v5822 = vpop.f32.mrf.mxu0
        %v5823 = vadd.f32 %v5734, %v5822
        %v5824 = vpop.f32.mrf.mxu0
        %v5825 = vadd.f32 %v5736, %v5824
        %5826 = vmatmul.bf16.gmra.mxu0 %v4981
        %v5827 = vpop.f32.mrf.mxu0
        %v5828 = vadd.f32 %v5739, %v5827
        %v5829 = vpop.f32.mrf.mxu0
        %v5830 = vadd.f32 %v5741, %v5829
        %5831 = vmatmul.bf16.gmra.mxu0 %v5024
        %v5832 = vpop.f32.mrf.mxu0
        %v5833 = vadd.f32 %v5744, %v5832
        %v5834 = vpop.f32.mrf.mxu0
        %v5835 = vadd.f32 %v5746, %v5834
        %5836 = vmatmul.bf16.gmra.mxu0 %v5067
        %v5837 = vpop.f32.mrf.mxu0
        %v5838 = vadd.f32 %v5749, %v5837
        %v5839 = vpop.f32.mrf.mxu0
        %v5840 = vadd.f32 %v5751, %v5839
        %5841 = vmatmul.bf16.gmra.mxu0 %v5110
        %v5842 = vpop.f32.mrf.mxu0
        %v5843 = vadd.f32 %v5754, %v5842
        %v5844 = vpop.f32.mrf.mxu0
        %v5845 = vadd.f32 %v5756, %v5844
        %5846 = vmatmul.bf16.gmra.mxu0 %v5153
        %v5847 = vpop.f32.mrf.mxu0
        %v5848 = vadd.f32 %v5759, %v5847
        %v5849 = vpop.f32.mrf.mxu0
        %v5850 = vadd.f32 %v5761, %v5849
        %5851 = vmatmul.bf16.gmra.mxu0 %v5196
        %v5852 = vpop.f32.mrf.mxu0
        %v5853 = vadd.f32 %v5764, %v5852
        %v5854 = vpop.f32.mrf.mxu0
        %v5855 = vadd.f32 %v5766, %v5854
        %5856 = vmatmul.bf16.gmra.mxu0 %v5239
        %v5857 = vpop.f32.mrf.mxu0
        %v5858 = vadd.f32 %v5769, %v5857
        %v5859 = vpop.f32.mrf.mxu0
        %v5860 = vadd.f32 %v5771, %v5859
        %5861 = vmatmul.bf16.gmra.mxu0 %v5282
        %v5862 = vpop.f32.mrf.mxu0
        %v5863 = vadd.f32 %v5774, %v5862
        %v5864 = vpop.f32.mrf.mxu0
        %v5865 = vadd.f32 %v5776, %v5864
        %5866 = vmatmul.bf16.gmra.mxu0 %v5325
        %v5867 = vpop.f32.mrf.mxu0
        %v5868 = vadd.f32 %v5779, %v5867
        %v5869 = vpop.f32.mrf.mxu0
        %v5870 = vadd.f32 %v5781, %v5869
        %5871 = vmatmul.bf16.gmra.mxu0 %v5368
        %v5872 = vpop.f32.mrf.mxu0
        %v5873 = vadd.f32 %v5784, %v5872
        %v5874 = vpop.f32.mrf.mxu0
        %v5875 = vadd.f32 %v5786, %v5874
        %5876 = vdwg.mxu0
        %v5877 = vld [vmem:[#allocation3] sm:$0xff]
        %v5878 = vld [vmem:[#allocation3 + $0x8] sm:$0xff]
        %v5879 = vld [vmem:[#allocation3 + $0x10] sm:$0xff]
        %v5880 = vld [vmem:[#allocation3 + $0x18] sm:$0xff]
        %v5881 = vld [vmem:[#allocation3 + $0x20] sm:$0xff]
        %v5882 = vld [vmem:[#allocation3 + $0x28] sm:$0xff]
        %v5883 = vld [vmem:[#allocation3 + $0x30] sm:$0xff]
        %v5884 = vld [vmem:[#allocation3 + $0x38] sm:$0xff]
        %v5885 = vld [vmem:[#allocation3 + $0x40] sm:$0xff]
        %v5886 = vld [vmem:[#allocation3 + $0x48] sm:$0xff]
        %v5887 = vld [vmem:[#allocation3 + $0x50] sm:$0xff]
        %v5888 = vld [vmem:[#allocation3 + $0x58] sm:$0xff]
        %v5889 = vld [vmem:[#allocation3 + $0x60] sm:$0xff]
        %v5890 = vld [vmem:[#allocation3 + $0x68] sm:$0xff]
        %v5891 = vld [vmem:[#allocation3 + $0x70] sm:$0xff]
        %v5892 = vld [vmem:[#allocation3 + $0x78] sm:$0xff]
        %v5893 = vld [vmem:[#allocation3 + $0x80] sm:$0xff]
        %v5894 = vld [vmem:[#allocation3 + $0x88] sm:$0xff]
        %v5895 = vld [vmem:[#allocation3 + $0x90] sm:$0xff]
        %v5896 = vld [vmem:[#allocation3 + $0x98] sm:$0xff]
        %v5897 = vld [vmem:[#allocation3 + $0xa0] sm:$0xff]
        %v5898 = vld [vmem:[#allocation3 + $0xa8] sm:$0xff]
        %v5899 = vld [vmem:[#allocation3 + $0xb0] sm:$0xff]
        %v5900 = vld [vmem:[#allocation3 + $0xb8] sm:$0xff]
        %v5901 = vld [vmem:[#allocation3 + $0xc0] sm:$0xff]
        %v5902 = vld [vmem:[#allocation3 + $0xc8] sm:$0xff]
        %v5903 = vld [vmem:[#allocation3 + $0xd0] sm:$0xff]
        %v5904 = vld [vmem:[#allocation3 + $0xd8] sm:$0xff]
        %v5905 = vld [vmem:[#allocation3 + $0xe0] sm:$0xff]
        %v5906 = vld [vmem:[#allocation3 + $0xe8] sm:$0xff]
        %v5907 = vld [vmem:[#allocation3 + $0xf0] sm:$0xff]
        %v5908 = vld [vmem:[#allocation3 + $0xf8] sm:$0xff]
        %v5909 = vadd.f32 %v5877, %v5798
        %v5910 = vadd.f32 %v5878, %v5800
        %v5911 = vadd.f32 %v5879, %v5803
        %v5912 = vadd.f32 %v5880, %v5805
        %v5913 = vadd.f32 %v5881, %v5808
        %v5914 = vadd.f32 %v5882, %v5810
        %v5915 = vadd.f32 %v5883, %v5813
        %v5916 = vadd.f32 %v5884, %v5815
        %v5917 = vadd.f32 %v5885, %v5818
        %v5918 = vadd.f32 %v5886, %v5820
        %v5919 = vadd.f32 %v5887, %v5823
        %v5920 = vadd.f32 %v5888, %v5825
        %v5921 = vadd.f32 %v5889, %v5828
        %v5922 = vadd.f32 %v5890, %v5830
        %v5923 = vadd.f32 %v5891, %v5833
        %v5924 = vadd.f32 %v5892, %v5835
        %v5925 = vadd.f32 %v5893, %v5838
        %v5926 = vadd.f32 %v5894, %v5840
        %v5927 = vadd.f32 %v5895, %v5843
        %v5928 = vadd.f32 %v5896, %v5845
        %v5929 = vadd.f32 %v5897, %v5848
        %v5930 = vadd.f32 %v5898, %v5850
        %v5931 = vadd.f32 %v5899, %v5853
        %v5932 = vadd.f32 %v5900, %v5855
        %v5933 = vadd.f32 %v5901, %v5858
        %v5934 = vadd.f32 %v5902, %v5860
        %v5935 = vadd.f32 %v5903, %v5863
        %v5936 = vadd.f32 %v5904, %v5865
        %v5937 = vadd.f32 %v5905, %v5868
        %v5938 = vadd.f32 %v5906, %v5870
        %v5939 = vadd.f32 %v5907, %v5873
        %v5940 = vadd.f32 %v5908, %v5875
        %5941 = vst [vmem:[#allocation3] sm:$0xff] %v5909
        %5942 = vst [vmem:[#allocation3 + $0x8] sm:$0xff] %v5910
        %5943 = vst [vmem:[#allocation3 + $0x10] sm:$0xff] %v5911
        %5944 = vst [vmem:[#allocation3 + $0x18] sm:$0xff] %v5912
        %5945 = vst [vmem:[#allocation3 + $0x20] sm:$0xff] %v5913
        %5946 = vst [vmem:[#allocation3 + $0x28] sm:$0xff] %v5914
        %5947 = vst [vmem:[#allocation3 + $0x30] sm:$0xff] %v5915
        %5948 = vst [vmem:[#allocation3 + $0x38] sm:$0xff] %v5916
        %5949 = vst [vmem:[#allocation3 + $0x40] sm:$0xff] %v5917
        %5950 = vst [vmem:[#allocation3 + $0x48] sm:$0xff] %v5918
        %5951 = vst [vmem:[#allocation3 + $0x50] sm:$0xff] %v5919
        %5952 = vst [vmem:[#allocation3 + $0x58] sm:$0xff] %v5920
        %5953 = vst [vmem:[#allocation3 + $0x60] sm:$0xff] %v5921
        %5954 = vst [vmem:[#allocation3 + $0x68] sm:$0xff] %v5922
        %5955 = vst [vmem:[#allocation3 + $0x70] sm:$0xff] %v5923
        %5956 = vst [vmem:[#allocation3 + $0x78] sm:$0xff] %v5924
        %5957 = vst [vmem:[#allocation3 + $0x80] sm:$0xff] %v5925
        %5958 = vst [vmem:[#allocation3 + $0x88] sm:$0xff] %v5926
        %5959 = vst [vmem:[#allocation3 + $0x90] sm:$0xff] %v5927
        %5960 = vst [vmem:[#allocation3 + $0x98] sm:$0xff] %v5928
        %5961 = vst [vmem:[#allocation3 + $0xa0] sm:$0xff] %v5929
        %5962 = vst [vmem:[#allocation3 + $0xa8] sm:$0xff] %v5930
        %5963 = vst [vmem:[#allocation3 + $0xb0] sm:$0xff] %v5931
        %5964 = vst [vmem:[#allocation3 + $0xb8] sm:$0xff] %v5932
        %5965 = vst [vmem:[#allocation3 + $0xc0] sm:$0xff] %v5933
        %5966 = vst [vmem:[#allocation3 + $0xc8] sm:$0xff] %v5934
        %5967 = vst [vmem:[#allocation3 + $0xd0] sm:$0xff] %v5935
        %5968 = vst [vmem:[#allocation3 + $0xd8] sm:$0xff] %v5936
        %5969 = vst [vmem:[#allocation3 + $0xe0] sm:$0xff] %v5937
        %5970 = vst [vmem:[#allocation3 + $0xe8] sm:$0xff] %v5938
        %5971 = vst [vmem:[#allocation3 + $0xf0] sm:$0xff] %v5939
        %5972 = vst [vmem:[#allocation3 + $0xf8] sm:$0xff] %v5940
        %v5973 = vld [vmem:[#allocation3] sm:$0xff]
        %v5974 = vld [vmem:[#allocation3 + $0x8] sm:$0xff]
        %v5975 = vld [vmem:[#allocation3 + $0x10] sm:$0xff]
        %v5976 = vld [vmem:[#allocation3 + $0x18] sm:$0xff]
        %v5977 = vld [vmem:[#allocation3 + $0x20] sm:$0xff]
        %v5978 = vld [vmem:[#allocation3 + $0x28] sm:$0xff]
        %v5979 = vld [vmem:[#allocation3 + $0x30] sm:$0xff]
        %v5980 = vld [vmem:[#allocation3 + $0x38] sm:$0xff]
        %v5981 = vld [vmem:[#allocation3 + $0x40] sm:$0xff]
        %v5982 = vld [vmem:[#allocation3 + $0x48] sm:$0xff]
        %v5983 = vld [vmem:[#allocation3 + $0x50] sm:$0xff]
        %v5984 = vld [vmem:[#allocation3 + $0x58] sm:$0xff]
        %v5985 = vld [vmem:[#allocation3 + $0x60] sm:$0xff]
        %v5986 = vld [vmem:[#allocation3 + $0x68] sm:$0xff]
        %v5987 = vld [vmem:[#allocation3 + $0x70] sm:$0xff]
        %v5988 = vld [vmem:[#allocation3 + $0x78] sm:$0xff]
        %v5989 = vld [vmem:[#allocation3 + $0x80] sm:$0xff]
        %v5990 = vld [vmem:[#allocation3 + $0x88] sm:$0xff]
        %v5991 = vld [vmem:[#allocation3 + $0x90] sm:$0xff]
        %v5992 = vld [vmem:[#allocation3 + $0x98] sm:$0xff]
        %v5993 = vld [vmem:[#allocation3 + $0xa0] sm:$0xff]
        %v5994 = vld [vmem:[#allocation3 + $0xa8] sm:$0xff]
        %v5995 = vld [vmem:[#allocation3 + $0xb0] sm:$0xff]
        %v5996 = vld [vmem:[#allocation3 + $0xb8] sm:$0xff]
        %v5997 = vld [vmem:[#allocation3 + $0xc0] sm:$0xff]
        %v5998 = vld [vmem:[#allocation3 + $0xc8] sm:$0xff]
        %v5999 = vld [vmem:[#allocation3 + $0xd0] sm:$0xff]
        %v6000 = vld [vmem:[#allocation3 + $0xd8] sm:$0xff]
        %v6001 = vld [vmem:[#allocation3 + $0xe0] sm:$0xff]
        %v6002 = vld [vmem:[#allocation3 + $0xe8] sm:$0xff]
        %v6003 = vld [vmem:[#allocation3 + $0xf0] sm:$0xff]
        %v6004 = vld [vmem:[#allocation3 + $0xf8] sm:$0xff]
        %v6005 = vld [vmem:[%s5] sm:$0x1]
        %v6007 = vperm.slane %v6005, 0
        %v6009 = vadd.f32 %v5973, %v6007
        %v6010 = vadd.f32 %v5974, %v6007
        %v6011 = vadd.f32 %v5975, %v6007
        %v6012 = vadd.f32 %v5976, %v6007
        %v6013 = vadd.f32 %v5977, %v6007
        %v6014 = vadd.f32 %v5978, %v6007
        %v6015 = vadd.f32 %v5979, %v6007
        %v6016 = vadd.f32 %v5980, %v6007
        %v6017 = vadd.f32 %v5981, %v6007
        %v6018 = vadd.f32 %v5982, %v6007
        %v6019 = vadd.f32 %v5983, %v6007
        %v6020 = vadd.f32 %v5984, %v6007
        %v6021 = vadd.f32 %v5985, %v6007
        %v6022 = vadd.f32 %v5986, %v6007
        %v6023 = vadd.f32 %v5987, %v6007
        %v6024 = vadd.f32 %v5988, %v6007
        %v6025 = vadd.f32 %v5989, %v6007
        %v6026 = vadd.f32 %v5990, %v6007
        %v6027 = vadd.f32 %v5991, %v6007
        %v6028 = vadd.f32 %v5992, %v6007
        %v6029 = vadd.f32 %v5993, %v6007
        %v6030 = vadd.f32 %v5994, %v6007
        %v6031 = vadd.f32 %v5995, %v6007
        %v6032 = vadd.f32 %v5996, %v6007
        %v6033 = vadd.f32 %v5997, %v6007
        %v6034 = vadd.f32 %v5998, %v6007
        %v6035 = vadd.f32 %v5999, %v6007
        %v6036 = vadd.f32 %v6000, %v6007
        %v6037 = vadd.f32 %v6001, %v6007
        %v6038 = vadd.f32 %v6002, %v6007
        %v6039 = vadd.f32 %v6003, %v6007
        %v6040 = vadd.f32 %v6004, %v6007
        %v6041 = vmax.f32 %v6009, 0.0
        %v6042 = vmax.f32 %v6010, 0.0
        %v6043 = vmax.f32 %v6011, 0.0
        %v6044 = vmax.f32 %v6012, 0.0
        %v6045 = vmax.f32 %v6013, 0.0
        %v6046 = vmax.f32 %v6014, 0.0
        %v6047 = vmax.f32 %v6015, 0.0
        %v6048 = vmax.f32 %v6016, 0.0
        %v6049 = vmax.f32 %v6017, 0.0
        %v6050 = vmax.f32 %v6018, 0.0
        %v6051 = vmax.f32 %v6019, 0.0
        %v6052 = vmax.f32 %v6020, 0.0
        %v6053 = vmax.f32 %v6021, 0.0
        %v6054 = vmax.f32 %v6022, 0.0
        %v6055 = vmax.f32 %v6023, 0.0
        %v6056 = vmax.f32 %v6024, 0.0
        %v6057 = vmax.f32 %v6025, 0.0
        %v6058 = vmax.f32 %v6026, 0.0
        %v6059 = vmax.f32 %v6027, 0.0
        %v6060 = vmax.f32 %v6028, 0.0
        %v6061 = vmax.f32 %v6029, 0.0
        %v6062 = vmax.f32 %v6030, 0.0
        %v6063 = vmax.f32 %v6031, 0.0
        %v6064 = vmax.f32 %v6032, 0.0
        %v6065 = vmax.f32 %v6033, 0.0
        %v6066 = vmax.f32 %v6034, 0.0
        %v6067 = vmax.f32 %v6035, 0.0
        %v6068 = vmax.f32 %v6036, 0.0
        %v6069 = vmax.f32 %v6037, 0.0
        %v6070 = vmax.f32 %v6038, 0.0
        %v6071 = vmax.f32 %v6039, 0.0
        %v6072 = vmax.f32 %v6040, 0.0
        %v6073 = vpack.c.bf16 %v6042, %v6041
        %v6074 = vpack.c.bf16 %v6044, %v6043
        %v6075 = vpack.c.bf16 %v6046, %v6045
        %v6076 = vpack.c.bf16 %v6048, %v6047
        %v6077 = vpack.c.bf16 %v6050, %v6049
        %v6078 = vpack.c.bf16 %v6052, %v6051
        %v6079 = vpack.c.bf16 %v6054, %v6053
        %v6080 = vpack.c.bf16 %v6056, %v6055
        %v6081 = vpack.c.bf16 %v6058, %v6057
        %v6082 = vpack.c.bf16 %v6060, %v6059
        %v6083 = vpack.c.bf16 %v6062, %v6061
        %v6084 = vpack.c.bf16 %v6064, %v6063
        %v6085 = vpack.c.bf16 %v6066, %v6065
        %v6086 = vpack.c.bf16 %v6068, %v6067
        %v6087 = vpack.c.bf16 %v6070, %v6069
        %v6088 = vpack.c.bf16 %v6072, %v6071
        %v6089 = vld [vmem:[#allocation10] sm:$0xf]
        %v6090 = vld [vmem:[#allocation10 + $0x4] sm:$0xf]
        %v6091 = vld [vmem:[#allocation10 + $0x8] sm:$0xf]
        %v6092 = vld [vmem:[#allocation10 + $0xc] sm:$0xf]
        %v6093 = vld [vmem:[#allocation10 + $0x10] sm:$0xf]
        %v6094 = vld [vmem:[#allocation10 + $0x14] sm:$0xf]
        %v6095 = vld [vmem:[#allocation10 + $0x18] sm:$0xf]
        %v6096 = vld [vmem:[#allocation10 + $0x1c] sm:$0xf]
        %v6097 = vld [vmem:[#allocation10 + $0x20] sm:$0xf]
        %v6098 = vld [vmem:[#allocation10 + $0x24] sm:$0xf]
        %v6099 = vld [vmem:[#allocation10 + $0x28] sm:$0xf]
        %v6100 = vld [vmem:[#allocation10 + $0x2c] sm:$0xf]
        %v6101 = vld [vmem:[#allocation10 + $0x30] sm:$0xf]
        %v6102 = vld [vmem:[#allocation10 + $0x34] sm:$0xf]
        %v6103 = vld [vmem:[#allocation10 + $0x38] sm:$0xf]
        %v6104 = vld [vmem:[#allocation10 + $0x3c] sm:$0xf]
        %v6105 = vld [vmem:[%s6] sm:$0x1]
        %v6107 = vperm.slane %v6105, 0
        %v6125 = vunpack.c.l.b16 %v6089
        %v6126 = vunpack.c.l.b16 %v6090
        %v6127 = vunpack.c.l.b16 %v6091
        %v6128 = vunpack.c.l.b16 %v6092
        %v6129 = vunpack.c.l.b16 %v6093
        %v6130 = vunpack.c.l.b16 %v6094
        %v6131 = vunpack.c.l.b16 %v6095
        %v6132 = vunpack.c.l.b16 %v6096
        %v6133 = vunpack.c.l.b16 %v6097
        %v6134 = vunpack.c.l.b16 %v6098
        %v6135 = vunpack.c.l.b16 %v6099
        %v6136 = vunpack.c.l.b16 %v6100
        %v6137 = vunpack.c.l.b16 %v6101
        %v6138 = vunpack.c.l.b16 %v6102
        %v6139 = vunpack.c.l.b16 %v6103
        %v6140 = vunpack.c.l.b16 %v6104
        %v6141 = vpack.c.b16 %v6126, %v6125
        %v6142 = vpack.c.b16 %v6128, %v6127
        %v6143 = vpack.c.b16 %v6130, %v6129
        %v6144 = vpack.c.b16 %v6132, %v6131
        %v6145 = vpack.c.b16 %v6134, %v6133
        %v6146 = vpack.c.b16 %v6136, %v6135
        %v6147 = vpack.c.b16 %v6138, %v6137
        %v6148 = vpack.c.b16 %v6140, %v6139
        %6157 = vmatpush.bf16.msra.mxu0 %v6148
        %6158 = vmatpush.bf16.msra.mxu0 %v6147
        %6159 = vmatpush.bf16.msra.mxu0 %v6146
        %6160 = vmatpush.bf16.msra.mxu0 %v6145
        %6161 = vmatpush.bf16.msra.mxu0 %v6144
        %6162 = vmatpush.bf16.msra.mxu0 %v6143
        %6163 = vmatpush.bf16.msra.mxu0 %v6142
        %6164 = vmatpush.bf16.msra.mxu0 %v6141
        %6165 = vmatmul.bf16.gmra.mxu0 %v6073
        %v6166 = vpop.f32.mrf.mxu0
        %v6167 = vadd.f32 %v6107, %v6166
        %v6168 = vpop.f32.mrf.mxu0
        %v6169 = vadd.f32 %v6107, %v6168
        %6170 = vmatmul.bf16.gmra.mxu0 %v6074
        %v6171 = vpop.f32.mrf.mxu0
        %v6172 = vadd.f32 %v6107, %v6171
        %v6173 = vpop.f32.mrf.mxu0
        %v6174 = vadd.f32 %v6107, %v6173
        %6175 = vmatmul.bf16.gmra.mxu0 %v6075
        %v6176 = vpop.f32.mrf.mxu0
        %v6177 = vadd.f32 %v6107, %v6176
        %v6178 = vpop.f32.mrf.mxu0
        %v6179 = vadd.f32 %v6107, %v6178
        %6180 = vmatmul.bf16.gmra.mxu0 %v6076
        %v6181 = vpop.f32.mrf.mxu0
        %v6182 = vadd.f32 %v6107, %v6181
        %v6183 = vpop.f32.mrf.mxu0
        %v6184 = vadd.f32 %v6107, %v6183
        %6185 = vmatmul.bf16.gmra.mxu0 %v6077
        %v6186 = vpop.f32.mrf.mxu0
        %v6187 = vadd.f32 %v6107, %v6186
        %v6188 = vpop.f32.mrf.mxu0
        %v6189 = vadd.f32 %v6107, %v6188
        %6190 = vmatmul.bf16.gmra.mxu0 %v6078
        %v6191 = vpop.f32.mrf.mxu0
        %v6192 = vadd.f32 %v6107, %v6191
        %v6193 = vpop.f32.mrf.mxu0
        %v6194 = vadd.f32 %v6107, %v6193
        %6195 = vmatmul.bf16.gmra.mxu0 %v6079
        %v6196 = vpop.f32.mrf.mxu0
        %v6197 = vadd.f32 %v6107, %v6196
        %v6198 = vpop.f32.mrf.mxu0
        %v6199 = vadd.f32 %v6107, %v6198
        %6200 = vmatmul.bf16.gmra.mxu0 %v6080
        %v6201 = vpop.f32.mrf.mxu0
        %v6202 = vadd.f32 %v6107, %v6201
        %v6203 = vpop.f32.mrf.mxu0
        %v6204 = vadd.f32 %v6107, %v6203
        %6205 = vmatmul.bf16.gmra.mxu0 %v6081
        %v6206 = vpop.f32.mrf.mxu0
        %v6207 = vadd.f32 %v6107, %v6206
        %v6208 = vpop.f32.mrf.mxu0
        %v6209 = vadd.f32 %v6107, %v6208
        %6210 = vmatmul.bf16.gmra.mxu0 %v6082
        %v6211 = vpop.f32.mrf.mxu0
        %v6212 = vadd.f32 %v6107, %v6211
        %v6213 = vpop.f32.mrf.mxu0
        %v6214 = vadd.f32 %v6107, %v6213
        %6215 = vmatmul.bf16.gmra.mxu0 %v6083
        %v6216 = vpop.f32.mrf.mxu0
        %v6217 = vadd.f32 %v6107, %v6216
        %v6218 = vpop.f32.mrf.mxu0
        %v6219 = vadd.f32 %v6107, %v6218
        %6220 = vmatmul.bf16.gmra.mxu0 %v6084
        %v6221 = vpop.f32.mrf.mxu0
        %v6222 = vadd.f32 %v6107, %v6221
        %v6223 = vpop.f32.mrf.mxu0
        %v6224 = vadd.f32 %v6107, %v6223
        %6225 = vmatmul.bf16.gmra.mxu0 %v6085
        %v6226 = vpop.f32.mrf.mxu0
        %v6227 = vadd.f32 %v6107, %v6226
        %v6228 = vpop.f32.mrf.mxu0
        %v6229 = vadd.f32 %v6107, %v6228
        %6230 = vmatmul.bf16.gmra.mxu0 %v6086
        %v6231 = vpop.f32.mrf.mxu0
        %v6232 = vadd.f32 %v6107, %v6231
        %v6233 = vpop.f32.mrf.mxu0
        %v6234 = vadd.f32 %v6107, %v6233
        %6235 = vmatmul.bf16.gmra.mxu0 %v6087
        %v6236 = vpop.f32.mrf.mxu0
        %v6237 = vadd.f32 %v6107, %v6236
        %v6238 = vpop.f32.mrf.mxu0
        %v6239 = vadd.f32 %v6107, %v6238
        %6240 = vmatmul.bf16.gmra.mxu0 %v6088
        %v6241 = vpop.f32.mrf.mxu0
        %v6242 = vadd.f32 %v6107, %v6241
        %v6243 = vpop.f32.mrf.mxu0
        %v6244 = vadd.f32 %v6107, %v6243
        %6245 = vdwg.mxu0
        %v6246 = vld [vmem:[%s302] sm:$0xf]
        %v6247 = vld [vmem:[%s302 + $0x4] sm:$0xf]
        %v6248 = vld [vmem:[%s302 + $0x8] sm:$0xf]
        %v6249 = vld [vmem:[%s302 + $0xc] sm:$0xf]
        %v6250 = vld [vmem:[%s302 + $0x10] sm:$0xf]
        %v6251 = vld [vmem:[%s302 + $0x14] sm:$0xf]
        %v6252 = vld [vmem:[%s302 + $0x18] sm:$0xf]
        %v6253 = vld [vmem:[%s302 + $0x1c] sm:$0xf]
        %v6254 = vld [vmem:[%s302 + $0x20] sm:$0xf]
        %v6255 = vld [vmem:[%s302 + $0x24] sm:$0xf]
        %v6256 = vld [vmem:[%s302 + $0x28] sm:$0xf]
        %v6257 = vld [vmem:[%s302 + $0x2c] sm:$0xf]
        %v6258 = vld [vmem:[%s302 + $0x30] sm:$0xf]
        %v6259 = vld [vmem:[%s302 + $0x34] sm:$0xf]
        %v6260 = vld [vmem:[%s302 + $0x38] sm:$0xf]
        %v6261 = vld [vmem:[%s302 + $0x3c] sm:$0xf]
        %v6262 = vld [vmem:[%s302 + $0x40] sm:$0xf]
        %v6263 = vld [vmem:[%s302 + $0x44] sm:$0xf]
        %v6264 = vld [vmem:[%s302 + $0x48] sm:$0xf]
        %v6265 = vld [vmem:[%s302 + $0x4c] sm:$0xf]
        %v6266 = vld [vmem:[%s302 + $0x50] sm:$0xf]
        %v6267 = vld [vmem:[%s302 + $0x54] sm:$0xf]
        %v6268 = vld [vmem:[%s302 + $0x58] sm:$0xf]
        %v6269 = vld [vmem:[%s302 + $0x5c] sm:$0xf]
        %v6270 = vld [vmem:[%s302 + $0x60] sm:$0xf]
        %v6271 = vld [vmem:[%s302 + $0x64] sm:$0xf]
        %v6272 = vld [vmem:[%s302 + $0x68] sm:$0xf]
        %v6273 = vld [vmem:[%s302 + $0x6c] sm:$0xf]
        %v6274 = vld [vmem:[%s302 + $0x70] sm:$0xf]
        %v6275 = vld [vmem:[%s302 + $0x74] sm:$0xf]
        %v6276 = vld [vmem:[%s302 + $0x78] sm:$0xf]
        %v6277 = vld [vmem:[%s302 + $0x7c] sm:$0xf]
        %v6278 = vunpack.c.l.bf16 %v6246
        %v6279 = vunpack.c.l.bf16 %v6247
        %v6280 = vunpack.c.l.bf16 %v6248
        %v6281 = vunpack.c.l.bf16 %v6249
        %v6282 = vunpack.c.l.bf16 %v6250
        %v6283 = vunpack.c.l.bf16 %v6251
        %v6284 = vunpack.c.l.bf16 %v6252
        %v6285 = vunpack.c.l.bf16 %v6253
        %v6286 = vunpack.c.l.bf16 %v6254
        %v6287 = vunpack.c.l.bf16 %v6255
        %v6288 = vunpack.c.l.bf16 %v6256
        %v6289 = vunpack.c.l.bf16 %v6257
        %v6290 = vunpack.c.l.bf16 %v6258
        %v6291 = vunpack.c.l.bf16 %v6259
        %v6292 = vunpack.c.l.bf16 %v6260
        %v6293 = vunpack.c.l.bf16 %v6261
        %v6294 = vunpack.c.l.bf16 %v6262
        %v6295 = vunpack.c.l.bf16 %v6263
        %v6296 = vunpack.c.l.bf16 %v6264
        %v6297 = vunpack.c.l.bf16 %v6265
        %v6298 = vunpack.c.l.bf16 %v6266
        %v6299 = vunpack.c.l.bf16 %v6267
        %v6300 = vunpack.c.l.bf16 %v6268
        %v6301 = vunpack.c.l.bf16 %v6269
        %v6302 = vunpack.c.l.bf16 %v6270
        %v6303 = vunpack.c.l.bf16 %v6271
        %v6304 = vunpack.c.l.bf16 %v6272
        %v6305 = vunpack.c.l.bf16 %v6273
        %v6306 = vunpack.c.l.bf16 %v6274
        %v6307 = vunpack.c.l.bf16 %v6275
        %v6308 = vunpack.c.l.bf16 %v6276
        %v6309 = vunpack.c.l.bf16 %v6277
        %v6310 = vadd.f32 %v6167, %v6278
        %v6311 = vadd.f32 %v6169, %v6279
        %v6312 = vadd.f32 %v6172, %v6280
        %v6313 = vadd.f32 %v6174, %v6281
        %v6314 = vadd.f32 %v6177, %v6282
        %v6315 = vadd.f32 %v6179, %v6283
        %v6316 = vadd.f32 %v6182, %v6284
        %v6317 = vadd.f32 %v6184, %v6285
        %v6318 = vadd.f32 %v6187, %v6286
        %v6319 = vadd.f32 %v6189, %v6287
        %v6320 = vadd.f32 %v6192, %v6288
        %v6321 = vadd.f32 %v6194, %v6289
        %v6322 = vadd.f32 %v6197, %v6290
        %v6323 = vadd.f32 %v6199, %v6291
        %v6324 = vadd.f32 %v6202, %v6292
        %v6325 = vadd.f32 %v6204, %v6293
        %v6326 = vadd.f32 %v6207, %v6294
        %v6327 = vadd.f32 %v6209, %v6295
        %v6328 = vadd.f32 %v6212, %v6296
        %v6329 = vadd.f32 %v6214, %v6297
        %v6330 = vadd.f32 %v6217, %v6298
        %v6331 = vadd.f32 %v6219, %v6299
        %v6332 = vadd.f32 %v6222, %v6300
        %v6333 = vadd.f32 %v6224, %v6301
        %v6334 = vadd.f32 %v6227, %v6302
        %v6335 = vadd.f32 %v6229, %v6303
        %v6336 = vadd.f32 %v6232, %v6304
        %v6337 = vadd.f32 %v6234, %v6305
        %v6338 = vadd.f32 %v6237, %v6306
        %v6339 = vadd.f32 %v6239, %v6307
        %v6340 = vadd.f32 %v6242, %v6308
        %v6341 = vadd.f32 %v6244, %v6309
        %v6342 = vmax.f32 %v6310, 0.0
        %v6343 = vmax.f32 %v6311, 0.0
        %v6344 = vmax.f32 %v6312, 0.0
        %v6345 = vmax.f32 %v6313, 0.0
        %v6346 = vmax.f32 %v6314, 0.0
        %v6347 = vmax.f32 %v6315, 0.0
        %v6348 = vmax.f32 %v6316, 0.0
        %v6349 = vmax.f32 %v6317, 0.0
        %v6350 = vmax.f32 %v6318, 0.0
        %v6351 = vmax.f32 %v6319, 0.0
        %v6352 = vmax.f32 %v6320, 0.0
        %v6353 = vmax.f32 %v6321, 0.0
        %v6354 = vmax.f32 %v6322, 0.0
        %v6355 = vmax.f32 %v6323, 0.0
        %v6356 = vmax.f32 %v6324, 0.0
        %v6357 = vmax.f32 %v6325, 0.0
        %v6358 = vmax.f32 %v6326, 0.0
        %v6359 = vmax.f32 %v6327, 0.0
        %v6360 = vmax.f32 %v6328, 0.0
        %v6361 = vmax.f32 %v6329, 0.0
        %v6362 = vmax.f32 %v6330, 0.0
        %v6363 = vmax.f32 %v6331, 0.0
        %v6364 = vmax.f32 %v6332, 0.0
        %v6365 = vmax.f32 %v6333, 0.0
        %v6366 = vmax.f32 %v6334, 0.0
        %v6367 = vmax.f32 %v6335, 0.0
        %v6368 = vmax.f32 %v6336, 0.0
        %v6369 = vmax.f32 %v6337, 0.0
        %v6370 = vmax.f32 %v6338, 0.0
        %v6371 = vmax.f32 %v6339, 0.0
        %v6372 = vmax.f32 %v6340, 0.0
        %v6373 = vmax.f32 %v6341, 0.0
        %v6374 = vpack.c.bf16 %v6342, %v6342
        %v6375 = vpack.c.bf16 %v6343, %v6343
        %v6376 = vpack.c.bf16 %v6344, %v6344
        %v6377 = vpack.c.bf16 %v6345, %v6345
        %v6378 = vpack.c.bf16 %v6346, %v6346
        %v6379 = vpack.c.bf16 %v6347, %v6347
        %v6380 = vpack.c.bf16 %v6348, %v6348
        %v6381 = vpack.c.bf16 %v6349, %v6349
        %v6382 = vpack.c.bf16 %v6350, %v6350
        %v6383 = vpack.c.bf16 %v6351, %v6351
        %v6384 = vpack.c.bf16 %v6352, %v6352
        %v6385 = vpack.c.bf16 %v6353, %v6353
        %v6386 = vpack.c.bf16 %v6354, %v6354
        %v6387 = vpack.c.bf16 %v6355, %v6355
        %v6388 = vpack.c.bf16 %v6356, %v6356
        %v6389 = vpack.c.bf16 %v6357, %v6357
        %v6390 = vpack.c.bf16 %v6358, %v6358
        %v6391 = vpack.c.bf16 %v6359, %v6359
        %v6392 = vpack.c.bf16 %v6360, %v6360
        %v6393 = vpack.c.bf16 %v6361, %v6361
        %v6394 = vpack.c.bf16 %v6362, %v6362
        %v6395 = vpack.c.bf16 %v6363, %v6363
        %v6396 = vpack.c.bf16 %v6364, %v6364
        %v6397 = vpack.c.bf16 %v6365, %v6365
        %v6398 = vpack.c.bf16 %v6366, %v6366
        %v6399 = vpack.c.bf16 %v6367, %v6367
        %v6400 = vpack.c.bf16 %v6368, %v6368
        %v6401 = vpack.c.bf16 %v6369, %v6369
        %v6402 = vpack.c.bf16 %v6370, %v6370
        %v6403 = vpack.c.bf16 %v6371, %v6371
        %v6404 = vpack.c.bf16 %v6372, %v6372
        %v6405 = vpack.c.bf16 %v6373, %v6373
        %6406 = vst [vmem:[%s348] sm:$0xf] %v6374
        %6407 = vst [vmem:[%s348 + $0x4] sm:$0xf] %v6375
        %6408 = vst [vmem:[%s348 + $0x8] sm:$0xf] %v6376
        %6409 = vst [vmem:[%s348 + $0xc] sm:$0xf] %v6377
        %6410 = vst [vmem:[%s348 + $0x10] sm:$0xf] %v6378
        %6411 = vst [vmem:[%s348 + $0x14] sm:$0xf] %v6379
        %6412 = vst [vmem:[%s348 + $0x18] sm:$0xf] %v6380
        %6413 = vst [vmem:[%s348 + $0x1c] sm:$0xf] %v6381
        %6414 = vst [vmem:[%s348 + $0x20] sm:$0xf] %v6382
        %6415 = vst [vmem:[%s348 + $0x24] sm:$0xf] %v6383
        %6416 = vst [vmem:[%s348 + $0x28] sm:$0xf] %v6384
        %6417 = vst [vmem:[%s348 + $0x2c] sm:$0xf] %v6385
        %6418 = vst [vmem:[%s348 + $0x30] sm:$0xf] %v6386
        %6419 = vst [vmem:[%s348 + $0x34] sm:$0xf] %v6387
        %6420 = vst [vmem:[%s348 + $0x38] sm:$0xf] %v6388
        %6421 = vst [vmem:[%s348 + $0x3c] sm:$0xf] %v6389
        %6422 = vst [vmem:[%s348 + $0x40] sm:$0xf] %v6390
        %6423 = vst [vmem:[%s348 + $0x44] sm:$0xf] %v6391
        %6424 = vst [vmem:[%s348 + $0x48] sm:$0xf] %v6392
        %6425 = vst [vmem:[%s348 + $0x4c] sm:$0xf] %v6393
        %6426 = vst [vmem:[%s348 + $0x50] sm:$0xf] %v6394
        %6427 = vst [vmem:[%s348 + $0x54] sm:$0xf] %v6395
        %6428 = vst [vmem:[%s348 + $0x58] sm:$0xf] %v6396
        %6429 = vst [vmem:[%s348 + $0x5c] sm:$0xf] %v6397
        %6430 = vst [vmem:[%s348 + $0x60] sm:$0xf] %v6398
        %6431 = vst [vmem:[%s348 + $0x64] sm:$0xf] %v6399
        %6432 = vst [vmem:[%s348 + $0x68] sm:$0xf] %v6400
        %6433 = vst [vmem:[%s348 + $0x6c] sm:$0xf] %v6401
        %6434 = vst [vmem:[%s348 + $0x70] sm:$0xf] %v6402
        %6435 = vst [vmem:[%s348 + $0x74] sm:$0xf] %v6403
        %6436 = vst [vmem:[%s348 + $0x78] sm:$0xf] %v6404
        %6437 = vst [vmem:[%s348 + $0x7c] sm:$0xf] %v6405
        %s6438 = sand.u32 %s186, 1
        %s6439 = scalar_lea.sflag [#allocation6], %s6438
        %s6440 = sand.u32 %s186, 1
        %s6441 = smul.addr %s6440, 128
        %s6442 = scalar_lea.vmem [#allocation12], %s6441
        // Predicated region
        $region65: #{tpu_custom_call.1} parent=47 // pred_check
          %p6443 = pneg %p196
        $region66: #{tpu_custom_call.1} parent=47 // pred_check_branch
          %6445 = sbr.rel (%p6443) target = $region68
        $region67: #{tpu_custom_call.1} parent=47 // pred_region
          %6447 = vsyncadd %s6439, 0
          %s6448 = smul.addr %s26, 32
          %s6449 = smul.addr %s6448, 4
          %s6450 = scalar_lea.hbm %s7, %s6449
          %s6451 = sshll.u32 %s6442, 4
          %s6452 = int_to_ptr.vmem [resolvable:$true] %s6451
          %s6453 = sshll.u32 %s6450, 4
          %s6454 = int_to_ptr.hbm [resolvable:$true] %s6453
          %6459 = dma.vmem_to_hbm [thread:$0]  %s6452, 2048, %s6454, %s6439, 64, 64, 4
        $region68: #{tpu_custom_call.1} parent=47 // pred_fallthru
          _
      $region48: #{tpu_custom_call.1} parent=5 // pred_fallthru
        _
      %p6460 = scmp.le.s32.totalorder 2, %s21
      // Predicated region
      $region69: #{tpu_custom_call.1} parent=5 // pred_check
        %p6461 = pneg %p6460
      $region70: #{tpu_custom_call.1} parent=5 // pred_check_branch
        %6463 = sbr.rel (%p6461) target = $region72
      $region71: #{tpu_custom_call.1} parent=5 // pred_region
        %s6464 = ssub.s32 %s21, 2
        // Predicated region
        $region73: #{tpu_custom_call.1} parent=71 // pred_check
          %p6465 = pneg %p202
        $region74: #{tpu_custom_call.1} parent=71 // pred_check_branch
          %6467 = sbr.rel (%p6465) target = $region76
        $region75: #{tpu_custom_call.1} parent=71 // pred_region
          %s6468 = sand.u32 %s187, 1
          %s6469 = scalar_lea.sflag [#allocation6], %s6468
          %s6470 = sand.u32 %s187, 1
          %s6471 = smul.addr %s6470, 128
          %s6472 = scalar_lea.vmem [#allocation12], %s6471
          %6474 = dma.done %s6469, 2048
        $region76: #{tpu_custom_call.1} parent=71 // pred_fallthru
          _
      $region72: #{tpu_custom_call.1} parent=5 // pred_fallthru
        _
    $region6: #{tpu_custom_call.1} parent=1 // loop_footer
      %s25 = sadd.s32 1, %s21
    $region7: #{tpu_custom_call.1} parent=1 // loop_footer_branch
      %20 = sbr.rel target = $region3
    $region8: #{tpu_custom_call.1} parent=1 // loop_exit
      _
    %6475 = vsyncpa [#allocation5], 1
    %s6476 = scalar_lea.sflag [#allocation5], 1
    %6477 = vsyncpa %s6476, 1
    %6478 = vsyncpa [#allocation8], 1
    %6479 = vsyncpa [#allocation11], 1
    %6480 = vsyncpa [#allocation6], 1
    %s6481 = scalar_lea.sflag [#allocation6], 1
    %6482 = vsyncpa %s6481, 1

</llo_original>
